<compile_context>
chip_gen: v7x
topology: tpu7x:2x2x1
jax: 0.10.0
libtpu: 0.0.40
codegen_flags: <defaults>
</compile_context>

<pallas_src>
import math
import functools

import jax
import jax.numpy as jnp
from jax.experimental import pallas as pl
from jax.experimental.pallas import tpu as pltpu


def _embedding_gather_kernel(ids_ref, table_hbm, out_ref, buf_ref, sem_ref, *,
                             block_tokens, scale):
    # ids_ref:   (N_pad,)  int32, SMEM (scalar-prefetched token ids)
    # table_hbm: (V, D)    float32, HBM (memory_space=pl.ANY, manual DMA)
    # out_ref:   (block_tokens, D) float32, VMEM output block
    # buf_ref:   (block_tokens, D) float32, VMEM gather scratch
    # sem_ref:   ()        DMA semaphore shared by all row copies of this block
    base = pl.program_id(0) * block_tokens

    # Issue one row-DMA per token in this block (all in flight simultaneously).
    for t in range(block_tokens):
        row = ids_ref[base + t]
        pltpu.make_async_copy(
            table_hbm.at[pl.ds(row, 1)],   # (1, D) row in HBM
            buf_ref.at[pl.ds(t, 1)],       # (1, D) destination row in VMEM
            sem_ref,
        ).start()

    # Wait for all of them (same-sized copies on a shared semaphore).
    for t in range(block_tokens):
        pltpu.make_async_copy(
            table_hbm.at[pl.ds(0, 1)],
            buf_ref.at[pl.ds(t, 1)],
            sem_ref,
        ).wait()

    # Fused sqrt(d_model) scaling, single full-block store.
    out_ref[...] = (buf_ref[...] * scale).astype(out_ref.dtype)


def embeddings_forward(x, table, *, block_tokens=32):
    """Pallas equivalent of `Embeddings.forward`.

    x:     (B, S) integer token ids in [0, vocab)
    table: (vocab, d_model) float32 embedding weights
    returns (B, S, d_model) float32 == embedding(x) * sqrt(d_model)
    """
    B, S = x.shape
    V, D = table.shape
    scale = float(math.sqrt(D))

    N = B * S
    ids = x.reshape(N).astype(jnp.int32)

    # Pad the token count up to a multiple of the block size (pad ids with a valid
    # index, 0; padded rows are gathered but sliced away below).
    num_blocks = pl.cdiv(N, block_tokens)
    n_pad = num_blocks * block_tokens
    if n_pad != N:
        ids = jnp.concatenate([ids, jnp.zeros((n_pad - N,), jnp.int32)])

    kernel = functools.partial(
        _embedding_gather_kernel, block_tokens=block_tokens, scale=scale)

    out = pl.pallas_call(
        kernel,
        out_shape=jax.ShapeDtypeStruct((n_pad, D), table.dtype),
        grid_spec=pltpu.PrefetchScalarGridSpec(
            num_scalar_prefetch=1,                      # ids -> SMEM
            grid=(num_blocks,),
            in_specs=[
                pl.BlockSpec(memory_space=pl.ANY),      # table stays in HBM
            ],
            out_specs=pl.BlockSpec((block_tokens, D), lambda i, ids: (i, 0)),
            scratch_shapes=[
                pltpu.VMEM((block_tokens, D), table.dtype),  # gather buffer
                pltpu.SemaphoreType.DMA(()),                 # shared DMA semaphore
            ],
        ),
        compiler_params=pltpu.CompilerParams(
            dimension_semantics=("parallel",)),         # shard token tiles across TCs
    )(ids, table)

    return out[:N].reshape(B, S, D)


if __name__ == "__main__":
    # Small, deterministic setup consistent with the module's __init__:
    #   d_model=32, vocab=64, batch=2, seq=8
    d_model = 32
    vocab = 64
    B, S = 2, 8

    key = jax.random.PRNGKey(0)
    k_tbl, k_ids = jax.random.split(key)

    # Deterministic "parameter" init (nn.Embedding weight ~ N(0, 1)).
    table = jax.random.normal(k_tbl, (vocab, d_model), dtype=jnp.float32)
    x = jax.random.randint(k_ids, (B, S), minval=0, maxval=vocab, dtype=jnp.int32)

    out = embeddings_forward(x, table)
    out = jax.block_until_ready(out)

    # Pure-JAX reference: lut(x) * sqrt(d_model)
    ref = jnp.take(table, x, axis=0) * jnp.float32(math.sqrt(d_model))
    assert out.shape == (B, S, d_model), out.shape
    assert jnp.allclose(out, ref, atol=1e-5, rtol=1e-5), "mismatch vs reference"

    print("KERNEL_OK")
</pallas_src>

<mosaic_0001>
module attributes {stable_mosaic.version = 11 : i64} {
  func.func @_embedding_gather_kernel(%arg0: i32, %arg1: memref<32xi32, #tpu.memory_space<smem>>, %arg2: memref<64x32xf32, #tpu.memory_space<any>>, %arg3: memref<32x32xf32, #tpu.memory_space<vmem>>, %arg4: memref<32x32xf32, #tpu.memory_space<vmem>>, %arg5: memref<!tpu.dma_semaphore, #tpu.memory_space<semaphore_mem>>) attributes {dimension_semantics = [#tpu.dimension_semantics<parallel>], iteration_bounds = array<i64: 1>, scalar_prefetch = 1 : i64, scratch_operands = 2 : i64, tpu.core_type = #tpu.core_type<tc>, window_params = [{}, {transform_indices = @transform_1, window_bounds = array<i64: 32, 32>}]} {
    %c32_i32 = arith.constant 32 : i32
    %0 = arith.muli %arg0, %c32_i32 : i32
    %c0_i32 = arith.constant 0 : i32
    %1 = arith.addi %0, %c0_i32 : i32
    %2 = arith.index_cast %1 : i32 to index
    %3 = memref.load %arg1[%2] : memref<32xi32, #tpu.memory_space<smem>>
    %c0_i32_0 = arith.constant 0 : i32
    %4 = tpu.memref_slice %arg2[%3, %c0_i32_0] : memref<64x32xf32, #tpu.memory_space<any>> -> memref<1x32xf32, #tpu.memory_space<any>>
    %c0_i32_1 = arith.constant 0 : i32
    %c0_i32_2 = arith.constant 0 : i32
    %5 = tpu.memref_slice %arg4[%c0_i32_1, %c0_i32_2] : memref<32x32xf32, #tpu.memory_space<vmem>> -> memref<1x32xf32, #tpu.memory_space<vmem>>
    tpu.enqueue_dma source(%4 : memref<1x32xf32, #tpu.memory_space<any>>) target(%5 : memref<1x32xf32, #tpu.memory_space<vmem>>) target_semaphore(%arg5 : memref<!tpu.dma_semaphore, #tpu.memory_space<semaphore_mem>>)
    %c1_i32 = arith.constant 1 : i32
    %6 = arith.addi %0, %c1_i32 : i32
    %7 = arith.index_cast %6 : i32 to index
    %8 = memref.load %arg1[%7] : memref<32xi32, #tpu.memory_space<smem>>
    %c0_i32_3 = arith.constant 0 : i32
    %9 = tpu.memref_slice %arg2[%8, %c0_i32_3] : memref<64x32xf32, #tpu.memory_space<any>> -> memref<1x32xf32, #tpu.memory_space<any>>
    %c1_i32_4 = arith.constant 1 : i32
    %c0_i32_5 = arith.constant 0 : i32
    %10 = tpu.memref_slice %arg4[%c1_i32_4, %c0_i32_5] : memref<32x32xf32, #tpu.memory_space<vmem>> -> memref<1x32xf32, #tpu.memory_space<vmem>>
    tpu.enqueue_dma source(%9 : memref<1x32xf32, #tpu.memory_space<any>>) target(%10 : memref<1x32xf32, #tpu.memory_space<vmem>>) target_semaphore(%arg5 : memref<!tpu.dma_semaphore, #tpu.memory_space<semaphore_mem>>)
    %c2_i32 = arith.constant 2 : i32
    %11 = arith.addi %0, %c2_i32 : i32
    %12 = arith.index_cast %11 : i32 to index
    %13 = memref.load %arg1[%12] : memref<32xi32, #tpu.memory_space<smem>>
    %c0_i32_6 = arith.constant 0 : i32
    %14 = tpu.memref_slice %arg2[%13, %c0_i32_6] : memref<64x32xf32, #tpu.memory_space<any>> -> memref<1x32xf32, #tpu.memory_space<any>>
    %c2_i32_7 = arith.constant 2 : i32
    %c0_i32_8 = arith.constant 0 : i32
    %15 = tpu.memref_slice %arg4[%c2_i32_7, %c0_i32_8] : memref<32x32xf32, #tpu.memory_space<vmem>> -> memref<1x32xf32, #tpu.memory_space<vmem>>
    tpu.enqueue_dma source(%14 : memref<1x32xf32, #tpu.memory_space<any>>) target(%15 : memref<1x32xf32, #tpu.memory_space<vmem>>) target_semaphore(%arg5 : memref<!tpu.dma_semaphore, #tpu.memory_space<semaphore_mem>>)
    %c3_i32 = arith.constant 3 : i32
    %16 = arith.addi %0, %c3_i32 : i32
    %17 = arith.index_cast %16 : i32 to index
    %18 = memref.load %arg1[%17] : memref<32xi32, #tpu.memory_space<smem>>
    %c0_i32_9 = arith.constant 0 : i32
    %19 = tpu.memref_slice %arg2[%18, %c0_i32_9] : memref<64x32xf32, #tpu.memory_space<any>> -> memref<1x32xf32, #tpu.memory_space<any>>
    %c3_i32_10 = arith.constant 3 : i32
    %c0_i32_11 = arith.constant 0 : i32
    %20 = tpu.memref_slice %arg4[%c3_i32_10, %c0_i32_11] : memref<32x32xf32, #tpu.memory_space<vmem>> -> memref<1x32xf32, #tpu.memory_space<vmem>>
    tpu.enqueue_dma source(%19 : memref<1x32xf32, #tpu.memory_space<any>>) target(%20 : memref<1x32xf32, #tpu.memory_space<vmem>>) target_semaphore(%arg5 : memref<!tpu.dma_semaphore, #tpu.memory_space<semaphore_mem>>)
    %c4_i32 = arith.constant 4 : i32
    %21 = arith.addi %0, %c4_i32 : i32
    %22 = arith.index_cast %21 : i32 to index
    %23 = memref.load %arg1[%22] : memref<32xi32, #tpu.memory_space<smem>>
    %c0_i32_12 = arith.constant 0 : i32
    %24 = tpu.memref_slice %arg2[%23, %c0_i32_12] : memref<64x32xf32, #tpu.memory_space<any>> -> memref<1x32xf32, #tpu.memory_space<any>>
    %c4_i32_13 = arith.constant 4 : i32
    %c0_i32_14 = arith.constant 0 : i32
    %25 = tpu.memref_slice %arg4[%c4_i32_13, %c0_i32_14] : memref<32x32xf32, #tpu.memory_space<vmem>> -> memref<1x32xf32, #tpu.memory_space<vmem>>
    tpu.enqueue_dma source(%24 : memref<1x32xf32, #tpu.memory_space<any>>) target(%25 : memref<1x32xf32, #tpu.memory_space<vmem>>) target_semaphore(%arg5 : memref<!tpu.dma_semaphore, #tpu.memory_space<semaphore_mem>>)
    %c5_i32 = arith.constant 5 : i32
    %26 = arith.addi %0, %c5_i32 : i32
    %27 = arith.index_cast %26 : i32 to index
    %28 = memref.load %arg1[%27] : memref<32xi32, #tpu.memory_space<smem>>
    %c0_i32_15 = arith.constant 0 : i32
    %29 = tpu.memref_slice %arg2[%28, %c0_i32_15] : memref<64x32xf32, #tpu.memory_space<any>> -> memref<1x32xf32, #tpu.memory_space<any>>
    %c5_i32_16 = arith.constant 5 : i32
    %c0_i32_17 = arith.constant 0 : i32
    %30 = tpu.memref_slice %arg4[%c5_i32_16, %c0_i32_17] : memref<32x32xf32, #tpu.memory_space<vmem>> -> memref<1x32xf32, #tpu.memory_space<vmem>>
    tpu.enqueue_dma source(%29 : memref<1x32xf32, #tpu.memory_space<any>>) target(%30 : memref<1x32xf32, #tpu.memory_space<vmem>>) target_semaphore(%arg5 : memref<!tpu.dma_semaphore, #tpu.memory_space<semaphore_mem>>)
    %c6_i32 = arith.constant 6 : i32
    %31 = arith.addi %0, %c6_i32 : i32
    %32 = arith.index_cast %31 : i32 to index
    %33 = memref.load %arg1[%32] : memref<32xi32, #tpu.memory_space<smem>>
    %c0_i32_18 = arith.constant 0 : i32
    %34 = tpu.memref_slice %arg2[%33, %c0_i32_18] : memref<64x32xf32, #tpu.memory_space<any>> -> memref<1x32xf32, #tpu.memory_space<any>>
    %c6_i32_19 = arith.constant 6 : i32
    %c0_i32_20 = arith.constant 0 : i32
    %35 = tpu.memref_slice %arg4[%c6_i32_19, %c0_i32_20] : memref<32x32xf32, #tpu.memory_space<vmem>> -> memref<1x32xf32, #tpu.memory_space<vmem>>
    tpu.enqueue_dma source(%34 : memref<1x32xf32, #tpu.memory_space<any>>) target(%35 : memref<1x32xf32, #tpu.memory_space<vmem>>) target_semaphore(%arg5 : memref<!tpu.dma_semaphore, #tpu.memory_space<semaphore_mem>>)
    %c7_i32 = arith.constant 7 : i32
    %36 = arith.addi %0, %c7_i32 : i32
    %37 = arith.index_cast %36 : i32 to index
    %38 = memref.load %arg1[%37] : memref<32xi32, #tpu.memory_space<smem>>
    %c0_i32_21 = arith.constant 0 : i32
    %39 = tpu.memref_slice %arg2[%38, %c0_i32_21] : memref<64x32xf32, #tpu.memory_space<any>> -> memref<1x32xf32, #tpu.memory_space<any>>
    %c7_i32_22 = arith.constant 7 : i32
    %c0_i32_23 = arith.constant 0 : i32
    %40 = tpu.memref_slice %arg4[%c7_i32_22, %c0_i32_23] : memref<32x32xf32, #tpu.memory_space<vmem>> -> memref<1x32xf32, #tpu.memory_space<vmem>>
    tpu.enqueue_dma source(%39 : memref<1x32xf32, #tpu.memory_space<any>>) target(%40 : memref<1x32xf32, #tpu.memory_space<vmem>>) target_semaphore(%arg5 : memref<!tpu.dma_semaphore, #tpu.memory_space<semaphore_mem>>)
    %c8_i32 = arith.constant 8 : i32
    %41 = arith.addi %0, %c8_i32 : i32
    %42 = arith.index_cast %41 : i32 to index
    %43 = memref.load %arg1[%42] : memref<32xi32, #tpu.memory_space<smem>>
    %c0_i32_24 = arith.constant 0 : i32
    %44 = tpu.memref_slice %arg2[%43, %c0_i32_24] : memref<64x32xf32, #tpu.memory_space<any>> -> memref<1x32xf32, #tpu.memory_space<any>>
    %c8_i32_25 = arith.constant 8 : i32
    %c0_i32_26 = arith.constant 0 : i32
    %45 = tpu.memref_slice %arg4[%c8_i32_25, %c0_i32_26] : memref<32x32xf32, #tpu.memory_space<vmem>> -> memref<1x32xf32, #tpu.memory_space<vmem>>
    tpu.enqueue_dma source(%44 : memref<1x32xf32, #tpu.memory_space<any>>) target(%45 : memref<1x32xf32, #tpu.memory_space<vmem>>) target_semaphore(%arg5 : memref<!tpu.dma_semaphore, #tpu.memory_space<semaphore_mem>>)
    %c9_i32 = arith.constant 9 : i32
    %46 = arith.addi %0, %c9_i32 : i32
    %47 = arith.index_cast %46 : i32 to index
    %48 = memref.load %arg1[%47] : memref<32xi32, #tpu.memory_space<smem>>
    %c0_i32_27 = arith.constant 0 : i32
    %49 = tpu.memref_slice %arg2[%48, %c0_i32_27] : memref<64x32xf32, #tpu.memory_space<any>> -> memref<1x32xf32, #tpu.memory_space<any>>
    %c9_i32_28 = arith.constant 9 : i32
    %c0_i32_29 = arith.constant 0 : i32
    %50 = tpu.memref_slice %arg4[%c9_i32_28, %c0_i32_29] : memref<32x32xf32, #tpu.memory_space<vmem>> -> memref<1x32xf32, #tpu.memory_space<vmem>>
    tpu.enqueue_dma source(%49 : memref<1x32xf32, #tpu.memory_space<any>>) target(%50 : memref<1x32xf32, #tpu.memory_space<vmem>>) target_semaphore(%arg5 : memref<!tpu.dma_semaphore, #tpu.memory_space<semaphore_mem>>)
    %c10_i32 = arith.constant 10 : i32
    %51 = arith.addi %0, %c10_i32 : i32
    %52 = arith.index_cast %51 : i32 to index
    %53 = memref.load %arg1[%52] : memref<32xi32, #tpu.memory_space<smem>>
    %c0_i32_30 = arith.constant 0 : i32
    %54 = tpu.memref_slice %arg2[%53, %c0_i32_30] : memref<64x32xf32, #tpu.memory_space<any>> -> memref<1x32xf32, #tpu.memory_space<any>>
    %c10_i32_31 = arith.constant 10 : i32
    %c0_i32_32 = arith.constant 0 : i32
    %55 = tpu.memref_slice %arg4[%c10_i32_31, %c0_i32_32] : memref<32x32xf32, #tpu.memory_space<vmem>> -> memref<1x32xf32, #tpu.memory_space<vmem>>
    tpu.enqueue_dma source(%54 : memref<1x32xf32, #tpu.memory_space<any>>) target(%55 : memref<1x32xf32, #tpu.memory_space<vmem>>) target_semaphore(%arg5 : memref<!tpu.dma_semaphore, #tpu.memory_space<semaphore_mem>>)
    %c11_i32 = arith.constant 11 : i32
    %56 = arith.addi %0, %c11_i32 : i32
    %57 = arith.index_cast %56 : i32 to index
    %58 = memref.load %arg1[%57] : memref<32xi32, #tpu.memory_space<smem>>
    %c0_i32_33 = arith.constant 0 : i32
    %59 = tpu.memref_slice %arg2[%58, %c0_i32_33] : memref<64x32xf32, #tpu.memory_space<any>> -> memref<1x32xf32, #tpu.memory_space<any>>
    %c11_i32_34 = arith.constant 11 : i32
    %c0_i32_35 = arith.constant 0 : i32
    %60 = tpu.memref_slice %arg4[%c11_i32_34, %c0_i32_35] : memref<32x32xf32, #tpu.memory_space<vmem>> -> memref<1x32xf32, #tpu.memory_space<vmem>>
    tpu.enqueue_dma source(%59 : memref<1x32xf32, #tpu.memory_space<any>>) target(%60 : memref<1x32xf32, #tpu.memory_space<vmem>>) target_semaphore(%arg5 : memref<!tpu.dma_semaphore, #tpu.memory_space<semaphore_mem>>)
    %c12_i32 = arith.constant 12 : i32
    %61 = arith.addi %0, %c12_i32 : i32
    %62 = arith.index_cast %61 : i32 to index
    %63 = memref.load %arg1[%62] : memref<32xi32, #tpu.memory_space<smem>>
    %c0_i32_36 = arith.constant 0 : i32
    %64 = tpu.memref_slice %arg2[%63, %c0_i32_36] : memref<64x32xf32, #tpu.memory_space<any>> -> memref<1x32xf32, #tpu.memory_space<any>>
    %c12_i32_37 = arith.constant 12 : i32
    %c0_i32_38 = arith.constant 0 : i32
    %65 = tpu.memref_slice %arg4[%c12_i32_37, %c0_i32_38] : memref<32x32xf32, #tpu.memory_space<vmem>> -> memref<1x32xf32, #tpu.memory_space<vmem>>
    tpu.enqueue_dma source(%64 : memref<1x32xf32, #tpu.memory_space<any>>) target(%65 : memref<1x32xf32, #tpu.memory_space<vmem>>) target_semaphore(%arg5 : memref<!tpu.dma_semaphore, #tpu.memory_space<semaphore_mem>>)
    %c13_i32 = arith.constant 13 : i32
    %66 = arith.addi %0, %c13_i32 : i32
    %67 = arith.index_cast %66 : i32 to index
    %68 = memref.load %arg1[%67] : memref<32xi32, #tpu.memory_space<smem>>
    %c0_i32_39 = arith.constant 0 : i32
    %69 = tpu.memref_slice %arg2[%68, %c0_i32_39] : memref<64x32xf32, #tpu.memory_space<any>> -> memref<1x32xf32, #tpu.memory_space<any>>
    %c13_i32_40 = arith.constant 13 : i32
    %c0_i32_41 = arith.constant 0 : i32
    %70 = tpu.memref_slice %arg4[%c13_i32_40, %c0_i32_41] : memref<32x32xf32, #tpu.memory_space<vmem>> -> memref<1x32xf32, #tpu.memory_space<vmem>>
    tpu.enqueue_dma source(%69 : memref<1x32xf32, #tpu.memory_space<any>>) target(%70 : memref<1x32xf32, #tpu.memory_space<vmem>>) target_semaphore(%arg5 : memref<!tpu.dma_semaphore, #tpu.memory_space<semaphore_mem>>)
    %c14_i32 = arith.constant 14 : i32
    %71 = arith.addi %0, %c14_i32 : i32
    %72 = arith.index_cast %71 : i32 to index
    %73 = memref.load %arg1[%72] : memref<32xi32, #tpu.memory_space<smem>>
    %c0_i32_42 = arith.constant 0 : i32
    %74 = tpu.memref_slice %arg2[%73, %c0_i32_42] : memref<64x32xf32, #tpu.memory_space<any>> -> memref<1x32xf32, #tpu.memory_space<any>>
    %c14_i32_43 = arith.constant 14 : i32
    %c0_i32_44 = arith.constant 0 : i32
    %75 = tpu.memref_slice %arg4[%c14_i32_43, %c0_i32_44] : memref<32x32xf32, #tpu.memory_space<vmem>> -> memref<1x32xf32, #tpu.memory_space<vmem>>
    tpu.enqueue_dma source(%74 : memref<1x32xf32, #tpu.memory_space<any>>) target(%75 : memref<1x32xf32, #tpu.memory_space<vmem>>) target_semaphore(%arg5 : memref<!tpu.dma_semaphore, #tpu.memory_space<semaphore_mem>>)
    %c15_i32 = arith.constant 15 : i32
    %76 = arith.addi %0, %c15_i32 : i32
    %77 = arith.index_cast %76 : i32 to index
    %78 = memref.load %arg1[%77] : memref<32xi32, #tpu.memory_space<smem>>
    %c0_i32_45 = arith.constant 0 : i32
    %79 = tpu.memref_slice %arg2[%78, %c0_i32_45] : memref<64x32xf32, #tpu.memory_space<any>> -> memref<1x32xf32, #tpu.memory_space<any>>
    %c15_i32_46 = arith.constant 15 : i32
    %c0_i32_47 = arith.constant 0 : i32
    %80 = tpu.memref_slice %arg4[%c15_i32_46, %c0_i32_47] : memref<32x32xf32, #tpu.memory_space<vmem>> -> memref<1x32xf32, #tpu.memory_space<vmem>>
    tpu.enqueue_dma source(%79 : memref<1x32xf32, #tpu.memory_space<any>>) target(%80 : memref<1x32xf32, #tpu.memory_space<vmem>>) target_semaphore(%arg5 : memref<!tpu.dma_semaphore, #tpu.memory_space<semaphore_mem>>)
    %c16_i32 = arith.constant 16 : i32
    %81 = arith.addi %0, %c16_i32 : i32
    %82 = arith.index_cast %81 : i32 to index
    %83 = memref.load %arg1[%82] : memref<32xi32, #tpu.memory_space<smem>>
    %c0_i32_48 = arith.constant 0 : i32
    %84 = tpu.memref_slice %arg2[%83, %c0_i32_48] : memref<64x32xf32, #tpu.memory_space<any>> -> memref<1x32xf32, #tpu.memory_space<any>>
    %c16_i32_49 = arith.constant 16 : i32
    %c0_i32_50 = arith.constant 0 : i32
    %85 = tpu.memref_slice %arg4[%c16_i32_49, %c0_i32_50] : memref<32x32xf32, #tpu.memory_space<vmem>> -> memref<1x32xf32, #tpu.memory_space<vmem>>
    tpu.enqueue_dma source(%84 : memref<1x32xf32, #tpu.memory_space<any>>) target(%85 : memref<1x32xf32, #tpu.memory_space<vmem>>) target_semaphore(%arg5 : memref<!tpu.dma_semaphore, #tpu.memory_space<semaphore_mem>>)
    %c17_i32 = arith.constant 17 : i32
    %86 = arith.addi %0, %c17_i32 : i32
    %87 = arith.index_cast %86 : i32 to index
    %88 = memref.load %arg1[%87] : memref<32xi32, #tpu.memory_space<smem>>
    %c0_i32_51 = arith.constant 0 : i32
    %89 = tpu.memref_slice %arg2[%88, %c0_i32_51] : memref<64x32xf32, #tpu.memory_space<any>> -> memref<1x32xf32, #tpu.memory_space<any>>
    %c17_i32_52 = arith.constant 17 : i32
    %c0_i32_53 = arith.constant 0 : i32
    %90 = tpu.memref_slice %arg4[%c17_i32_52, %c0_i32_53] : memref<32x32xf32, #tpu.memory_space<vmem>> -> memref<1x32xf32, #tpu.memory_space<vmem>>
    tpu.enqueue_dma source(%89 : memref<1x32xf32, #tpu.memory_space<any>>) target(%90 : memref<1x32xf32, #tpu.memory_space<vmem>>) target_semaphore(%arg5 : memref<!tpu.dma_semaphore, #tpu.memory_space<semaphore_mem>>)
    %c18_i32 = arith.constant 18 : i32
    %91 = arith.addi %0, %c18_i32 : i32
    %92 = arith.index_cast %91 : i32 to index
    %93 = memref.load %arg1[%92] : memref<32xi32, #tpu.memory_space<smem>>
    %c0_i32_54 = arith.constant 0 : i32
    %94 = tpu.memref_slice %arg2[%93, %c0_i32_54] : memref<64x32xf32, #tpu.memory_space<any>> -> memref<1x32xf32, #tpu.memory_space<any>>
    %c18_i32_55 = arith.constant 18 : i32
    %c0_i32_56 = arith.constant 0 : i32
    %95 = tpu.memref_slice %arg4[%c18_i32_55, %c0_i32_56] : memref<32x32xf32, #tpu.memory_space<vmem>> -> memref<1x32xf32, #tpu.memory_space<vmem>>
    tpu.enqueue_dma source(%94 : memref<1x32xf32, #tpu.memory_space<any>>) target(%95 : memref<1x32xf32, #tpu.memory_space<vmem>>) target_semaphore(%arg5 : memref<!tpu.dma_semaphore, #tpu.memory_space<semaphore_mem>>)
    %c19_i32 = arith.constant 19 : i32
    %96 = arith.addi %0, %c19_i32 : i32
    %97 = arith.index_cast %96 : i32 to index
    %98 = memref.load %arg1[%97] : memref<32xi32, #tpu.memory_space<smem>>
    %c0_i32_57 = arith.constant 0 : i32
    %99 = tpu.memref_slice %arg2[%98, %c0_i32_57] : memref<64x32xf32, #tpu.memory_space<any>> -> memref<1x32xf32, #tpu.memory_space<any>>
    %c19_i32_58 = arith.constant 19 : i32
    %c0_i32_59 = arith.constant 0 : i32
    %100 = tpu.memref_slice %arg4[%c19_i32_58, %c0_i32_59] : memref<32x32xf32, #tpu.memory_space<vmem>> -> memref<1x32xf32, #tpu.memory_space<vmem>>
    tpu.enqueue_dma source(%99 : memref<1x32xf32, #tpu.memory_space<any>>) target(%100 : memref<1x32xf32, #tpu.memory_space<vmem>>) target_semaphore(%arg5 : memref<!tpu.dma_semaphore, #tpu.memory_space<semaphore_mem>>)
    %c20_i32 = arith.constant 20 : i32
    %101 = arith.addi %0, %c20_i32 : i32
    %102 = arith.index_cast %101 : i32 to index
    %103 = memref.load %arg1[%102] : memref<32xi32, #tpu.memory_space<smem>>
    %c0_i32_60 = arith.constant 0 : i32
    %104 = tpu.memref_slice %arg2[%103, %c0_i32_60] : memref<64x32xf32, #tpu.memory_space<any>> -> memref<1x32xf32, #tpu.memory_space<any>>
    %c20_i32_61 = arith.constant 20 : i32
    %c0_i32_62 = arith.constant 0 : i32
    %105 = tpu.memref_slice %arg4[%c20_i32_61, %c0_i32_62] : memref<32x32xf32, #tpu.memory_space<vmem>> -> memref<1x32xf32, #tpu.memory_space<vmem>>
    tpu.enqueue_dma source(%104 : memref<1x32xf32, #tpu.memory_space<any>>) target(%105 : memref<1x32xf32, #tpu.memory_space<vmem>>) target_semaphore(%arg5 : memref<!tpu.dma_semaphore, #tpu.memory_space<semaphore_mem>>)
    %c21_i32 = arith.constant 21 : i32
    %106 = arith.addi %0, %c21_i32 : i32
    %107 = arith.index_cast %106 : i32 to index
    %108 = memref.load %arg1[%107] : memref<32xi32, #tpu.memory_space<smem>>
    %c0_i32_63 = arith.constant 0 : i32
    %109 = tpu.memref_slice %arg2[%108, %c0_i32_63] : memref<64x32xf32, #tpu.memory_space<any>> -> memref<1x32xf32, #tpu.memory_space<any>>
    %c21_i32_64 = arith.constant 21 : i32
    %c0_i32_65 = arith.constant 0 : i32
    %110 = tpu.memref_slice %arg4[%c21_i32_64, %c0_i32_65] : memref<32x32xf32, #tpu.memory_space<vmem>> -> memref<1x32xf32, #tpu.memory_space<vmem>>
    tpu.enqueue_dma source(%109 : memref<1x32xf32, #tpu.memory_space<any>>) target(%110 : memref<1x32xf32, #tpu.memory_space<vmem>>) target_semaphore(%arg5 : memref<!tpu.dma_semaphore, #tpu.memory_space<semaphore_mem>>)
    %c22_i32 = arith.constant 22 : i32
    %111 = arith.addi %0, %c22_i32 : i32
    %112 = arith.index_cast %111 : i32 to index
    %113 = memref.load %arg1[%112] : memref<32xi32, #tpu.memory_space<smem>>
    %c0_i32_66 = arith.constant 0 : i32
    %114 = tpu.memref_slice %arg2[%113, %c0_i32_66] : memref<64x32xf32, #tpu.memory_space<any>> -> memref<1x32xf32, #tpu.memory_space<any>>
    %c22_i32_67 = arith.constant 22 : i32
    %c0_i32_68 = arith.constant 0 : i32
    %115 = tpu.memref_slice %arg4[%c22_i32_67, %c0_i32_68] : memref<32x32xf32, #tpu.memory_space<vmem>> -> memref<1x32xf32, #tpu.memory_space<vmem>>
    tpu.enqueue_dma source(%114 : memref<1x32xf32, #tpu.memory_space<any>>) target(%115 : memref<1x32xf32, #tpu.memory_space<vmem>>) target_semaphore(%arg5 : memref<!tpu.dma_semaphore, #tpu.memory_space<semaphore_mem>>)
    %c23_i32 = arith.constant 23 : i32
    %116 = arith.addi %0, %c23_i32 : i32
    %117 = arith.index_cast %116 : i32 to index
    %118 = memref.load %arg1[%117] : memref<32xi32, #tpu.memory_space<smem>>
    %c0_i32_69 = arith.constant 0 : i32
    %119 = tpu.memref_slice %arg2[%118, %c0_i32_69] : memref<64x32xf32, #tpu.memory_space<any>> -> memref<1x32xf32, #tpu.memory_space<any>>
    %c23_i32_70 = arith.constant 23 : i32
    %c0_i32_71 = arith.constant 0 : i32
    %120 = tpu.memref_slice %arg4[%c23_i32_70, %c0_i32_71] : memref<32x32xf32, #tpu.memory_space<vmem>> -> memref<1x32xf32, #tpu.memory_space<vmem>>
    tpu.enqueue_dma source(%119 : memref<1x32xf32, #tpu.memory_space<any>>) target(%120 : memref<1x32xf32, #tpu.memory_space<vmem>>) target_semaphore(%arg5 : memref<!tpu.dma_semaphore, #tpu.memory_space<semaphore_mem>>)
    %c24_i32 = arith.constant 24 : i32
    %121 = arith.addi %0, %c24_i32 : i32
    %122 = arith.index_cast %121 : i32 to index
    %123 = memref.load %arg1[%122] : memref<32xi32, #tpu.memory_space<smem>>
    %c0_i32_72 = arith.constant 0 : i32
    %124 = tpu.memref_slice %arg2[%123, %c0_i32_72] : memref<64x32xf32, #tpu.memory_space<any>> -> memref<1x32xf32, #tpu.memory_space<any>>
    %c24_i32_73 = arith.constant 24 : i32
    %c0_i32_74 = arith.constant 0 : i32
    %125 = tpu.memref_slice %arg4[%c24_i32_73, %c0_i32_74] : memref<32x32xf32, #tpu.memory_space<vmem>> -> memref<1x32xf32, #tpu.memory_space<vmem>>
    tpu.enqueue_dma source(%124 : memref<1x32xf32, #tpu.memory_space<any>>) target(%125 : memref<1x32xf32, #tpu.memory_space<vmem>>) target_semaphore(%arg5 : memref<!tpu.dma_semaphore, #tpu.memory_space<semaphore_mem>>)
    %c25_i32 = arith.constant 25 : i32
    %126 = arith.addi %0, %c25_i32 : i32
    %127 = arith.index_cast %126 : i32 to index
    %128 = memref.load %arg1[%127] : memref<32xi32, #tpu.memory_space<smem>>
    %c0_i32_75 = arith.constant 0 : i32
    %129 = tpu.memref_slice %arg2[%128, %c0_i32_75] : memref<64x32xf32, #tpu.memory_space<any>> -> memref<1x32xf32, #tpu.memory_space<any>>
    %c25_i32_76 = arith.constant 25 : i32
    %c0_i32_77 = arith.constant 0 : i32
    %130 = tpu.memref_slice %arg4[%c25_i32_76, %c0_i32_77] : memref<32x32xf32, #tpu.memory_space<vmem>> -> memref<1x32xf32, #tpu.memory_space<vmem>>
    tpu.enqueue_dma source(%129 : memref<1x32xf32, #tpu.memory_space<any>>) target(%130 : memref<1x32xf32, #tpu.memory_space<vmem>>) target_semaphore(%arg5 : memref<!tpu.dma_semaphore, #tpu.memory_space<semaphore_mem>>)
    %c26_i32 = arith.constant 26 : i32
    %131 = arith.addi %0, %c26_i32 : i32
    %132 = arith.index_cast %131 : i32 to index
    %133 = memref.load %arg1[%132] : memref<32xi32, #tpu.memory_space<smem>>
    %c0_i32_78 = arith.constant 0 : i32
    %134 = tpu.memref_slice %arg2[%133, %c0_i32_78] : memref<64x32xf32, #tpu.memory_space<any>> -> memref<1x32xf32, #tpu.memory_space<any>>
    %c26_i32_79 = arith.constant 26 : i32
    %c0_i32_80 = arith.constant 0 : i32
    %135 = tpu.memref_slice %arg4[%c26_i32_79, %c0_i32_80] : memref<32x32xf32, #tpu.memory_space<vmem>> -> memref<1x32xf32, #tpu.memory_space<vmem>>
    tpu.enqueue_dma source(%134 : memref<1x32xf32, #tpu.memory_space<any>>) target(%135 : memref<1x32xf32, #tpu.memory_space<vmem>>) target_semaphore(%arg5 : memref<!tpu.dma_semaphore, #tpu.memory_space<semaphore_mem>>)
    %c27_i32 = arith.constant 27 : i32
    %136 = arith.addi %0, %c27_i32 : i32
    %137 = arith.index_cast %136 : i32 to index
    %138 = memref.load %arg1[%137] : memref<32xi32, #tpu.memory_space<smem>>
    %c0_i32_81 = arith.constant 0 : i32
    %139 = tpu.memref_slice %arg2[%138, %c0_i32_81] : memref<64x32xf32, #tpu.memory_space<any>> -> memref<1x32xf32, #tpu.memory_space<any>>
    %c27_i32_82 = arith.constant 27 : i32
    %c0_i32_83 = arith.constant 0 : i32
    %140 = tpu.memref_slice %arg4[%c27_i32_82, %c0_i32_83] : memref<32x32xf32, #tpu.memory_space<vmem>> -> memref<1x32xf32, #tpu.memory_space<vmem>>
    tpu.enqueue_dma source(%139 : memref<1x32xf32, #tpu.memory_space<any>>) target(%140 : memref<1x32xf32, #tpu.memory_space<vmem>>) target_semaphore(%arg5 : memref<!tpu.dma_semaphore, #tpu.memory_space<semaphore_mem>>)
    %c28_i32 = arith.constant 28 : i32
    %141 = arith.addi %0, %c28_i32 : i32
    %142 = arith.index_cast %141 : i32 to index
    %143 = memref.load %arg1[%142] : memref<32xi32, #tpu.memory_space<smem>>
    %c0_i32_84 = arith.constant 0 : i32
    %144 = tpu.memref_slice %arg2[%143, %c0_i32_84] : memref<64x32xf32, #tpu.memory_space<any>> -> memref<1x32xf32, #tpu.memory_space<any>>
    %c28_i32_85 = arith.constant 28 : i32
    %c0_i32_86 = arith.constant 0 : i32
    %145 = tpu.memref_slice %arg4[%c28_i32_85, %c0_i32_86] : memref<32x32xf32, #tpu.memory_space<vmem>> -> memref<1x32xf32, #tpu.memory_space<vmem>>
    tpu.enqueue_dma source(%144 : memref<1x32xf32, #tpu.memory_space<any>>) target(%145 : memref<1x32xf32, #tpu.memory_space<vmem>>) target_semaphore(%arg5 : memref<!tpu.dma_semaphore, #tpu.memory_space<semaphore_mem>>)
    %c29_i32 = arith.constant 29 : i32
    %146 = arith.addi %0, %c29_i32 : i32
    %147 = arith.index_cast %146 : i32 to index
    %148 = memref.load %arg1[%147] : memref<32xi32, #tpu.memory_space<smem>>
    %c0_i32_87 = arith.constant 0 : i32
    %149 = tpu.memref_slice %arg2[%148, %c0_i32_87] : memref<64x32xf32, #tpu.memory_space<any>> -> memref<1x32xf32, #tpu.memory_space<any>>
    %c29_i32_88 = arith.constant 29 : i32
    %c0_i32_89 = arith.constant 0 : i32
    %150 = tpu.memref_slice %arg4[%c29_i32_88, %c0_i32_89] : memref<32x32xf32, #tpu.memory_space<vmem>> -> memref<1x32xf32, #tpu.memory_space<vmem>>
    tpu.enqueue_dma source(%149 : memref<1x32xf32, #tpu.memory_space<any>>) target(%150 : memref<1x32xf32, #tpu.memory_space<vmem>>) target_semaphore(%arg5 : memref<!tpu.dma_semaphore, #tpu.memory_space<semaphore_mem>>)
    %c30_i32 = arith.constant 30 : i32
    %151 = arith.addi %0, %c30_i32 : i32
    %152 = arith.index_cast %151 : i32 to index
    %153 = memref.load %arg1[%152] : memref<32xi32, #tpu.memory_space<smem>>
    %c0_i32_90 = arith.constant 0 : i32
    %154 = tpu.memref_slice %arg2[%153, %c0_i32_90] : memref<64x32xf32, #tpu.memory_space<any>> -> memref<1x32xf32, #tpu.memory_space<any>>
    %c30_i32_91 = arith.constant 30 : i32
    %c0_i32_92 = arith.constant 0 : i32
    %155 = tpu.memref_slice %arg4[%c30_i32_91, %c0_i32_92] : memref<32x32xf32, #tpu.memory_space<vmem>> -> memref<1x32xf32, #tpu.memory_space<vmem>>
    tpu.enqueue_dma source(%154 : memref<1x32xf32, #tpu.memory_space<any>>) target(%155 : memref<1x32xf32, #tpu.memory_space<vmem>>) target_semaphore(%arg5 : memref<!tpu.dma_semaphore, #tpu.memory_space<semaphore_mem>>)
    %c31_i32 = arith.constant 31 : i32
    %156 = arith.addi %0, %c31_i32 : i32
    %157 = arith.index_cast %156 : i32 to index
    %158 = memref.load %arg1[%157] : memref<32xi32, #tpu.memory_space<smem>>
    %c0_i32_93 = arith.constant 0 : i32
    %159 = tpu.memref_slice %arg2[%158, %c0_i32_93] : memref<64x32xf32, #tpu.memory_space<any>> -> memref<1x32xf32, #tpu.memory_space<any>>
    %c31_i32_94 = arith.constant 31 : i32
    %c0_i32_95 = arith.constant 0 : i32
    %160 = tpu.memref_slice %arg4[%c31_i32_94, %c0_i32_95] : memref<32x32xf32, #tpu.memory_space<vmem>> -> memref<1x32xf32, #tpu.memory_space<vmem>>
    tpu.enqueue_dma source(%159 : memref<1x32xf32, #tpu.memory_space<any>>) target(%160 : memref<1x32xf32, #tpu.memory_space<vmem>>) target_semaphore(%arg5 : memref<!tpu.dma_semaphore, #tpu.memory_space<semaphore_mem>>)
    %c0_i32_96 = arith.constant 0 : i32
    %c0_i32_97 = arith.constant 0 : i32
    %161 = tpu.memref_slice %arg2[%c0_i32_96, %c0_i32_97] : memref<64x32xf32, #tpu.memory_space<any>> -> memref<1x32xf32, #tpu.memory_space<any>>
    %c0_i32_98 = arith.constant 0 : i32
    %c0_i32_99 = arith.constant 0 : i32
    %162 = tpu.memref_slice %arg4[%c0_i32_98, %c0_i32_99] : memref<32x32xf32, #tpu.memory_space<vmem>> -> memref<1x32xf32, #tpu.memory_space<vmem>>
    tpu.wait_dma2 semaphore(%arg5 : memref<!tpu.dma_semaphore, #tpu.memory_space<semaphore_mem>>) src(%161 : memref<1x32xf32, #tpu.memory_space<any>>) dst(%162 : memref<1x32xf32, #tpu.memory_space<vmem>>)
    %c0_i32_100 = arith.constant 0 : i32
    %c0_i32_101 = arith.constant 0 : i32
    %163 = tpu.memref_slice %arg2[%c0_i32_100, %c0_i32_101] : memref<64x32xf32, #tpu.memory_space<any>> -> memref<1x32xf32, #tpu.memory_space<any>>
    %c1_i32_102 = arith.constant 1 : i32
    %c0_i32_103 = arith.constant 0 : i32
    %164 = tpu.memref_slice %arg4[%c1_i32_102, %c0_i32_103] : memref<32x32xf32, #tpu.memory_space<vmem>> -> memref<1x32xf32, #tpu.memory_space<vmem>>
    tpu.wait_dma2 semaphore(%arg5 : memref<!tpu.dma_semaphore, #tpu.memory_space<semaphore_mem>>) src(%163 : memref<1x32xf32, #tpu.memory_space<any>>) dst(%164 : memref<1x32xf32, #tpu.memory_space<vmem>>)
    %c0_i32_104 = arith.constant 0 : i32
    %c0_i32_105 = arith.constant 0 : i32
    %165 = tpu.memref_slice %arg2[%c0_i32_104, %c0_i32_105] : memref<64x32xf32, #tpu.memory_space<any>> -> memref<1x32xf32, #tpu.memory_space<any>>
    %c2_i32_106 = arith.constant 2 : i32
    %c0_i32_107 = arith.constant 0 : i32
    %166 = tpu.memref_slice %arg4[%c2_i32_106, %c0_i32_107] : memref<32x32xf32, #tpu.memory_space<vmem>> -> memref<1x32xf32, #tpu.memory_space<vmem>>
    tpu.wait_dma2 semaphore(%arg5 : memref<!tpu.dma_semaphore, #tpu.memory_space<semaphore_mem>>) src(%165 : memref<1x32xf32, #tpu.memory_space<any>>) dst(%166 : memref<1x32xf32, #tpu.memory_space<vmem>>)
    %c0_i32_108 = arith.constant 0 : i32
    %c0_i32_109 = arith.constant 0 : i32
    %167 = tpu.memref_slice %arg2[%c0_i32_108, %c0_i32_109] : memref<64x32xf32, #tpu.memory_space<any>> -> memref<1x32xf32, #tpu.memory_space<any>>
    %c3_i32_110 = arith.constant 3 : i32
    %c0_i32_111 = arith.constant 0 : i32
    %168 = tpu.memref_slice %arg4[%c3_i32_110, %c0_i32_111] : memref<32x32xf32, #tpu.memory_space<vmem>> -> memref<1x32xf32, #tpu.memory_space<vmem>>
    tpu.wait_dma2 semaphore(%arg5 : memref<!tpu.dma_semaphore, #tpu.memory_space<semaphore_mem>>) src(%167 : memref<1x32xf32, #tpu.memory_space<any>>) dst(%168 : memref<1x32xf32, #tpu.memory_space<vmem>>)
    %c0_i32_112 = arith.constant 0 : i32
    %c0_i32_113 = arith.constant 0 : i32
    %169 = tpu.memref_slice %arg2[%c0_i32_112, %c0_i32_113] : memref<64x32xf32, #tpu.memory_space<any>> -> memref<1x32xf32, #tpu.memory_space<any>>
    %c4_i32_114 = arith.constant 4 : i32
    %c0_i32_115 = arith.constant 0 : i32
    %170 = tpu.memref_slice %arg4[%c4_i32_114, %c0_i32_115] : memref<32x32xf32, #tpu.memory_space<vmem>> -> memref<1x32xf32, #tpu.memory_space<vmem>>
    tpu.wait_dma2 semaphore(%arg5 : memref<!tpu.dma_semaphore, #tpu.memory_space<semaphore_mem>>) src(%169 : memref<1x32xf32, #tpu.memory_space<any>>) dst(%170 : memref<1x32xf32, #tpu.memory_space<vmem>>)
    %c0_i32_116 = arith.constant 0 : i32
    %c0_i32_117 = arith.constant 0 : i32
    %171 = tpu.memref_slice %arg2[%c0_i32_116, %c0_i32_117] : memref<64x32xf32, #tpu.memory_space<any>> -> memref<1x32xf32, #tpu.memory_space<any>>
    %c5_i32_118 = arith.constant 5 : i32
    %c0_i32_119 = arith.constant 0 : i32
    %172 = tpu.memref_slice %arg4[%c5_i32_118, %c0_i32_119] : memref<32x32xf32, #tpu.memory_space<vmem>> -> memref<1x32xf32, #tpu.memory_space<vmem>>
    tpu.wait_dma2 semaphore(%arg5 : memref<!tpu.dma_semaphore, #tpu.memory_space<semaphore_mem>>) src(%171 : memref<1x32xf32, #tpu.memory_space<any>>) dst(%172 : memref<1x32xf32, #tpu.memory_space<vmem>>)
    %c0_i32_120 = arith.constant 0 : i32
    %c0_i32_121 = arith.constant 0 : i32
    %173 = tpu.memref_slice %arg2[%c0_i32_120, %c0_i32_121] : memref<64x32xf32, #tpu.memory_space<any>> -> memref<1x32xf32, #tpu.memory_space<any>>
    %c6_i32_122 = arith.constant 6 : i32
    %c0_i32_123 = arith.constant 0 : i32
    %174 = tpu.memref_slice %arg4[%c6_i32_122, %c0_i32_123] : memref<32x32xf32, #tpu.memory_space<vmem>> -> memref<1x32xf32, #tpu.memory_space<vmem>>
    tpu.wait_dma2 semaphore(%arg5 : memref<!tpu.dma_semaphore, #tpu.memory_space<semaphore_mem>>) src(%173 : memref<1x32xf32, #tpu.memory_space<any>>) dst(%174 : memref<1x32xf32, #tpu.memory_space<vmem>>)
    %c0_i32_124 = arith.constant 0 : i32
    %c0_i32_125 = arith.constant 0 : i32
    %175 = tpu.memref_slice %arg2[%c0_i32_124, %c0_i32_125] : memref<64x32xf32, #tpu.memory_space<any>> -> memref<1x32xf32, #tpu.memory_space<any>>
    %c7_i32_126 = arith.constant 7 : i32
    %c0_i32_127 = arith.constant 0 : i32
    %176 = tpu.memref_slice %arg4[%c7_i32_126, %c0_i32_127] : memref<32x32xf32, #tpu.memory_space<vmem>> -> memref<1x32xf32, #tpu.memory_space<vmem>>
    tpu.wait_dma2 semaphore(%arg5 : memref<!tpu.dma_semaphore, #tpu.memory_space<semaphore_mem>>) src(%175 : memref<1x32xf32, #tpu.memory_space<any>>) dst(%176 : memref<1x32xf32, #tpu.memory_space<vmem>>)
    %c0_i32_128 = arith.constant 0 : i32
    %c0_i32_129 = arith.constant 0 : i32
    %177 = tpu.memref_slice %arg2[%c0_i32_128, %c0_i32_129] : memref<64x32xf32, #tpu.memory_space<any>> -> memref<1x32xf32, #tpu.memory_space<any>>
    %c8_i32_130 = arith.constant 8 : i32
    %c0_i32_131 = arith.constant 0 : i32
    %178 = tpu.memref_slice %arg4[%c8_i32_130, %c0_i32_131] : memref<32x32xf32, #tpu.memory_space<vmem>> -> memref<1x32xf32, #tpu.memory_space<vmem>>
    tpu.wait_dma2 semaphore(%arg5 : memref<!tpu.dma_semaphore, #tpu.memory_space<semaphore_mem>>) src(%177 : memref<1x32xf32, #tpu.memory_space<any>>) dst(%178 : memref<1x32xf32, #tpu.memory_space<vmem>>)
    %c0_i32_132 = arith.constant 0 : i32
    %c0_i32_133 = arith.constant 0 : i32
    %179 = tpu.memref_slice %arg2[%c0_i32_132, %c0_i32_133] : memref<64x32xf32, #tpu.memory_space<any>> -> memref<1x32xf32, #tpu.memory_space<any>>
    %c9_i32_134 = arith.constant 9 : i32
    %c0_i32_135 = arith.constant 0 : i32
    %180 = tpu.memref_slice %arg4[%c9_i32_134, %c0_i32_135] : memref<32x32xf32, #tpu.memory_space<vmem>> -> memref<1x32xf32, #tpu.memory_space<vmem>>
    tpu.wait_dma2 semaphore(%arg5 : memref<!tpu.dma_semaphore, #tpu.memory_space<semaphore_mem>>) src(%179 : memref<1x32xf32, #tpu.memory_space<any>>) dst(%180 : memref<1x32xf32, #tpu.memory_space<vmem>>)
    %c0_i32_136 = arith.constant 0 : i32
    %c0_i32_137 = arith.constant 0 : i32
    %181 = tpu.memref_slice %arg2[%c0_i32_136, %c0_i32_137] : memref<64x32xf32, #tpu.memory_space<any>> -> memref<1x32xf32, #tpu.memory_space<any>>
    %c10_i32_138 = arith.constant 10 : i32
    %c0_i32_139 = arith.constant 0 : i32
    %182 = tpu.memref_slice %arg4[%c10_i32_138, %c0_i32_139] : memref<32x32xf32, #tpu.memory_space<vmem>> -> memref<1x32xf32, #tpu.memory_space<vmem>>
    tpu.wait_dma2 semaphore(%arg5 : memref<!tpu.dma_semaphore, #tpu.memory_space<semaphore_mem>>) src(%181 : memref<1x32xf32, #tpu.memory_space<any>>) dst(%182 : memref<1x32xf32, #tpu.memory_space<vmem>>)
    %c0_i32_140 = arith.constant 0 : i32
    %c0_i32_141 = arith.constant 0 : i32
    %183 = tpu.memref_slice %arg2[%c0_i32_140, %c0_i32_141] : memref<64x32xf32, #tpu.memory_space<any>> -> memref<1x32xf32, #tpu.memory_space<any>>
    %c11_i32_142 = arith.constant 11 : i32
    %c0_i32_143 = arith.constant 0 : i32
    %184 = tpu.memref_slice %arg4[%c11_i32_142, %c0_i32_143] : memref<32x32xf32, #tpu.memory_space<vmem>> -> memref<1x32xf32, #tpu.memory_space<vmem>>
    tpu.wait_dma2 semaphore(%arg5 : memref<!tpu.dma_semaphore, #tpu.memory_space<semaphore_mem>>) src(%183 : memref<1x32xf32, #tpu.memory_space<any>>) dst(%184 : memref<1x32xf32, #tpu.memory_space<vmem>>)
    %c0_i32_144 = arith.constant 0 : i32
    %c0_i32_145 = arith.constant 0 : i32
    %185 = tpu.memref_slice %arg2[%c0_i32_144, %c0_i32_145] : memref<64x32xf32, #tpu.memory_space<any>> -> memref<1x32xf32, #tpu.memory_space<any>>
    %c12_i32_146 = arith.constant 12 : i32
    %c0_i32_147 = arith.constant 0 : i32
    %186 = tpu.memref_slice %arg4[%c12_i32_146, %c0_i32_147] : memref<32x32xf32, #tpu.memory_space<vmem>> -> memref<1x32xf32, #tpu.memory_space<vmem>>
    tpu.wait_dma2 semaphore(%arg5 : memref<!tpu.dma_semaphore, #tpu.memory_space<semaphore_mem>>) src(%185 : memref<1x32xf32, #tpu.memory_space<any>>) dst(%186 : memref<1x32xf32, #tpu.memory_space<vmem>>)
    %c0_i32_148 = arith.constant 0 : i32
    %c0_i32_149 = arith.constant 0 : i32
    %187 = tpu.memref_slice %arg2[%c0_i32_148, %c0_i32_149] : memref<64x32xf32, #tpu.memory_space<any>> -> memref<1x32xf32, #tpu.memory_space<any>>
    %c13_i32_150 = arith.constant 13 : i32
    %c0_i32_151 = arith.constant 0 : i32
    %188 = tpu.memref_slice %arg4[%c13_i32_150, %c0_i32_151] : memref<32x32xf32, #tpu.memory_space<vmem>> -> memref<1x32xf32, #tpu.memory_space<vmem>>
    tpu.wait_dma2 semaphore(%arg5 : memref<!tpu.dma_semaphore, #tpu.memory_space<semaphore_mem>>) src(%187 : memref<1x32xf32, #tpu.memory_space<any>>) dst(%188 : memref<1x32xf32, #tpu.memory_space<vmem>>)
    %c0_i32_152 = arith.constant 0 : i32
    %c0_i32_153 = arith.constant 0 : i32
    %189 = tpu.memref_slice %arg2[%c0_i32_152, %c0_i32_153] : memref<64x32xf32, #tpu.memory_space<any>> -> memref<1x32xf32, #tpu.memory_space<any>>
    %c14_i32_154 = arith.constant 14 : i32
    %c0_i32_155 = arith.constant 0 : i32
    %190 = tpu.memref_slice %arg4[%c14_i32_154, %c0_i32_155] : memref<32x32xf32, #tpu.memory_space<vmem>> -> memref<1x32xf32, #tpu.memory_space<vmem>>
    tpu.wait_dma2 semaphore(%arg5 : memref<!tpu.dma_semaphore, #tpu.memory_space<semaphore_mem>>) src(%189 : memref<1x32xf32, #tpu.memory_space<any>>) dst(%190 : memref<1x32xf32, #tpu.memory_space<vmem>>)
    %c0_i32_156 = arith.constant 0 : i32
    %c0_i32_157 = arith.constant 0 : i32
    %191 = tpu.memref_slice %arg2[%c0_i32_156, %c0_i32_157] : memref<64x32xf32, #tpu.memory_space<any>> -> memref<1x32xf32, #tpu.memory_space<any>>
    %c15_i32_158 = arith.constant 15 : i32
    %c0_i32_159 = arith.constant 0 : i32
    %192 = tpu.memref_slice %arg4[%c15_i32_158, %c0_i32_159] : memref<32x32xf32, #tpu.memory_space<vmem>> -> memref<1x32xf32, #tpu.memory_space<vmem>>
    tpu.wait_dma2 semaphore(%arg5 : memref<!tpu.dma_semaphore, #tpu.memory_space<semaphore_mem>>) src(%191 : memref<1x32xf32, #tpu.memory_space<any>>) dst(%192 : memref<1x32xf32, #tpu.memory_space<vmem>>)
    %c0_i32_160 = arith.constant 0 : i32
    %c0_i32_161 = arith.constant 0 : i32
    %193 = tpu.memref_slice %arg2[%c0_i32_160, %c0_i32_161] : memref<64x32xf32, #tpu.memory_space<any>> -> memref<1x32xf32, #tpu.memory_space<any>>
    %c16_i32_162 = arith.constant 16 : i32
    %c0_i32_163 = arith.constant 0 : i32
    %194 = tpu.memref_slice %arg4[%c16_i32_162, %c0_i32_163] : memref<32x32xf32, #tpu.memory_space<vmem>> -> memref<1x32xf32, #tpu.memory_space<vmem>>
    tpu.wait_dma2 semaphore(%arg5 : memref<!tpu.dma_semaphore, #tpu.memory_space<semaphore_mem>>) src(%193 : memref<1x32xf32, #tpu.memory_space<any>>) dst(%194 : memref<1x32xf32, #tpu.memory_space<vmem>>)
    %c0_i32_164 = arith.constant 0 : i32
    %c0_i32_165 = arith.constant 0 : i32
    %195 = tpu.memref_slice %arg2[%c0_i32_164, %c0_i32_165] : memref<64x32xf32, #tpu.memory_space<any>> -> memref<1x32xf32, #tpu.memory_space<any>>
    %c17_i32_166 = arith.constant 17 : i32
    %c0_i32_167 = arith.constant 0 : i32
    %196 = tpu.memref_slice %arg4[%c17_i32_166, %c0_i32_167] : memref<32x32xf32, #tpu.memory_space<vmem>> -> memref<1x32xf32, #tpu.memory_space<vmem>>
    tpu.wait_dma2 semaphore(%arg5 : memref<!tpu.dma_semaphore, #tpu.memory_space<semaphore_mem>>) src(%195 : memref<1x32xf32, #tpu.memory_space<any>>) dst(%196 : memref<1x32xf32, #tpu.memory_space<vmem>>)
    %c0_i32_168 = arith.constant 0 : i32
    %c0_i32_169 = arith.constant 0 : i32
    %197 = tpu.memref_slice %arg2[%c0_i32_168, %c0_i32_169] : memref<64x32xf32, #tpu.memory_space<any>> -> memref<1x32xf32, #tpu.memory_space<any>>
    %c18_i32_170 = arith.constant 18 : i32
    %c0_i32_171 = arith.constant 0 : i32
    %198 = tpu.memref_slice %arg4[%c18_i32_170, %c0_i32_171] : memref<32x32xf32, #tpu.memory_space<vmem>> -> memref<1x32xf32, #tpu.memory_space<vmem>>
    tpu.wait_dma2 semaphore(%arg5 : memref<!tpu.dma_semaphore, #tpu.memory_space<semaphore_mem>>) src(%197 : memref<1x32xf32, #tpu.memory_space<any>>) dst(%198 : memref<1x32xf32, #tpu.memory_space<vmem>>)
    %c0_i32_172 = arith.constant 0 : i32
    %c0_i32_173 = arith.constant 0 : i32
    %199 = tpu.memref_slice %arg2[%c0_i32_172, %c0_i32_173] : memref<64x32xf32, #tpu.memory_space<any>> -> memref<1x32xf32, #tpu.memory_space<any>>
    %c19_i32_174 = arith.constant 19 : i32
    %c0_i32_175 = arith.constant 0 : i32
    %200 = tpu.memref_slice %arg4[%c19_i32_174, %c0_i32_175] : memref<32x32xf32, #tpu.memory_space<vmem>> -> memref<1x32xf32, #tpu.memory_space<vmem>>
    tpu.wait_dma2 semaphore(%arg5 : memref<!tpu.dma_semaphore, #tpu.memory_space<semaphore_mem>>) src(%199 : memref<1x32xf32, #tpu.memory_space<any>>) dst(%200 : memref<1x32xf32, #tpu.memory_space<vmem>>)
    %c0_i32_176 = arith.constant 0 : i32
    %c0_i32_177 = arith.constant 0 : i32
    %201 = tpu.memref_slice %arg2[%c0_i32_176, %c0_i32_177] : memref<64x32xf32, #tpu.memory_space<any>> -> memref<1x32xf32, #tpu.memory_space<any>>
    %c20_i32_178 = arith.constant 20 : i32
    %c0_i32_179 = arith.constant 0 : i32
    %202 = tpu.memref_slice %arg4[%c20_i32_178, %c0_i32_179] : memref<32x32xf32, #tpu.memory_space<vmem>> -> memref<1x32xf32, #tpu.memory_space<vmem>>
    tpu.wait_dma2 semaphore(%arg5 : memref<!tpu.dma_semaphore, #tpu.memory_space<semaphore_mem>>) src(%201 : memref<1x32xf32, #tpu.memory_space<any>>) dst(%202 : memref<1x32xf32, #tpu.memory_space<vmem>>)
    %c0_i32_180 = arith.constant 0 : i32
    %c0_i32_181 = arith.constant 0 : i32
    %203 = tpu.memref_slice %arg2[%c0_i32_180, %c0_i32_181] : memref<64x32xf32, #tpu.memory_space<any>> -> memref<1x32xf32, #tpu.memory_space<any>>
    %c21_i32_182 = arith.constant 21 : i32
    %c0_i32_183 = arith.constant 0 : i32
    %204 = tpu.memref_slice %arg4[%c21_i32_182, %c0_i32_183] : memref<32x32xf32, #tpu.memory_space<vmem>> -> memref<1x32xf32, #tpu.memory_space<vmem>>
    tpu.wait_dma2 semaphore(%arg5 : memref<!tpu.dma_semaphore, #tpu.memory_space<semaphore_mem>>) src(%203 : memref<1x32xf32, #tpu.memory_space<any>>) dst(%204 : memref<1x32xf32, #tpu.memory_space<vmem>>)
    %c0_i32_184 = arith.constant 0 : i32
    %c0_i32_185 = arith.constant 0 : i32
    %205 = tpu.memref_slice %arg2[%c0_i32_184, %c0_i32_185] : memref<64x32xf32, #tpu.memory_space<any>> -> memref<1x32xf32, #tpu.memory_space<any>>
    %c22_i32_186 = arith.constant 22 : i32
    %c0_i32_187 = arith.constant 0 : i32
    %206 = tpu.memref_slice %arg4[%c22_i32_186, %c0_i32_187] : memref<32x32xf32, #tpu.memory_space<vmem>> -> memref<1x32xf32, #tpu.memory_space<vmem>>
    tpu.wait_dma2 semaphore(%arg5 : memref<!tpu.dma_semaphore, #tpu.memory_space<semaphore_mem>>) src(%205 : memref<1x32xf32, #tpu.memory_space<any>>) dst(%206 : memref<1x32xf32, #tpu.memory_space<vmem>>)
    %c0_i32_188 = arith.constant 0 : i32
    %c0_i32_189 = arith.constant 0 : i32
    %207 = tpu.memref_slice %arg2[%c0_i32_188, %c0_i32_189] : memref<64x32xf32, #tpu.memory_space<any>> -> memref<1x32xf32, #tpu.memory_space<any>>
    %c23_i32_190 = arith.constant 23 : i32
    %c0_i32_191 = arith.constant 0 : i32
    %208 = tpu.memref_slice %arg4[%c23_i32_190, %c0_i32_191] : memref<32x32xf32, #tpu.memory_space<vmem>> -> memref<1x32xf32, #tpu.memory_space<vmem>>
    tpu.wait_dma2 semaphore(%arg5 : memref<!tpu.dma_semaphore, #tpu.memory_space<semaphore_mem>>) src(%207 : memref<1x32xf32, #tpu.memory_space<any>>) dst(%208 : memref<1x32xf32, #tpu.memory_space<vmem>>)
    %c0_i32_192 = arith.constant 0 : i32
    %c0_i32_193 = arith.constant 0 : i32
    %209 = tpu.memref_slice %arg2[%c0_i32_192, %c0_i32_193] : memref<64x32xf32, #tpu.memory_space<any>> -> memref<1x32xf32, #tpu.memory_space<any>>
    %c24_i32_194 = arith.constant 24 : i32
    %c0_i32_195 = arith.constant 0 : i32
    %210 = tpu.memref_slice %arg4[%c24_i32_194, %c0_i32_195] : memref<32x32xf32, #tpu.memory_space<vmem>> -> memref<1x32xf32, #tpu.memory_space<vmem>>
    tpu.wait_dma2 semaphore(%arg5 : memref<!tpu.dma_semaphore, #tpu.memory_space<semaphore_mem>>) src(%209 : memref<1x32xf32, #tpu.memory_space<any>>) dst(%210 : memref<1x32xf32, #tpu.memory_space<vmem>>)
    %c0_i32_196 = arith.constant 0 : i32
    %c0_i32_197 = arith.constant 0 : i32
    %211 = tpu.memref_slice %arg2[%c0_i32_196, %c0_i32_197] : memref<64x32xf32, #tpu.memory_space<any>> -> memref<1x32xf32, #tpu.memory_space<any>>
    %c25_i32_198 = arith.constant 25 : i32
    %c0_i32_199 = arith.constant 0 : i32
    %212 = tpu.memref_slice %arg4[%c25_i32_198, %c0_i32_199] : memref<32x32xf32, #tpu.memory_space<vmem>> -> memref<1x32xf32, #tpu.memory_space<vmem>>
    tpu.wait_dma2 semaphore(%arg5 : memref<!tpu.dma_semaphore, #tpu.memory_space<semaphore_mem>>) src(%211 : memref<1x32xf32, #tpu.memory_space<any>>) dst(%212 : memref<1x32xf32, #tpu.memory_space<vmem>>)
    %c0_i32_200 = arith.constant 0 : i32
    %c0_i32_201 = arith.constant 0 : i32
    %213 = tpu.memref_slice %arg2[%c0_i32_200, %c0_i32_201] : memref<64x32xf32, #tpu.memory_space<any>> -> memref<1x32xf32, #tpu.memory_space<any>>
    %c26_i32_202 = arith.constant 26 : i32
    %c0_i32_203 = arith.constant 0 : i32
    %214 = tpu.memref_slice %arg4[%c26_i32_202, %c0_i32_203] : memref<32x32xf32, #tpu.memory_space<vmem>> -> memref<1x32xf32, #tpu.memory_space<vmem>>
    tpu.wait_dma2 semaphore(%arg5 : memref<!tpu.dma_semaphore, #tpu.memory_space<semaphore_mem>>) src(%213 : memref<1x32xf32, #tpu.memory_space<any>>) dst(%214 : memref<1x32xf32, #tpu.memory_space<vmem>>)
    %c0_i32_204 = arith.constant 0 : i32
    %c0_i32_205 = arith.constant 0 : i32
    %215 = tpu.memref_slice %arg2[%c0_i32_204, %c0_i32_205] : memref<64x32xf32, #tpu.memory_space<any>> -> memref<1x32xf32, #tpu.memory_space<any>>
    %c27_i32_206 = arith.constant 27 : i32
    %c0_i32_207 = arith.constant 0 : i32
    %216 = tpu.memref_slice %arg4[%c27_i32_206, %c0_i32_207] : memref<32x32xf32, #tpu.memory_space<vmem>> -> memref<1x32xf32, #tpu.memory_space<vmem>>
    tpu.wait_dma2 semaphore(%arg5 : memref<!tpu.dma_semaphore, #tpu.memory_space<semaphore_mem>>) src(%215 : memref<1x32xf32, #tpu.memory_space<any>>) dst(%216 : memref<1x32xf32, #tpu.memory_space<vmem>>)
    %c0_i32_208 = arith.constant 0 : i32
    %c0_i32_209 = arith.constant 0 : i32
    %217 = tpu.memref_slice %arg2[%c0_i32_208, %c0_i32_209] : memref<64x32xf32, #tpu.memory_space<any>> -> memref<1x32xf32, #tpu.memory_space<any>>
    %c28_i32_210 = arith.constant 28 : i32
    %c0_i32_211 = arith.constant 0 : i32
    %218 = tpu.memref_slice %arg4[%c28_i32_210, %c0_i32_211] : memref<32x32xf32, #tpu.memory_space<vmem>> -> memref<1x32xf32, #tpu.memory_space<vmem>>
    tpu.wait_dma2 semaphore(%arg5 : memref<!tpu.dma_semaphore, #tpu.memory_space<semaphore_mem>>) src(%217 : memref<1x32xf32, #tpu.memory_space<any>>) dst(%218 : memref<1x32xf32, #tpu.memory_space<vmem>>)
    %c0_i32_212 = arith.constant 0 : i32
    %c0_i32_213 = arith.constant 0 : i32
    %219 = tpu.memref_slice %arg2[%c0_i32_212, %c0_i32_213] : memref<64x32xf32, #tpu.memory_space<any>> -> memref<1x32xf32, #tpu.memory_space<any>>
    %c29_i32_214 = arith.constant 29 : i32
    %c0_i32_215 = arith.constant 0 : i32
    %220 = tpu.memref_slice %arg4[%c29_i32_214, %c0_i32_215] : memref<32x32xf32, #tpu.memory_space<vmem>> -> memref<1x32xf32, #tpu.memory_space<vmem>>
    tpu.wait_dma2 semaphore(%arg5 : memref<!tpu.dma_semaphore, #tpu.memory_space<semaphore_mem>>) src(%219 : memref<1x32xf32, #tpu.memory_space<any>>) dst(%220 : memref<1x32xf32, #tpu.memory_space<vmem>>)
    %c0_i32_216 = arith.constant 0 : i32
    %c0_i32_217 = arith.constant 0 : i32
    %221 = tpu.memref_slice %arg2[%c0_i32_216, %c0_i32_217] : memref<64x32xf32, #tpu.memory_space<any>> -> memref<1x32xf32, #tpu.memory_space<any>>
    %c30_i32_218 = arith.constant 30 : i32
    %c0_i32_219 = arith.constant 0 : i32
    %222 = tpu.memref_slice %arg4[%c30_i32_218, %c0_i32_219] : memref<32x32xf32, #tpu.memory_space<vmem>> -> memref<1x32xf32, #tpu.memory_space<vmem>>
    tpu.wait_dma2 semaphore(%arg5 : memref<!tpu.dma_semaphore, #tpu.memory_space<semaphore_mem>>) src(%221 : memref<1x32xf32, #tpu.memory_space<any>>) dst(%222 : memref<1x32xf32, #tpu.memory_space<vmem>>)
    %c0_i32_220 = arith.constant 0 : i32
    %c0_i32_221 = arith.constant 0 : i32
    %223 = tpu.memref_slice %arg2[%c0_i32_220, %c0_i32_221] : memref<64x32xf32, #tpu.memory_space<any>> -> memref<1x32xf32, #tpu.memory_space<any>>
    %c31_i32_222 = arith.constant 31 : i32
    %c0_i32_223 = arith.constant 0 : i32
    %224 = tpu.memref_slice %arg4[%c31_i32_222, %c0_i32_223] : memref<32x32xf32, #tpu.memory_space<vmem>> -> memref<1x32xf32, #tpu.memory_space<vmem>>
    tpu.wait_dma2 semaphore(%arg5 : memref<!tpu.dma_semaphore, #tpu.memory_space<semaphore_mem>>) src(%223 : memref<1x32xf32, #tpu.memory_space<any>>) dst(%224 : memref<1x32xf32, #tpu.memory_space<vmem>>)
    %c0 = arith.constant 0 : index
    %c0_224 = arith.constant 0 : index
    %225 = vector.load %arg4[%c0, %c0_224] : memref<32x32xf32, #tpu.memory_space<vmem>>, vector<32x32xf32>
    %cst = arith.constant 5.65685415 : f32
    %226 = vector.broadcast %cst : f32 to vector<32x32xf32>
    %227 = arith.mulf %225, %226 : vector<32x32xf32>
    %c0_225 = arith.constant 0 : index
    %c0_226 = arith.constant 0 : index
    %228 = vector.load %arg3[%c0_225, %c0_226] : memref<32x32xf32, #tpu.memory_space<vmem>>, vector<32x32xf32>
    tpu.vector_store %arg3[%c0_225, %c0_226], %227 {strides = array<i32>} : memref<32x32xf32, #tpu.memory_space<vmem>>, vector<32x32xf32>,
    return
  }
  func.func @transform_1(%arg0: i32, %arg1: memref<32xi32, #tpu.memory_space<smem>>) -> (i32, i32) {
    %c0_i32 = arith.constant 0 : i32
    %c0_i32_0 = arith.constant 0 : i32
    return %arg0, %c0_i32 : i32, i32
  }
}

</mosaic_0001>

<llo_original>
// kernel: tpu_custom_call.1
$region0: #{tpu_custom_call.1}
  #allocation0 [shape = 'u32[]', space=smem, size = 0x4, offset = 0x4, fixed_abs, tag = 'smem constant byte address 0x4 - core index']
  #allocation1 [shape = 'u32[144,128]{1,0:T(1,128)}', space=vmem, size = 0x12000, scoped, tag = 'internal scratch']
  #allocation2 [shape = 'f32[32,32]{1,0:T(8,128)}', space=vmem, size = 0x4000, scoped, tag = 'scratch operand']
  #allocation3 [shape = 's32[1]{0}', space=sflag, size = 0x4, scoped, tag = 'scratch operand']
  #allocation4 [shape = 's32[1]{0}', space=sflag, size = 0x4, scoped, tag = 'scoped memory for tpu_custom_call.1']
  #allocation5 [shape = 'u8[512]{0}', space=smem, size = 0x200, scoped, tag = 'prefetched SMEM operand 0']
  #allocation8 [shape = 's32[]', space=sflag, size = 0x4, offset = 0, fixed_abs, tag = 'sflag constant byte address 0x0 - dummy sync flag']
  #allocation9 [shape = 's32[]', space=sflag, size = 0x4, offset = 0, fixed_abs, tag = 'sflag constant byte address 0x0 - dummy sync flag']
  #allocation10 [shape = 's32[]', space=sflag, size = 0x4, offset = 0, fixed_abs, tag = 'sflag constant byte address 0x0 - dummy sync flag']
  #allocation11 [shape = 's32[]', space=sflag, size = 0x4, offset = 0, fixed_abs, tag = 'sflag constant byte address 0x0 - dummy sync flag']
  #allocation12 [shape = 's32[]', space=sflag, size = 0x4, offset = 0, fixed_abs, tag = 'sflag constant byte address 0x0 - dummy sync flag']
  #allocation13 [shape = 's32[]', space=sflag, size = 0x4, offset = 0, fixed_abs, tag = 'sflag constant byte address 0x0 - dummy sync flag']
  #allocation14 [shape = 's32[]', space=sflag, size = 0x4, offset = 0, fixed_abs, tag = 'sflag constant byte address 0x0 - dummy sync flag']
  #allocation15 [shape = 's32[]', space=sflag, size = 0x4, offset = 0, fixed_abs, tag = 'sflag constant byte address 0x0 - dummy sync flag']
  #allocation16 [shape = 's32[]', space=sflag, size = 0x4, offset = 0, fixed_abs, tag = 'sflag constant byte address 0x0 - dummy sync flag']
  #allocation17 [shape = 's32[]', space=sflag, size = 0x4, offset = 0, fixed_abs, tag = 'sflag constant byte address 0x0 - dummy sync flag']
  #allocation18 [shape = 's32[]', space=sflag, size = 0x4, offset = 0, fixed_abs, tag = 'sflag constant byte address 0x0 - dummy sync flag']
  #allocation19 [shape = 's32[]', space=sflag, size = 0x4, offset = 0, fixed_abs, tag = 'sflag constant byte address 0x0 - dummy sync flag']
  #allocation20 [shape = 's32[]', space=sflag, size = 0x4, offset = 0, fixed_abs, tag = 'sflag constant byte address 0x0 - dummy sync flag']
  #allocation21 [shape = 's32[]', space=sflag, size = 0x4, offset = 0, fixed_abs, tag = 'sflag constant byte address 0x0 - dummy sync flag']
  #allocation22 [shape = 's32[]', space=sflag, size = 0x4, offset = 0, fixed_abs, tag = 'sflag constant byte address 0x0 - dummy sync flag']
  #allocation23 [shape = 's32[]', space=sflag, size = 0x4, offset = 0, fixed_abs, tag = 'sflag constant byte address 0x0 - dummy sync flag']
  #allocation24 [shape = 's32[]', space=sflag, size = 0x4, offset = 0, fixed_abs, tag = 'sflag constant byte address 0x0 - dummy sync flag']
  #allocation25 [shape = 's32[]', space=sflag, size = 0x4, offset = 0, fixed_abs, tag = 'sflag constant byte address 0x0 - dummy sync flag']
  #allocation26 [shape = 's32[]', space=sflag, size = 0x4, offset = 0, fixed_abs, tag = 'sflag constant byte address 0x0 - dummy sync flag']
  #allocation27 [shape = 's32[]', space=sflag, size = 0x4, offset = 0, fixed_abs, tag = 'sflag constant byte address 0x0 - dummy sync flag']
  #allocation28 [shape = 's32[]', space=sflag, size = 0x4, offset = 0, fixed_abs, tag = 'sflag constant byte address 0x0 - dummy sync flag']
  #allocation29 [shape = 's32[]', space=sflag, size = 0x4, offset = 0, fixed_abs, tag = 'sflag constant byte address 0x0 - dummy sync flag']
  #allocation30 [shape = 's32[]', space=sflag, size = 0x4, offset = 0, fixed_abs, tag = 'sflag constant byte address 0x0 - dummy sync flag']
  #allocation31 [shape = 's32[]', space=sflag, size = 0x4, offset = 0, fixed_abs, tag = 'sflag constant byte address 0x0 - dummy sync flag']
  #allocation32 [shape = 's32[]', space=sflag, size = 0x4, offset = 0, fixed_abs, tag = 'sflag constant byte address 0x0 - dummy sync flag']
  #allocation33 [shape = 's32[]', space=sflag, size = 0x4, offset = 0, fixed_abs, tag = 'sflag constant byte address 0x0 - dummy sync flag']
  #allocation34 [shape = 's32[]', space=sflag, size = 0x4, offset = 0, fixed_abs, tag = 'sflag constant byte address 0x0 - dummy sync flag']
  #allocation35 [shape = 's32[]', space=sflag, size = 0x4, offset = 0, fixed_abs, tag = 'sflag constant byte address 0x0 - dummy sync flag']
  #allocation36 [shape = 's32[]', space=sflag, size = 0x4, offset = 0, fixed_abs, tag = 'sflag constant byte address 0x0 - dummy sync flag']
  #allocation37 [shape = 's32[]', space=sflag, size = 0x4, offset = 0, fixed_abs, tag = 'sflag constant byte address 0x0 - dummy sync flag']
  #allocation38 [shape = 's32[]', space=sflag, size = 0x4, offset = 0, fixed_abs, tag = 'sflag constant byte address 0x0 - dummy sync flag']
  #allocation39 [shape = 's32[]', space=sflag, size = 0x4, offset = 0, fixed_abs, tag = 'sflag constant byte address 0x0 - dummy sync flag']
  %s0 = inlined_call_operand.vmem [shape: s32[32], index: 0, kind: input, shape index: {}]
  %s1 = inlined_call_operand.vmem [shape: f32[64,32], index: 1, kind: input, shape index: {}]
  %s2 = inlined_call_operand.hbm [shape: f32[32,32], index: 2, kind: output, shape index: {}]
  %s3 = sld [smem:[#allocation0]]
  $region970: #{tpu_custom_call.1} parent=0
    _
  %s5 = ssub.s32 1, %s3
  %s6 = scalar_select 0, %s5, %s3
  %s7 = sshll.u32 %s0, 4
  %s8 = int_to_ptr.vmem [resolvable:$true] %s7
  %10 = dma.vmem_to_smem %s8, 16, [#allocation5], [#allocation4]
  %11 = dma.done [#allocation4], 16
  %12 = sfence
  $region1: #{tpu_custom_call.1} parent=0
    #allocation6 [shape = 'u8[16384]{0}', space=vmem, size = 0x4000, scoped, tag = 'output window, operand 0, single buffered']
    #allocation7 [shape = 's32[1]{0}', space=sflag, size = 0x4, scoped, tag = 'scoped memory for tpu_custom_call.1']
    %13 = vsyncpa [#allocation7], 0
    %s14 = smul.u32 0, 32
    %s15 = sld [smem:[#allocation5 + %s14]]
    %s16 = scalar_lea.vmem %s1, %s15
    %p18 = scmp.lt.u32.totalorder 1, 8
    %p19 = pneg %p18
    // Predicated region
    $region2: #{tpu_custom_call.1} parent=1 // pred_check
      _
    $region3: #{tpu_custom_call.1} parent=1 // pred_check_branch
      %21 = sbr.rel (%p18) target = $region5
    $region4: #{tpu_custom_call.1} parent=1 // pred_region
      %s36 = sand.u32 1, 7
      %p37 = scmp.eq.s32.totalorder %s36, 0
      %p38 = pneg %p37
      // Predicated region
      $region17: #{tpu_custom_call.1} parent=4 // pred_check
        _
      $region18: #{tpu_custom_call.1} parent=4 // pred_check_branch
        %40 = sbr.rel (%p37) target = $region20
      $region19: #{tpu_custom_call.1} parent=4 // pred_region
        %s41 = sand.u32 1, 7
        %s42 = ssub.s32 1, %s41
        %s43 = scalar_lea.vmem %s16, %s42
        %s44 = ssub.s32 1, %s41
        %s45 = scalar_lea.vmem [#allocation2], %s44
        %s46 = sshllo.u32 0, %s41
        loop: start=0, step=1, limit=1
        $region21: #{tpu_custom_call.1} parent=19 // loop_pre_header
          _
        $region22: #{tpu_custom_call.1} parent=19 // loop_header
          %s48 = sphi 0, %s52
          %p49 = scmp.ge.s32.totalorder %s48, 1
          %s53 = sphi %s43, %s43
          %s54 = sphi %s45, %s45
        $region23: #{tpu_custom_call.1} parent=19 // loop_header_branch
          %51 = sbr.rel (%p49) target = $region27
        $region24: #{tpu_custom_call.1} parent=19 // loop_body
          %v55 = vld [vmem:[%s53] sm:%s46]
          %56 = vst [vmem:[%s54] sm:%s46] %v55
        $region25: #{tpu_custom_call.1} parent=19 // loop_footer
          %s52 = sadd.s32 1, %s48
        $region26: #{tpu_custom_call.1} parent=19 // loop_footer_branch
          %47 = sbr.rel target = $region22
        $region27: #{tpu_custom_call.1} parent=19 // loop_exit
          _
      $region20: #{tpu_custom_call.1} parent=4 // pred_fallthru
        _
    $region5: #{tpu_custom_call.1} parent=1 // pred_fallthru
      _
    // Predicated region
    $region6: #{tpu_custom_call.1} parent=1 // pred_check
      %p22 = pneg %p18
    $region7: #{tpu_custom_call.1} parent=1 // pred_check_branch
      %24 = sbr.rel (%p22) target = $region9
    $region8: #{tpu_custom_call.1} parent=1 // pred_region
      %s25 = sshllo.u32 0, 1
      loop: start=0, step=1, limit=1
      $region10: #{tpu_custom_call.1} parent=8 // loop_pre_header
        _
      $region11: #{tpu_custom_call.1} parent=8 // loop_header
        %s27 = sphi 0, %s31
        %p28 = scmp.ge.s32.totalorder %s27, 1
        %s32 = sphi %s16, %s16
        %s33 = sphi [#allocation2], [#allocation2]
      $region12: #{tpu_custom_call.1} parent=8 // loop_header_branch
        %30 = sbr.rel (%p28) target = $region16
      $region13: #{tpu_custom_call.1} parent=8 // loop_body
        %v34 = vld [vmem:[%s32] sm:%s25]
        %35 = vst [vmem:[%s33] sm:%s25] %v34
      $region14: #{tpu_custom_call.1} parent=8 // loop_footer
        %s31 = sadd.s32 1, %s27
      $region15: #{tpu_custom_call.1} parent=8 // loop_footer_branch
        %26 = sbr.rel target = $region11
      $region16: #{tpu_custom_call.1} parent=8 // loop_exit
        _
    $region9: #{tpu_custom_call.1} parent=1 // pred_fallthru
      _
    // Predicated region
    $region28: #{tpu_custom_call.1} parent=1 // pred_check
      _
    $region29: #{tpu_custom_call.1} parent=1 // pred_check_branch
      %59 = sbr.rel (0) target = $region31
    $region30: #{tpu_custom_call.1} parent=1 // pred_region
      %60 = vsyncadd [#allocation3], 16
    $region31: #{tpu_custom_call.1} parent=1 // pred_fallthru
      _
    %s61 = sadd.s32 %s14, 1
    %s62 = sld [smem:[#allocation5 + %s61]]
    %s63 = scalar_lea.vmem %s1, %s62
    %s64 = scalar_lea.vmem [#allocation2], 1
    %p66 = scmp.lt.u32.totalorder 1, 8
    %p67 = pneg %p66
    // Predicated region
    $region32: #{tpu_custom_call.1} parent=1 // pred_check
      _
    $region33: #{tpu_custom_call.1} parent=1 // pred_check_branch
      %69 = sbr.rel (%p66) target = $region35
    $region34: #{tpu_custom_call.1} parent=1 // pred_region
      %s84 = sand.u32 1, 7
      %p85 = scmp.eq.s32.totalorder %s84, 0
      %p86 = pneg %p85
      // Predicated region
      $region47: #{tpu_custom_call.1} parent=34 // pred_check
        _
      $region48: #{tpu_custom_call.1} parent=34 // pred_check_branch
        %88 = sbr.rel (%p85) target = $region50
      $region49: #{tpu_custom_call.1} parent=34 // pred_region
        %s89 = sand.u32 1, 7
        %s90 = ssub.s32 1, %s89
        %s91 = scalar_lea.vmem %s63, %s90
        %s92 = ssub.s32 1, %s89
        %s93 = scalar_lea.vmem %s64, %s92 [#allocation2]
        %s94 = sshllo.u32 0, %s89
        loop: start=0, step=1, limit=1
        $region51: #{tpu_custom_call.1} parent=49 // loop_pre_header
          _
        $region52: #{tpu_custom_call.1} parent=49 // loop_header
          %s96 = sphi 0, %s100
          %p97 = scmp.ge.s32.totalorder %s96, 1
          %s101 = sphi %s91, %s91
          %s102 = sphi %s93, %s93
        $region53: #{tpu_custom_call.1} parent=49 // loop_header_branch
          %99 = sbr.rel (%p97) target = $region57
        $region54: #{tpu_custom_call.1} parent=49 // loop_body
          %v103 = vld [vmem:[%s101] sm:%s94]
          %104 = vst [vmem:[%s102] sm:%s94] %v103
        $region55: #{tpu_custom_call.1} parent=49 // loop_footer
          %s100 = sadd.s32 1, %s96
        $region56: #{tpu_custom_call.1} parent=49 // loop_footer_branch
          %95 = sbr.rel target = $region52
        $region57: #{tpu_custom_call.1} parent=49 // loop_exit
          _
      $region50: #{tpu_custom_call.1} parent=34 // pred_fallthru
        _
    $region35: #{tpu_custom_call.1} parent=1 // pred_fallthru
      _
    // Predicated region
    $region36: #{tpu_custom_call.1} parent=1 // pred_check
      %p70 = pneg %p66
    $region37: #{tpu_custom_call.1} parent=1 // pred_check_branch
      %72 = sbr.rel (%p70) target = $region39
    $region38: #{tpu_custom_call.1} parent=1 // pred_region
      %s73 = sshllo.u32 0, 1
      loop: start=0, step=1, limit=1
      $region40: #{tpu_custom_call.1} parent=38 // loop_pre_header
        _
      $region41: #{tpu_custom_call.1} parent=38 // loop_header
        %s75 = sphi 0, %s79
        %p76 = scmp.ge.s32.totalorder %s75, 1
        %s80 = sphi %s63, %s63
        %s81 = sphi %s64, %s64
      $region42: #{tpu_custom_call.1} parent=38 // loop_header_branch
        %78 = sbr.rel (%p76) target = $region46
      $region43: #{tpu_custom_call.1} parent=38 // loop_body
        %v82 = vld [vmem:[%s80] sm:%s73]
        %83 = vst [vmem:[%s81] sm:%s73] %v82
      $region44: #{tpu_custom_call.1} parent=38 // loop_footer
        %s79 = sadd.s32 1, %s75
      $region45: #{tpu_custom_call.1} parent=38 // loop_footer_branch
        %74 = sbr.rel target = $region41
      $region46: #{tpu_custom_call.1} parent=38 // loop_exit
        _
    $region39: #{tpu_custom_call.1} parent=1 // pred_fallthru
      _
    // Predicated region
    $region58: #{tpu_custom_call.1} parent=1 // pred_check
      _
    $region59: #{tpu_custom_call.1} parent=1 // pred_check_branch
      %107 = sbr.rel (0) target = $region61
    $region60: #{tpu_custom_call.1} parent=1 // pred_region
      %108 = vsyncadd [#allocation3], 16
    $region61: #{tpu_custom_call.1} parent=1 // pred_fallthru
      _
    %s109 = sadd.s32 %s14, 2
    %s110 = sld [smem:[#allocation5 + %s109]]
    %s111 = scalar_lea.vmem %s1, %s110
    %s112 = scalar_lea.vmem [#allocation2], 2
    %p114 = scmp.lt.u32.totalorder 1, 8
    %p115 = pneg %p114
    // Predicated region
    $region62: #{tpu_custom_call.1} parent=1 // pred_check
      _
    $region63: #{tpu_custom_call.1} parent=1 // pred_check_branch
      %117 = sbr.rel (%p114) target = $region65
    $region64: #{tpu_custom_call.1} parent=1 // pred_region
      %s132 = sand.u32 1, 7
      %p133 = scmp.eq.s32.totalorder %s132, 0
      %p134 = pneg %p133
      // Predicated region
      $region77: #{tpu_custom_call.1} parent=64 // pred_check
        _
      $region78: #{tpu_custom_call.1} parent=64 // pred_check_branch
        %136 = sbr.rel (%p133) target = $region80
      $region79: #{tpu_custom_call.1} parent=64 // pred_region
        %s137 = sand.u32 1, 7
        %s138 = ssub.s32 1, %s137
        %s139 = scalar_lea.vmem %s111, %s138
        %s140 = ssub.s32 1, %s137
        %s141 = scalar_lea.vmem %s112, %s140 [#allocation2]
        %s142 = sshllo.u32 0, %s137
        loop: start=0, step=1, limit=1
        $region81: #{tpu_custom_call.1} parent=79 // loop_pre_header
          _
        $region82: #{tpu_custom_call.1} parent=79 // loop_header
          %s144 = sphi 0, %s148
          %p145 = scmp.ge.s32.totalorder %s144, 1
          %s149 = sphi %s139, %s139
          %s150 = sphi %s141, %s141
        $region83: #{tpu_custom_call.1} parent=79 // loop_header_branch
          %147 = sbr.rel (%p145) target = $region87
        $region84: #{tpu_custom_call.1} parent=79 // loop_body
          %v151 = vld [vmem:[%s149] sm:%s142]
          %152 = vst [vmem:[%s150] sm:%s142] %v151
        $region85: #{tpu_custom_call.1} parent=79 // loop_footer
          %s148 = sadd.s32 1, %s144
        $region86: #{tpu_custom_call.1} parent=79 // loop_footer_branch
          %143 = sbr.rel target = $region82
        $region87: #{tpu_custom_call.1} parent=79 // loop_exit
          _
      $region80: #{tpu_custom_call.1} parent=64 // pred_fallthru
        _
    $region65: #{tpu_custom_call.1} parent=1 // pred_fallthru
      _
    // Predicated region
    $region66: #{tpu_custom_call.1} parent=1 // pred_check
      %p118 = pneg %p114
    $region67: #{tpu_custom_call.1} parent=1 // pred_check_branch
      %120 = sbr.rel (%p118) target = $region69
    $region68: #{tpu_custom_call.1} parent=1 // pred_region
      %s121 = sshllo.u32 0, 1
      loop: start=0, step=1, limit=1
      $region70: #{tpu_custom_call.1} parent=68 // loop_pre_header
        _
      $region71: #{tpu_custom_call.1} parent=68 // loop_header
        %s123 = sphi 0, %s127
        %p124 = scmp.ge.s32.totalorder %s123, 1
        %s128 = sphi %s111, %s111
        %s129 = sphi %s112, %s112
      $region72: #{tpu_custom_call.1} parent=68 // loop_header_branch
        %126 = sbr.rel (%p124) target = $region76
      $region73: #{tpu_custom_call.1} parent=68 // loop_body
        %v130 = vld [vmem:[%s128] sm:%s121]
        %131 = vst [vmem:[%s129] sm:%s121] %v130
      $region74: #{tpu_custom_call.1} parent=68 // loop_footer
        %s127 = sadd.s32 1, %s123
      $region75: #{tpu_custom_call.1} parent=68 // loop_footer_branch
        %122 = sbr.rel target = $region71
      $region76: #{tpu_custom_call.1} parent=68 // loop_exit
        _
    $region69: #{tpu_custom_call.1} parent=1 // pred_fallthru
      _
    // Predicated region
    $region88: #{tpu_custom_call.1} parent=1 // pred_check
      _
    $region89: #{tpu_custom_call.1} parent=1 // pred_check_branch
      %155 = sbr.rel (0) target = $region91
    $region90: #{tpu_custom_call.1} parent=1 // pred_region
      %156 = vsyncadd [#allocation3], 16
    $region91: #{tpu_custom_call.1} parent=1 // pred_fallthru
      _
    %s157 = sadd.s32 %s14, 3
    %s158 = sld [smem:[#allocation5 + %s157]]
    %s159 = scalar_lea.vmem %s1, %s158
    %s160 = scalar_lea.vmem [#allocation2], 3
    %p162 = scmp.lt.u32.totalorder 1, 8
    %p163 = pneg %p162
    // Predicated region
    $region92: #{tpu_custom_call.1} parent=1 // pred_check
      _
    $region93: #{tpu_custom_call.1} parent=1 // pred_check_branch
      %165 = sbr.rel (%p162) target = $region95
    $region94: #{tpu_custom_call.1} parent=1 // pred_region
      %s180 = sand.u32 1, 7
      %p181 = scmp.eq.s32.totalorder %s180, 0
      %p182 = pneg %p181
      // Predicated region
      $region107: #{tpu_custom_call.1} parent=94 // pred_check
        _
      $region108: #{tpu_custom_call.1} parent=94 // pred_check_branch
        %184 = sbr.rel (%p181) target = $region110
      $region109: #{tpu_custom_call.1} parent=94 // pred_region
        %s185 = sand.u32 1, 7
        %s186 = ssub.s32 1, %s185
        %s187 = scalar_lea.vmem %s159, %s186
        %s188 = ssub.s32 1, %s185
        %s189 = scalar_lea.vmem %s160, %s188 [#allocation2]
        %s190 = sshllo.u32 0, %s185
        loop: start=0, step=1, limit=1
        $region111: #{tpu_custom_call.1} parent=109 // loop_pre_header
          _
        $region112: #{tpu_custom_call.1} parent=109 // loop_header
          %s192 = sphi 0, %s196
          %p193 = scmp.ge.s32.totalorder %s192, 1
          %s197 = sphi %s187, %s187
          %s198 = sphi %s189, %s189
        $region113: #{tpu_custom_call.1} parent=109 // loop_header_branch
          %195 = sbr.rel (%p193) target = $region117
        $region114: #{tpu_custom_call.1} parent=109 // loop_body
          %v199 = vld [vmem:[%s197] sm:%s190]
          %200 = vst [vmem:[%s198] sm:%s190] %v199
        $region115: #{tpu_custom_call.1} parent=109 // loop_footer
          %s196 = sadd.s32 1, %s192
        $region116: #{tpu_custom_call.1} parent=109 // loop_footer_branch
          %191 = sbr.rel target = $region112
        $region117: #{tpu_custom_call.1} parent=109 // loop_exit
          _
      $region110: #{tpu_custom_call.1} parent=94 // pred_fallthru
        _
    $region95: #{tpu_custom_call.1} parent=1 // pred_fallthru
      _
    // Predicated region
    $region96: #{tpu_custom_call.1} parent=1 // pred_check
      %p166 = pneg %p162
    $region97: #{tpu_custom_call.1} parent=1 // pred_check_branch
      %168 = sbr.rel (%p166) target = $region99
    $region98: #{tpu_custom_call.1} parent=1 // pred_region
      %s169 = sshllo.u32 0, 1
      loop: start=0, step=1, limit=1
      $region100: #{tpu_custom_call.1} parent=98 // loop_pre_header
        _
      $region101: #{tpu_custom_call.1} parent=98 // loop_header
        %s171 = sphi 0, %s175
        %p172 = scmp.ge.s32.totalorder %s171, 1
        %s176 = sphi %s159, %s159
        %s177 = sphi %s160, %s160
      $region102: #{tpu_custom_call.1} parent=98 // loop_header_branch
        %174 = sbr.rel (%p172) target = $region106
      $region103: #{tpu_custom_call.1} parent=98 // loop_body
        %v178 = vld [vmem:[%s176] sm:%s169]
        %179 = vst [vmem:[%s177] sm:%s169] %v178
      $region104: #{tpu_custom_call.1} parent=98 // loop_footer
        %s175 = sadd.s32 1, %s171
      $region105: #{tpu_custom_call.1} parent=98 // loop_footer_branch
        %170 = sbr.rel target = $region101
      $region106: #{tpu_custom_call.1} parent=98 // loop_exit
        _
    $region99: #{tpu_custom_call.1} parent=1 // pred_fallthru
      _
    // Predicated region
    $region118: #{tpu_custom_call.1} parent=1 // pred_check
      _
    $region119: #{tpu_custom_call.1} parent=1 // pred_check_branch
      %203 = sbr.rel (0) target = $region121
    $region120: #{tpu_custom_call.1} parent=1 // pred_region
      %204 = vsyncadd [#allocation3], 16
    $region121: #{tpu_custom_call.1} parent=1 // pred_fallthru
      _
    %s205 = sadd.s32 %s14, 4
    %s206 = sld [smem:[#allocation5 + %s205]]
    %s207 = scalar_lea.vmem %s1, %s206
    %s208 = scalar_lea.vmem [#allocation2], 4
    %p210 = scmp.lt.u32.totalorder 1, 8
    %p211 = pneg %p210
    // Predicated region
    $region122: #{tpu_custom_call.1} parent=1 // pred_check
      _
    $region123: #{tpu_custom_call.1} parent=1 // pred_check_branch
      %213 = sbr.rel (%p210) target = $region125
    $region124: #{tpu_custom_call.1} parent=1 // pred_region
      %s228 = sand.u32 1, 7
      %p229 = scmp.eq.s32.totalorder %s228, 0
      %p230 = pneg %p229
      // Predicated region
      $region137: #{tpu_custom_call.1} parent=124 // pred_check
        _
      $region138: #{tpu_custom_call.1} parent=124 // pred_check_branch
        %232 = sbr.rel (%p229) target = $region140
      $region139: #{tpu_custom_call.1} parent=124 // pred_region
        %s233 = sand.u32 1, 7
        %s234 = ssub.s32 1, %s233
        %s235 = scalar_lea.vmem %s207, %s234
        %s236 = ssub.s32 1, %s233
        %s237 = scalar_lea.vmem %s208, %s236 [#allocation2]
        %s238 = sshllo.u32 0, %s233
        loop: start=0, step=1, limit=1
        $region141: #{tpu_custom_call.1} parent=139 // loop_pre_header
          _
        $region142: #{tpu_custom_call.1} parent=139 // loop_header
          %s240 = sphi 0, %s244
          %p241 = scmp.ge.s32.totalorder %s240, 1
          %s245 = sphi %s235, %s235
          %s246 = sphi %s237, %s237
        $region143: #{tpu_custom_call.1} parent=139 // loop_header_branch
          %243 = sbr.rel (%p241) target = $region147
        $region144: #{tpu_custom_call.1} parent=139 // loop_body
          %v247 = vld [vmem:[%s245] sm:%s238]
          %248 = vst [vmem:[%s246] sm:%s238] %v247
        $region145: #{tpu_custom_call.1} parent=139 // loop_footer
          %s244 = sadd.s32 1, %s240
        $region146: #{tpu_custom_call.1} parent=139 // loop_footer_branch
          %239 = sbr.rel target = $region142
        $region147: #{tpu_custom_call.1} parent=139 // loop_exit
          _
      $region140: #{tpu_custom_call.1} parent=124 // pred_fallthru
        _
    $region125: #{tpu_custom_call.1} parent=1 // pred_fallthru
      _
    // Predicated region
    $region126: #{tpu_custom_call.1} parent=1 // pred_check
      %p214 = pneg %p210
    $region127: #{tpu_custom_call.1} parent=1 // pred_check_branch
      %216 = sbr.rel (%p214) target = $region129
    $region128: #{tpu_custom_call.1} parent=1 // pred_region
      %s217 = sshllo.u32 0, 1
      loop: start=0, step=1, limit=1
      $region130: #{tpu_custom_call.1} parent=128 // loop_pre_header
        _
      $region131: #{tpu_custom_call.1} parent=128 // loop_header
        %s219 = sphi 0, %s223
        %p220 = scmp.ge.s32.totalorder %s219, 1
        %s224 = sphi %s207, %s207
        %s225 = sphi %s208, %s208
      $region132: #{tpu_custom_call.1} parent=128 // loop_header_branch
        %222 = sbr.rel (%p220) target = $region136
      $region133: #{tpu_custom_call.1} parent=128 // loop_body
        %v226 = vld [vmem:[%s224] sm:%s217]
        %227 = vst [vmem:[%s225] sm:%s217] %v226
      $region134: #{tpu_custom_call.1} parent=128 // loop_footer
        %s223 = sadd.s32 1, %s219
      $region135: #{tpu_custom_call.1} parent=128 // loop_footer_branch
        %218 = sbr.rel target = $region131
      $region136: #{tpu_custom_call.1} parent=128 // loop_exit
        _
    $region129: #{tpu_custom_call.1} parent=1 // pred_fallthru
      _
    // Predicated region
    $region148: #{tpu_custom_call.1} parent=1 // pred_check
      _
    $region149: #{tpu_custom_call.1} parent=1 // pred_check_branch
      %251 = sbr.rel (0) target = $region151
    $region150: #{tpu_custom_call.1} parent=1 // pred_region
      %252 = vsyncadd [#allocation3], 16
    $region151: #{tpu_custom_call.1} parent=1 // pred_fallthru
      _
    %s253 = sadd.s32 %s14, 5
    %s254 = sld [smem:[#allocation5 + %s253]]
    %s255 = scalar_lea.vmem %s1, %s254
    %s256 = scalar_lea.vmem [#allocation2], 5
    %p258 = scmp.lt.u32.totalorder 1, 8
    %p259 = pneg %p258
    // Predicated region
    $region152: #{tpu_custom_call.1} parent=1 // pred_check
      _
    $region153: #{tpu_custom_call.1} parent=1 // pred_check_branch
      %261 = sbr.rel (%p258) target = $region155
    $region154: #{tpu_custom_call.1} parent=1 // pred_region
      %s276 = sand.u32 1, 7
      %p277 = scmp.eq.s32.totalorder %s276, 0
      %p278 = pneg %p277
      // Predicated region
      $region167: #{tpu_custom_call.1} parent=154 // pred_check
        _
      $region168: #{tpu_custom_call.1} parent=154 // pred_check_branch
        %280 = sbr.rel (%p277) target = $region170
      $region169: #{tpu_custom_call.1} parent=154 // pred_region
        %s281 = sand.u32 1, 7
        %s282 = ssub.s32 1, %s281
        %s283 = scalar_lea.vmem %s255, %s282
        %s284 = ssub.s32 1, %s281
        %s285 = scalar_lea.vmem %s256, %s284 [#allocation2]
        %s286 = sshllo.u32 0, %s281
        loop: start=0, step=1, limit=1
        $region171: #{tpu_custom_call.1} parent=169 // loop_pre_header
          _
        $region172: #{tpu_custom_call.1} parent=169 // loop_header
          %s288 = sphi 0, %s292
          %p289 = scmp.ge.s32.totalorder %s288, 1
          %s293 = sphi %s283, %s283
          %s294 = sphi %s285, %s285
        $region173: #{tpu_custom_call.1} parent=169 // loop_header_branch
          %291 = sbr.rel (%p289) target = $region177
        $region174: #{tpu_custom_call.1} parent=169 // loop_body
          %v295 = vld [vmem:[%s293] sm:%s286]
          %296 = vst [vmem:[%s294] sm:%s286] %v295
        $region175: #{tpu_custom_call.1} parent=169 // loop_footer
          %s292 = sadd.s32 1, %s288
        $region176: #{tpu_custom_call.1} parent=169 // loop_footer_branch
          %287 = sbr.rel target = $region172
        $region177: #{tpu_custom_call.1} parent=169 // loop_exit
          _
      $region170: #{tpu_custom_call.1} parent=154 // pred_fallthru
        _
    $region155: #{tpu_custom_call.1} parent=1 // pred_fallthru
      _
    // Predicated region
    $region156: #{tpu_custom_call.1} parent=1 // pred_check
      %p262 = pneg %p258
    $region157: #{tpu_custom_call.1} parent=1 // pred_check_branch
      %264 = sbr.rel (%p262) target = $region159
    $region158: #{tpu_custom_call.1} parent=1 // pred_region
      %s265 = sshllo.u32 0, 1
      loop: start=0, step=1, limit=1
      $region160: #{tpu_custom_call.1} parent=158 // loop_pre_header
        _
      $region161: #{tpu_custom_call.1} parent=158 // loop_header
        %s267 = sphi 0, %s271
        %p268 = scmp.ge.s32.totalorder %s267, 1
        %s272 = sphi %s255, %s255
        %s273 = sphi %s256, %s256
      $region162: #{tpu_custom_call.1} parent=158 // loop_header_branch
        %270 = sbr.rel (%p268) target = $region166
      $region163: #{tpu_custom_call.1} parent=158 // loop_body
        %v274 = vld [vmem:[%s272] sm:%s265]
        %275 = vst [vmem:[%s273] sm:%s265] %v274
      $region164: #{tpu_custom_call.1} parent=158 // loop_footer
        %s271 = sadd.s32 1, %s267
      $region165: #{tpu_custom_call.1} parent=158 // loop_footer_branch
        %266 = sbr.rel target = $region161
      $region166: #{tpu_custom_call.1} parent=158 // loop_exit
        _
    $region159: #{tpu_custom_call.1} parent=1 // pred_fallthru
      _
    // Predicated region
    $region178: #{tpu_custom_call.1} parent=1 // pred_check
      _
    $region179: #{tpu_custom_call.1} parent=1 // pred_check_branch
      %299 = sbr.rel (0) target = $region181
    $region180: #{tpu_custom_call.1} parent=1 // pred_region
      %300 = vsyncadd [#allocation3], 16
    $region181: #{tpu_custom_call.1} parent=1 // pred_fallthru
      _
    %s301 = sadd.s32 %s14, 6
    %s302 = sld [smem:[#allocation5 + %s301]]
    %s303 = scalar_lea.vmem %s1, %s302
    %s304 = scalar_lea.vmem [#allocation2], 6
    %p306 = scmp.lt.u32.totalorder 1, 8
    %p307 = pneg %p306
    // Predicated region
    $region182: #{tpu_custom_call.1} parent=1 // pred_check
      _
    $region183: #{tpu_custom_call.1} parent=1 // pred_check_branch
      %309 = sbr.rel (%p306) target = $region185
    $region184: #{tpu_custom_call.1} parent=1 // pred_region
      %s324 = sand.u32 1, 7
      %p325 = scmp.eq.s32.totalorder %s324, 0
      %p326 = pneg %p325
      // Predicated region
      $region197: #{tpu_custom_call.1} parent=184 // pred_check
        _
      $region198: #{tpu_custom_call.1} parent=184 // pred_check_branch
        %328 = sbr.rel (%p325) target = $region200
      $region199: #{tpu_custom_call.1} parent=184 // pred_region
        %s329 = sand.u32 1, 7
        %s330 = ssub.s32 1, %s329
        %s331 = scalar_lea.vmem %s303, %s330
        %s332 = ssub.s32 1, %s329
        %s333 = scalar_lea.vmem %s304, %s332 [#allocation2]
        %s334 = sshllo.u32 0, %s329
        loop: start=0, step=1, limit=1
        $region201: #{tpu_custom_call.1} parent=199 // loop_pre_header
          _
        $region202: #{tpu_custom_call.1} parent=199 // loop_header
          %s336 = sphi 0, %s340
          %p337 = scmp.ge.s32.totalorder %s336, 1
          %s341 = sphi %s331, %s331
          %s342 = sphi %s333, %s333
        $region203: #{tpu_custom_call.1} parent=199 // loop_header_branch
          %339 = sbr.rel (%p337) target = $region207
        $region204: #{tpu_custom_call.1} parent=199 // loop_body
          %v343 = vld [vmem:[%s341] sm:%s334]
          %344 = vst [vmem:[%s342] sm:%s334] %v343
        $region205: #{tpu_custom_call.1} parent=199 // loop_footer
          %s340 = sadd.s32 1, %s336
        $region206: #{tpu_custom_call.1} parent=199 // loop_footer_branch
          %335 = sbr.rel target = $region202
        $region207: #{tpu_custom_call.1} parent=199 // loop_exit
          _
      $region200: #{tpu_custom_call.1} parent=184 // pred_fallthru
        _
    $region185: #{tpu_custom_call.1} parent=1 // pred_fallthru
      _
    // Predicated region
    $region186: #{tpu_custom_call.1} parent=1 // pred_check
      %p310 = pneg %p306
    $region187: #{tpu_custom_call.1} parent=1 // pred_check_branch
      %312 = sbr.rel (%p310) target = $region189
    $region188: #{tpu_custom_call.1} parent=1 // pred_region
      %s313 = sshllo.u32 0, 1
      loop: start=0, step=1, limit=1
      $region190: #{tpu_custom_call.1} parent=188 // loop_pre_header
        _
      $region191: #{tpu_custom_call.1} parent=188 // loop_header
        %s315 = sphi 0, %s319
        %p316 = scmp.ge.s32.totalorder %s315, 1
        %s320 = sphi %s303, %s303
        %s321 = sphi %s304, %s304
      $region192: #{tpu_custom_call.1} parent=188 // loop_header_branch
        %318 = sbr.rel (%p316) target = $region196
      $region193: #{tpu_custom_call.1} parent=188 // loop_body
        %v322 = vld [vmem:[%s320] sm:%s313]
        %323 = vst [vmem:[%s321] sm:%s313] %v322
      $region194: #{tpu_custom_call.1} parent=188 // loop_footer
        %s319 = sadd.s32 1, %s315
      $region195: #{tpu_custom_call.1} parent=188 // loop_footer_branch
        %314 = sbr.rel target = $region191
      $region196: #{tpu_custom_call.1} parent=188 // loop_exit
        _
    $region189: #{tpu_custom_call.1} parent=1 // pred_fallthru
      _
    // Predicated region
    $region208: #{tpu_custom_call.1} parent=1 // pred_check
      _
    $region209: #{tpu_custom_call.1} parent=1 // pred_check_branch
      %347 = sbr.rel (0) target = $region211
    $region210: #{tpu_custom_call.1} parent=1 // pred_region
      %348 = vsyncadd [#allocation3], 16
    $region211: #{tpu_custom_call.1} parent=1 // pred_fallthru
      _
    %s349 = sadd.s32 %s14, 7
    %s350 = sld [smem:[#allocation5 + %s349]]
    %s351 = scalar_lea.vmem %s1, %s350
    %s352 = scalar_lea.vmem [#allocation2], 7
    %p354 = scmp.lt.u32.totalorder 1, 8
    %p355 = pneg %p354
    // Predicated region
    $region212: #{tpu_custom_call.1} parent=1 // pred_check
      _
    $region213: #{tpu_custom_call.1} parent=1 // pred_check_branch
      %357 = sbr.rel (%p354) target = $region215
    $region214: #{tpu_custom_call.1} parent=1 // pred_region
      %s372 = sand.u32 1, 7
      %p373 = scmp.eq.s32.totalorder %s372, 0
      %p374 = pneg %p373
      // Predicated region
      $region227: #{tpu_custom_call.1} parent=214 // pred_check
        _
      $region228: #{tpu_custom_call.1} parent=214 // pred_check_branch
        %376 = sbr.rel (%p373) target = $region230
      $region229: #{tpu_custom_call.1} parent=214 // pred_region
        %s377 = sand.u32 1, 7
        %s378 = ssub.s32 1, %s377
        %s379 = scalar_lea.vmem %s351, %s378
        %s380 = ssub.s32 1, %s377
        %s381 = scalar_lea.vmem %s352, %s380 [#allocation2]
        %s382 = sshllo.u32 0, %s377
        loop: start=0, step=1, limit=1
        $region231: #{tpu_custom_call.1} parent=229 // loop_pre_header
          _
        $region232: #{tpu_custom_call.1} parent=229 // loop_header
          %s384 = sphi 0, %s388
          %p385 = scmp.ge.s32.totalorder %s384, 1
          %s389 = sphi %s379, %s379
          %s390 = sphi %s381, %s381
        $region233: #{tpu_custom_call.1} parent=229 // loop_header_branch
          %387 = sbr.rel (%p385) target = $region237
        $region234: #{tpu_custom_call.1} parent=229 // loop_body
          %v391 = vld [vmem:[%s389] sm:%s382]
          %392 = vst [vmem:[%s390] sm:%s382] %v391
        $region235: #{tpu_custom_call.1} parent=229 // loop_footer
          %s388 = sadd.s32 1, %s384
        $region236: #{tpu_custom_call.1} parent=229 // loop_footer_branch
          %383 = sbr.rel target = $region232
        $region237: #{tpu_custom_call.1} parent=229 // loop_exit
          _
      $region230: #{tpu_custom_call.1} parent=214 // pred_fallthru
        _
    $region215: #{tpu_custom_call.1} parent=1 // pred_fallthru
      _
    // Predicated region
    $region216: #{tpu_custom_call.1} parent=1 // pred_check
      %p358 = pneg %p354
    $region217: #{tpu_custom_call.1} parent=1 // pred_check_branch
      %360 = sbr.rel (%p358) target = $region219
    $region218: #{tpu_custom_call.1} parent=1 // pred_region
      %s361 = sshllo.u32 0, 1
      loop: start=0, step=1, limit=1
      $region220: #{tpu_custom_call.1} parent=218 // loop_pre_header
        _
      $region221: #{tpu_custom_call.1} parent=218 // loop_header
        %s363 = sphi 0, %s367
        %p364 = scmp.ge.s32.totalorder %s363, 1
        %s368 = sphi %s351, %s351
        %s369 = sphi %s352, %s352
      $region222: #{tpu_custom_call.1} parent=218 // loop_header_branch
        %366 = sbr.rel (%p364) target = $region226
      $region223: #{tpu_custom_call.1} parent=218 // loop_body
        %v370 = vld [vmem:[%s368] sm:%s361]
        %371 = vst [vmem:[%s369] sm:%s361] %v370
      $region224: #{tpu_custom_call.1} parent=218 // loop_footer
        %s367 = sadd.s32 1, %s363
      $region225: #{tpu_custom_call.1} parent=218 // loop_footer_branch
        %362 = sbr.rel target = $region221
      $region226: #{tpu_custom_call.1} parent=218 // loop_exit
        _
    $region219: #{tpu_custom_call.1} parent=1 // pred_fallthru
      _
    // Predicated region
    $region238: #{tpu_custom_call.1} parent=1 // pred_check
      _
    $region239: #{tpu_custom_call.1} parent=1 // pred_check_branch
      %395 = sbr.rel (0) target = $region241
    $region240: #{tpu_custom_call.1} parent=1 // pred_region
      %396 = vsyncadd [#allocation3], 16
    $region241: #{tpu_custom_call.1} parent=1 // pred_fallthru
      _
    %s397 = sadd.s32 %s14, 8
    %s398 = sld [smem:[#allocation5 + %s397]]
    %s399 = scalar_lea.vmem %s1, %s398
    %s400 = scalar_lea.vmem [#allocation2], 8
    %p402 = scmp.lt.u32.totalorder 1, 8
    %p403 = pneg %p402
    // Predicated region
    $region242: #{tpu_custom_call.1} parent=1 // pred_check
      _
    $region243: #{tpu_custom_call.1} parent=1 // pred_check_branch
      %405 = sbr.rel (%p402) target = $region245
    $region244: #{tpu_custom_call.1} parent=1 // pred_region
      %s420 = sand.u32 1, 7
      %p421 = scmp.eq.s32.totalorder %s420, 0
      %p422 = pneg %p421
      // Predicated region
      $region257: #{tpu_custom_call.1} parent=244 // pred_check
        _
      $region258: #{tpu_custom_call.1} parent=244 // pred_check_branch
        %424 = sbr.rel (%p421) target = $region260
      $region259: #{tpu_custom_call.1} parent=244 // pred_region
        %s425 = sand.u32 1, 7
        %s426 = ssub.s32 1, %s425
        %s427 = scalar_lea.vmem %s399, %s426
        %s428 = ssub.s32 1, %s425
        %s429 = scalar_lea.vmem %s400, %s428 [#allocation2]
        %s430 = sshllo.u32 0, %s425
        loop: start=0, step=1, limit=1
        $region261: #{tpu_custom_call.1} parent=259 // loop_pre_header
          _
        $region262: #{tpu_custom_call.1} parent=259 // loop_header
          %s432 = sphi 0, %s436
          %p433 = scmp.ge.s32.totalorder %s432, 1
          %s437 = sphi %s427, %s427
          %s438 = sphi %s429, %s429
        $region263: #{tpu_custom_call.1} parent=259 // loop_header_branch
          %435 = sbr.rel (%p433) target = $region267
        $region264: #{tpu_custom_call.1} parent=259 // loop_body
          %v439 = vld [vmem:[%s437] sm:%s430]
          %440 = vst [vmem:[%s438] sm:%s430] %v439
        $region265: #{tpu_custom_call.1} parent=259 // loop_footer
          %s436 = sadd.s32 1, %s432
        $region266: #{tpu_custom_call.1} parent=259 // loop_footer_branch
          %431 = sbr.rel target = $region262
        $region267: #{tpu_custom_call.1} parent=259 // loop_exit
          _
      $region260: #{tpu_custom_call.1} parent=244 // pred_fallthru
        _
    $region245: #{tpu_custom_call.1} parent=1 // pred_fallthru
      _
    // Predicated region
    $region246: #{tpu_custom_call.1} parent=1 // pred_check
      %p406 = pneg %p402
    $region247: #{tpu_custom_call.1} parent=1 // pred_check_branch
      %408 = sbr.rel (%p406) target = $region249
    $region248: #{tpu_custom_call.1} parent=1 // pred_region
      %s409 = sshllo.u32 0, 1
      loop: start=0, step=1, limit=1
      $region250: #{tpu_custom_call.1} parent=248 // loop_pre_header
        _
      $region251: #{tpu_custom_call.1} parent=248 // loop_header
        %s411 = sphi 0, %s415
        %p412 = scmp.ge.s32.totalorder %s411, 1
        %s416 = sphi %s399, %s399
        %s417 = sphi %s400, %s400
      $region252: #{tpu_custom_call.1} parent=248 // loop_header_branch
        %414 = sbr.rel (%p412) target = $region256
      $region253: #{tpu_custom_call.1} parent=248 // loop_body
        %v418 = vld [vmem:[%s416] sm:%s409]
        %419 = vst [vmem:[%s417] sm:%s409] %v418
      $region254: #{tpu_custom_call.1} parent=248 // loop_footer
        %s415 = sadd.s32 1, %s411
      $region255: #{tpu_custom_call.1} parent=248 // loop_footer_branch
        %410 = sbr.rel target = $region251
      $region256: #{tpu_custom_call.1} parent=248 // loop_exit
        _
    $region249: #{tpu_custom_call.1} parent=1 // pred_fallthru
      _
    // Predicated region
    $region268: #{tpu_custom_call.1} parent=1 // pred_check
      _
    $region269: #{tpu_custom_call.1} parent=1 // pred_check_branch
      %443 = sbr.rel (0) target = $region271
    $region270: #{tpu_custom_call.1} parent=1 // pred_region
      %444 = vsyncadd [#allocation3], 16
    $region271: #{tpu_custom_call.1} parent=1 // pred_fallthru
      _
    %s445 = sadd.s32 %s14, 9
    %s446 = sld [smem:[#allocation5 + %s445]]
    %s447 = scalar_lea.vmem %s1, %s446
    %s448 = scalar_lea.vmem [#allocation2], 9
    %p450 = scmp.lt.u32.totalorder 1, 8
    %p451 = pneg %p450
    // Predicated region
    $region272: #{tpu_custom_call.1} parent=1 // pred_check
      _
    $region273: #{tpu_custom_call.1} parent=1 // pred_check_branch
      %453 = sbr.rel (%p450) target = $region275
    $region274: #{tpu_custom_call.1} parent=1 // pred_region
      %s468 = sand.u32 1, 7
      %p469 = scmp.eq.s32.totalorder %s468, 0
      %p470 = pneg %p469
      // Predicated region
      $region287: #{tpu_custom_call.1} parent=274 // pred_check
        _
      $region288: #{tpu_custom_call.1} parent=274 // pred_check_branch
        %472 = sbr.rel (%p469) target = $region290
      $region289: #{tpu_custom_call.1} parent=274 // pred_region
        %s473 = sand.u32 1, 7
        %s474 = ssub.s32 1, %s473
        %s475 = scalar_lea.vmem %s447, %s474
        %s476 = ssub.s32 1, %s473
        %s477 = scalar_lea.vmem %s448, %s476 [#allocation2]
        %s478 = sshllo.u32 0, %s473
        loop: start=0, step=1, limit=1
        $region291: #{tpu_custom_call.1} parent=289 // loop_pre_header
          _
        $region292: #{tpu_custom_call.1} parent=289 // loop_header
          %s480 = sphi 0, %s484
          %p481 = scmp.ge.s32.totalorder %s480, 1
          %s485 = sphi %s475, %s475
          %s486 = sphi %s477, %s477
        $region293: #{tpu_custom_call.1} parent=289 // loop_header_branch
          %483 = sbr.rel (%p481) target = $region297
        $region294: #{tpu_custom_call.1} parent=289 // loop_body
          %v487 = vld [vmem:[%s485] sm:%s478]
          %488 = vst [vmem:[%s486] sm:%s478] %v487
        $region295: #{tpu_custom_call.1} parent=289 // loop_footer
          %s484 = sadd.s32 1, %s480
        $region296: #{tpu_custom_call.1} parent=289 // loop_footer_branch
          %479 = sbr.rel target = $region292
        $region297: #{tpu_custom_call.1} parent=289 // loop_exit
          _
      $region290: #{tpu_custom_call.1} parent=274 // pred_fallthru
        _
    $region275: #{tpu_custom_call.1} parent=1 // pred_fallthru
      _
    // Predicated region
    $region276: #{tpu_custom_call.1} parent=1 // pred_check
      %p454 = pneg %p450
    $region277: #{tpu_custom_call.1} parent=1 // pred_check_branch
      %456 = sbr.rel (%p454) target = $region279
    $region278: #{tpu_custom_call.1} parent=1 // pred_region
      %s457 = sshllo.u32 0, 1
      loop: start=0, step=1, limit=1
      $region280: #{tpu_custom_call.1} parent=278 // loop_pre_header
        _
      $region281: #{tpu_custom_call.1} parent=278 // loop_header
        %s459 = sphi 0, %s463
        %p460 = scmp.ge.s32.totalorder %s459, 1
        %s464 = sphi %s447, %s447
        %s465 = sphi %s448, %s448
      $region282: #{tpu_custom_call.1} parent=278 // loop_header_branch
        %462 = sbr.rel (%p460) target = $region286
      $region283: #{tpu_custom_call.1} parent=278 // loop_body
        %v466 = vld [vmem:[%s464] sm:%s457]
        %467 = vst [vmem:[%s465] sm:%s457] %v466
      $region284: #{tpu_custom_call.1} parent=278 // loop_footer
        %s463 = sadd.s32 1, %s459
      $region285: #{tpu_custom_call.1} parent=278 // loop_footer_branch
        %458 = sbr.rel target = $region281
      $region286: #{tpu_custom_call.1} parent=278 // loop_exit
        _
    $region279: #{tpu_custom_call.1} parent=1 // pred_fallthru
      _
    // Predicated region
    $region298: #{tpu_custom_call.1} parent=1 // pred_check
      _
    $region299: #{tpu_custom_call.1} parent=1 // pred_check_branch
      %491 = sbr.rel (0) target = $region301
    $region300: #{tpu_custom_call.1} parent=1 // pred_region
      %492 = vsyncadd [#allocation3], 16
    $region301: #{tpu_custom_call.1} parent=1 // pred_fallthru
      _
    %s493 = sadd.s32 %s14, 10
    %s494 = sld [smem:[#allocation5 + %s493]]
    %s495 = scalar_lea.vmem %s1, %s494
    %s496 = scalar_lea.vmem [#allocation2], 10
    %p498 = scmp.lt.u32.totalorder 1, 8
    %p499 = pneg %p498
    // Predicated region
    $region302: #{tpu_custom_call.1} parent=1 // pred_check
      _
    $region303: #{tpu_custom_call.1} parent=1 // pred_check_branch
      %501 = sbr.rel (%p498) target = $region305
    $region304: #{tpu_custom_call.1} parent=1 // pred_region
      %s516 = sand.u32 1, 7
      %p517 = scmp.eq.s32.totalorder %s516, 0
      %p518 = pneg %p517
      // Predicated region
      $region317: #{tpu_custom_call.1} parent=304 // pred_check
        _
      $region318: #{tpu_custom_call.1} parent=304 // pred_check_branch
        %520 = sbr.rel (%p517) target = $region320
      $region319: #{tpu_custom_call.1} parent=304 // pred_region
        %s521 = sand.u32 1, 7
        %s522 = ssub.s32 1, %s521
        %s523 = scalar_lea.vmem %s495, %s522
        %s524 = ssub.s32 1, %s521
        %s525 = scalar_lea.vmem %s496, %s524 [#allocation2]
        %s526 = sshllo.u32 0, %s521
        loop: start=0, step=1, limit=1
        $region321: #{tpu_custom_call.1} parent=319 // loop_pre_header
          _
        $region322: #{tpu_custom_call.1} parent=319 // loop_header
          %s528 = sphi 0, %s532
          %p529 = scmp.ge.s32.totalorder %s528, 1
          %s533 = sphi %s523, %s523
          %s534 = sphi %s525, %s525
        $region323: #{tpu_custom_call.1} parent=319 // loop_header_branch
          %531 = sbr.rel (%p529) target = $region327
        $region324: #{tpu_custom_call.1} parent=319 // loop_body
          %v535 = vld [vmem:[%s533] sm:%s526]
          %536 = vst [vmem:[%s534] sm:%s526] %v535
        $region325: #{tpu_custom_call.1} parent=319 // loop_footer
          %s532 = sadd.s32 1, %s528
        $region326: #{tpu_custom_call.1} parent=319 // loop_footer_branch
          %527 = sbr.rel target = $region322
        $region327: #{tpu_custom_call.1} parent=319 // loop_exit
          _
      $region320: #{tpu_custom_call.1} parent=304 // pred_fallthru
        _
    $region305: #{tpu_custom_call.1} parent=1 // pred_fallthru
      _
    // Predicated region
    $region306: #{tpu_custom_call.1} parent=1 // pred_check
      %p502 = pneg %p498
    $region307: #{tpu_custom_call.1} parent=1 // pred_check_branch
      %504 = sbr.rel (%p502) target = $region309
    $region308: #{tpu_custom_call.1} parent=1 // pred_region
      %s505 = sshllo.u32 0, 1
      loop: start=0, step=1, limit=1
      $region310: #{tpu_custom_call.1} parent=308 // loop_pre_header
        _
      $region311: #{tpu_custom_call.1} parent=308 // loop_header
        %s507 = sphi 0, %s511
        %p508 = scmp.ge.s32.totalorder %s507, 1
        %s512 = sphi %s495, %s495
        %s513 = sphi %s496, %s496
      $region312: #{tpu_custom_call.1} parent=308 // loop_header_branch
        %510 = sbr.rel (%p508) target = $region316
      $region313: #{tpu_custom_call.1} parent=308 // loop_body
        %v514 = vld [vmem:[%s512] sm:%s505]
        %515 = vst [vmem:[%s513] sm:%s505] %v514
      $region314: #{tpu_custom_call.1} parent=308 // loop_footer
        %s511 = sadd.s32 1, %s507
      $region315: #{tpu_custom_call.1} parent=308 // loop_footer_branch
        %506 = sbr.rel target = $region311
      $region316: #{tpu_custom_call.1} parent=308 // loop_exit
        _
    $region309: #{tpu_custom_call.1} parent=1 // pred_fallthru
      _
    // Predicated region
    $region328: #{tpu_custom_call.1} parent=1 // pred_check
      _
    $region329: #{tpu_custom_call.1} parent=1 // pred_check_branch
      %539 = sbr.rel (0) target = $region331
    $region330: #{tpu_custom_call.1} parent=1 // pred_region
      %540 = vsyncadd [#allocation3], 16
    $region331: #{tpu_custom_call.1} parent=1 // pred_fallthru
      _
    %s541 = sadd.s32 %s14, 11
    %s542 = sld [smem:[#allocation5 + %s541]]
    %s543 = scalar_lea.vmem %s1, %s542
    %s544 = scalar_lea.vmem [#allocation2], 11
    %p546 = scmp.lt.u32.totalorder 1, 8
    %p547 = pneg %p546
    // Predicated region
    $region332: #{tpu_custom_call.1} parent=1 // pred_check
      _
    $region333: #{tpu_custom_call.1} parent=1 // pred_check_branch
      %549 = sbr.rel (%p546) target = $region335
    $region334: #{tpu_custom_call.1} parent=1 // pred_region
      %s564 = sand.u32 1, 7
      %p565 = scmp.eq.s32.totalorder %s564, 0
      %p566 = pneg %p565
      // Predicated region
      $region347: #{tpu_custom_call.1} parent=334 // pred_check
        _
      $region348: #{tpu_custom_call.1} parent=334 // pred_check_branch
        %568 = sbr.rel (%p565) target = $region350
      $region349: #{tpu_custom_call.1} parent=334 // pred_region
        %s569 = sand.u32 1, 7
        %s570 = ssub.s32 1, %s569
        %s571 = scalar_lea.vmem %s543, %s570
        %s572 = ssub.s32 1, %s569
        %s573 = scalar_lea.vmem %s544, %s572 [#allocation2]
        %s574 = sshllo.u32 0, %s569
        loop: start=0, step=1, limit=1
        $region351: #{tpu_custom_call.1} parent=349 // loop_pre_header
          _
        $region352: #{tpu_custom_call.1} parent=349 // loop_header
          %s576 = sphi 0, %s580
          %p577 = scmp.ge.s32.totalorder %s576, 1
          %s581 = sphi %s571, %s571
          %s582 = sphi %s573, %s573
        $region353: #{tpu_custom_call.1} parent=349 // loop_header_branch
          %579 = sbr.rel (%p577) target = $region357
        $region354: #{tpu_custom_call.1} parent=349 // loop_body
          %v583 = vld [vmem:[%s581] sm:%s574]
          %584 = vst [vmem:[%s582] sm:%s574] %v583
        $region355: #{tpu_custom_call.1} parent=349 // loop_footer
          %s580 = sadd.s32 1, %s576
        $region356: #{tpu_custom_call.1} parent=349 // loop_footer_branch
          %575 = sbr.rel target = $region352
        $region357: #{tpu_custom_call.1} parent=349 // loop_exit
          _
      $region350: #{tpu_custom_call.1} parent=334 // pred_fallthru
        _
    $region335: #{tpu_custom_call.1} parent=1 // pred_fallthru
      _
    // Predicated region
    $region336: #{tpu_custom_call.1} parent=1 // pred_check
      %p550 = pneg %p546
    $region337: #{tpu_custom_call.1} parent=1 // pred_check_branch
      %552 = sbr.rel (%p550) target = $region339
    $region338: #{tpu_custom_call.1} parent=1 // pred_region
      %s553 = sshllo.u32 0, 1
      loop: start=0, step=1, limit=1
      $region340: #{tpu_custom_call.1} parent=338 // loop_pre_header
        _
      $region341: #{tpu_custom_call.1} parent=338 // loop_header
        %s555 = sphi 0, %s559
        %p556 = scmp.ge.s32.totalorder %s555, 1
        %s560 = sphi %s543, %s543
        %s561 = sphi %s544, %s544
      $region342: #{tpu_custom_call.1} parent=338 // loop_header_branch
        %558 = sbr.rel (%p556) target = $region346
      $region343: #{tpu_custom_call.1} parent=338 // loop_body
        %v562 = vld [vmem:[%s560] sm:%s553]
        %563 = vst [vmem:[%s561] sm:%s553] %v562
      $region344: #{tpu_custom_call.1} parent=338 // loop_footer
        %s559 = sadd.s32 1, %s555
      $region345: #{tpu_custom_call.1} parent=338 // loop_footer_branch
        %554 = sbr.rel target = $region341
      $region346: #{tpu_custom_call.1} parent=338 // loop_exit
        _
    $region339: #{tpu_custom_call.1} parent=1 // pred_fallthru
      _
    // Predicated region
    $region358: #{tpu_custom_call.1} parent=1 // pred_check
      _
    $region359: #{tpu_custom_call.1} parent=1 // pred_check_branch
      %587 = sbr.rel (0) target = $region361
    $region360: #{tpu_custom_call.1} parent=1 // pred_region
      %588 = vsyncadd [#allocation3], 16
    $region361: #{tpu_custom_call.1} parent=1 // pred_fallthru
      _
    %s589 = sadd.s32 %s14, 12
    %s590 = sld [smem:[#allocation5 + %s589]]
    %s591 = scalar_lea.vmem %s1, %s590
    %s592 = scalar_lea.vmem [#allocation2], 12
    %p594 = scmp.lt.u32.totalorder 1, 8
    %p595 = pneg %p594
    // Predicated region
    $region362: #{tpu_custom_call.1} parent=1 // pred_check
      _
    $region363: #{tpu_custom_call.1} parent=1 // pred_check_branch
      %597 = sbr.rel (%p594) target = $region365
    $region364: #{tpu_custom_call.1} parent=1 // pred_region
      %s612 = sand.u32 1, 7
      %p613 = scmp.eq.s32.totalorder %s612, 0
      %p614 = pneg %p613
      // Predicated region
      $region377: #{tpu_custom_call.1} parent=364 // pred_check
        _
      $region378: #{tpu_custom_call.1} parent=364 // pred_check_branch
        %616 = sbr.rel (%p613) target = $region380
      $region379: #{tpu_custom_call.1} parent=364 // pred_region
        %s617 = sand.u32 1, 7
        %s618 = ssub.s32 1, %s617
        %s619 = scalar_lea.vmem %s591, %s618
        %s620 = ssub.s32 1, %s617
        %s621 = scalar_lea.vmem %s592, %s620 [#allocation2]
        %s622 = sshllo.u32 0, %s617
        loop: start=0, step=1, limit=1
        $region381: #{tpu_custom_call.1} parent=379 // loop_pre_header
          _
        $region382: #{tpu_custom_call.1} parent=379 // loop_header
          %s624 = sphi 0, %s628
          %p625 = scmp.ge.s32.totalorder %s624, 1
          %s629 = sphi %s619, %s619
          %s630 = sphi %s621, %s621
        $region383: #{tpu_custom_call.1} parent=379 // loop_header_branch
          %627 = sbr.rel (%p625) target = $region387
        $region384: #{tpu_custom_call.1} parent=379 // loop_body
          %v631 = vld [vmem:[%s629] sm:%s622]
          %632 = vst [vmem:[%s630] sm:%s622] %v631
        $region385: #{tpu_custom_call.1} parent=379 // loop_footer
          %s628 = sadd.s32 1, %s624
        $region386: #{tpu_custom_call.1} parent=379 // loop_footer_branch
          %623 = sbr.rel target = $region382
        $region387: #{tpu_custom_call.1} parent=379 // loop_exit
          _
      $region380: #{tpu_custom_call.1} parent=364 // pred_fallthru
        _
    $region365: #{tpu_custom_call.1} parent=1 // pred_fallthru
      _
    // Predicated region
    $region366: #{tpu_custom_call.1} parent=1 // pred_check
      %p598 = pneg %p594
    $region367: #{tpu_custom_call.1} parent=1 // pred_check_branch
      %600 = sbr.rel (%p598) target = $region369
    $region368: #{tpu_custom_call.1} parent=1 // pred_region
      %s601 = sshllo.u32 0, 1
      loop: start=0, step=1, limit=1
      $region370: #{tpu_custom_call.1} parent=368 // loop_pre_header
        _
      $region371: #{tpu_custom_call.1} parent=368 // loop_header
        %s603 = sphi 0, %s607
        %p604 = scmp.ge.s32.totalorder %s603, 1
        %s608 = sphi %s591, %s591
        %s609 = sphi %s592, %s592
      $region372: #{tpu_custom_call.1} parent=368 // loop_header_branch
        %606 = sbr.rel (%p604) target = $region376
      $region373: #{tpu_custom_call.1} parent=368 // loop_body
        %v610 = vld [vmem:[%s608] sm:%s601]
        %611 = vst [vmem:[%s609] sm:%s601] %v610
      $region374: #{tpu_custom_call.1} parent=368 // loop_footer
        %s607 = sadd.s32 1, %s603
      $region375: #{tpu_custom_call.1} parent=368 // loop_footer_branch
        %602 = sbr.rel target = $region371
      $region376: #{tpu_custom_call.1} parent=368 // loop_exit
        _
    $region369: #{tpu_custom_call.1} parent=1 // pred_fallthru
      _
    // Predicated region
    $region388: #{tpu_custom_call.1} parent=1 // pred_check
      _
    $region389: #{tpu_custom_call.1} parent=1 // pred_check_branch
      %635 = sbr.rel (0) target = $region391
    $region390: #{tpu_custom_call.1} parent=1 // pred_region
      %636 = vsyncadd [#allocation3], 16
    $region391: #{tpu_custom_call.1} parent=1 // pred_fallthru
      _
    %s637 = sadd.s32 %s14, 13
    %s638 = sld [smem:[#allocation5 + %s637]]
    %s639 = scalar_lea.vmem %s1, %s638
    %s640 = scalar_lea.vmem [#allocation2], 13
    %p642 = scmp.lt.u32.totalorder 1, 8
    %p643 = pneg %p642
    // Predicated region
    $region392: #{tpu_custom_call.1} parent=1 // pred_check
      _
    $region393: #{tpu_custom_call.1} parent=1 // pred_check_branch
      %645 = sbr.rel (%p642) target = $region395
    $region394: #{tpu_custom_call.1} parent=1 // pred_region
      %s660 = sand.u32 1, 7
      %p661 = scmp.eq.s32.totalorder %s660, 0
      %p662 = pneg %p661
      // Predicated region
      $region407: #{tpu_custom_call.1} parent=394 // pred_check
        _
      $region408: #{tpu_custom_call.1} parent=394 // pred_check_branch
        %664 = sbr.rel (%p661) target = $region410
      $region409: #{tpu_custom_call.1} parent=394 // pred_region
        %s665 = sand.u32 1, 7
        %s666 = ssub.s32 1, %s665
        %s667 = scalar_lea.vmem %s639, %s666
        %s668 = ssub.s32 1, %s665
        %s669 = scalar_lea.vmem %s640, %s668 [#allocation2]
        %s670 = sshllo.u32 0, %s665
        loop: start=0, step=1, limit=1
        $region411: #{tpu_custom_call.1} parent=409 // loop_pre_header
          _
        $region412: #{tpu_custom_call.1} parent=409 // loop_header
          %s672 = sphi 0, %s676
          %p673 = scmp.ge.s32.totalorder %s672, 1
          %s677 = sphi %s667, %s667
          %s678 = sphi %s669, %s669
        $region413: #{tpu_custom_call.1} parent=409 // loop_header_branch
          %675 = sbr.rel (%p673) target = $region417
        $region414: #{tpu_custom_call.1} parent=409 // loop_body
          %v679 = vld [vmem:[%s677] sm:%s670]
          %680 = vst [vmem:[%s678] sm:%s670] %v679
        $region415: #{tpu_custom_call.1} parent=409 // loop_footer
          %s676 = sadd.s32 1, %s672
        $region416: #{tpu_custom_call.1} parent=409 // loop_footer_branch
          %671 = sbr.rel target = $region412
        $region417: #{tpu_custom_call.1} parent=409 // loop_exit
          _
      $region410: #{tpu_custom_call.1} parent=394 // pred_fallthru
        _
    $region395: #{tpu_custom_call.1} parent=1 // pred_fallthru
      _
    // Predicated region
    $region396: #{tpu_custom_call.1} parent=1 // pred_check
      %p646 = pneg %p642
    $region397: #{tpu_custom_call.1} parent=1 // pred_check_branch
      %648 = sbr.rel (%p646) target = $region399
    $region398: #{tpu_custom_call.1} parent=1 // pred_region
      %s649 = sshllo.u32 0, 1
      loop: start=0, step=1, limit=1
      $region400: #{tpu_custom_call.1} parent=398 // loop_pre_header
        _
      $region401: #{tpu_custom_call.1} parent=398 // loop_header
        %s651 = sphi 0, %s655
        %p652 = scmp.ge.s32.totalorder %s651, 1
        %s656 = sphi %s639, %s639
        %s657 = sphi %s640, %s640
      $region402: #{tpu_custom_call.1} parent=398 // loop_header_branch
        %654 = sbr.rel (%p652) target = $region406
      $region403: #{tpu_custom_call.1} parent=398 // loop_body
        %v658 = vld [vmem:[%s656] sm:%s649]
        %659 = vst [vmem:[%s657] sm:%s649] %v658
      $region404: #{tpu_custom_call.1} parent=398 // loop_footer
        %s655 = sadd.s32 1, %s651
      $region405: #{tpu_custom_call.1} parent=398 // loop_footer_branch
        %650 = sbr.rel target = $region401
      $region406: #{tpu_custom_call.1} parent=398 // loop_exit
        _
    $region399: #{tpu_custom_call.1} parent=1 // pred_fallthru
      _
    // Predicated region
    $region418: #{tpu_custom_call.1} parent=1 // pred_check
      _
    $region419: #{tpu_custom_call.1} parent=1 // pred_check_branch
      %683 = sbr.rel (0) target = $region421
    $region420: #{tpu_custom_call.1} parent=1 // pred_region
      %684 = vsyncadd [#allocation3], 16
    $region421: #{tpu_custom_call.1} parent=1 // pred_fallthru
      _
    %s685 = sadd.s32 %s14, 14
    %s686 = sld [smem:[#allocation5 + %s685]]
    %s687 = scalar_lea.vmem %s1, %s686
    %s688 = scalar_lea.vmem [#allocation2], 14
    %p690 = scmp.lt.u32.totalorder 1, 8
    %p691 = pneg %p690
    // Predicated region
    $region422: #{tpu_custom_call.1} parent=1 // pred_check
      _
    $region423: #{tpu_custom_call.1} parent=1 // pred_check_branch
      %693 = sbr.rel (%p690) target = $region425
    $region424: #{tpu_custom_call.1} parent=1 // pred_region
      %s708 = sand.u32 1, 7
      %p709 = scmp.eq.s32.totalorder %s708, 0
      %p710 = pneg %p709
      // Predicated region
      $region437: #{tpu_custom_call.1} parent=424 // pred_check
        _
      $region438: #{tpu_custom_call.1} parent=424 // pred_check_branch
        %712 = sbr.rel (%p709) target = $region440
      $region439: #{tpu_custom_call.1} parent=424 // pred_region
        %s713 = sand.u32 1, 7
        %s714 = ssub.s32 1, %s713
        %s715 = scalar_lea.vmem %s687, %s714
        %s716 = ssub.s32 1, %s713
        %s717 = scalar_lea.vmem %s688, %s716 [#allocation2]
        %s718 = sshllo.u32 0, %s713
        loop: start=0, step=1, limit=1
        $region441: #{tpu_custom_call.1} parent=439 // loop_pre_header
          _
        $region442: #{tpu_custom_call.1} parent=439 // loop_header
          %s720 = sphi 0, %s724
          %p721 = scmp.ge.s32.totalorder %s720, 1
          %s725 = sphi %s715, %s715
          %s726 = sphi %s717, %s717
        $region443: #{tpu_custom_call.1} parent=439 // loop_header_branch
          %723 = sbr.rel (%p721) target = $region447
        $region444: #{tpu_custom_call.1} parent=439 // loop_body
          %v727 = vld [vmem:[%s725] sm:%s718]
          %728 = vst [vmem:[%s726] sm:%s718] %v727
        $region445: #{tpu_custom_call.1} parent=439 // loop_footer
          %s724 = sadd.s32 1, %s720
        $region446: #{tpu_custom_call.1} parent=439 // loop_footer_branch
          %719 = sbr.rel target = $region442
        $region447: #{tpu_custom_call.1} parent=439 // loop_exit
          _
      $region440: #{tpu_custom_call.1} parent=424 // pred_fallthru
        _
    $region425: #{tpu_custom_call.1} parent=1 // pred_fallthru
      _
    // Predicated region
    $region426: #{tpu_custom_call.1} parent=1 // pred_check
      %p694 = pneg %p690
    $region427: #{tpu_custom_call.1} parent=1 // pred_check_branch
      %696 = sbr.rel (%p694) target = $region429
    $region428: #{tpu_custom_call.1} parent=1 // pred_region
      %s697 = sshllo.u32 0, 1
      loop: start=0, step=1, limit=1
      $region430: #{tpu_custom_call.1} parent=428 // loop_pre_header
        _
      $region431: #{tpu_custom_call.1} parent=428 // loop_header
        %s699 = sphi 0, %s703
        %p700 = scmp.ge.s32.totalorder %s699, 1
        %s704 = sphi %s687, %s687
        %s705 = sphi %s688, %s688
      $region432: #{tpu_custom_call.1} parent=428 // loop_header_branch
        %702 = sbr.rel (%p700) target = $region436
      $region433: #{tpu_custom_call.1} parent=428 // loop_body
        %v706 = vld [vmem:[%s704] sm:%s697]
        %707 = vst [vmem:[%s705] sm:%s697] %v706
      $region434: #{tpu_custom_call.1} parent=428 // loop_footer
        %s703 = sadd.s32 1, %s699
      $region435: #{tpu_custom_call.1} parent=428 // loop_footer_branch
        %698 = sbr.rel target = $region431
      $region436: #{tpu_custom_call.1} parent=428 // loop_exit
        _
    $region429: #{tpu_custom_call.1} parent=1 // pred_fallthru
      _
    // Predicated region
    $region448: #{tpu_custom_call.1} parent=1 // pred_check
      _
    $region449: #{tpu_custom_call.1} parent=1 // pred_check_branch
      %731 = sbr.rel (0) target = $region451
    $region450: #{tpu_custom_call.1} parent=1 // pred_region
      %732 = vsyncadd [#allocation3], 16
    $region451: #{tpu_custom_call.1} parent=1 // pred_fallthru
      _
    %s733 = sadd.s32 %s14, 15
    %s734 = sld [smem:[#allocation5 + %s733]]
    %s735 = scalar_lea.vmem %s1, %s734
    %s736 = scalar_lea.vmem [#allocation2], 15
    %p738 = scmp.lt.u32.totalorder 1, 8
    %p739 = pneg %p738
    // Predicated region
    $region452: #{tpu_custom_call.1} parent=1 // pred_check
      _
    $region453: #{tpu_custom_call.1} parent=1 // pred_check_branch
      %741 = sbr.rel (%p738) target = $region455
    $region454: #{tpu_custom_call.1} parent=1 // pred_region
      %s756 = sand.u32 1, 7
      %p757 = scmp.eq.s32.totalorder %s756, 0
      %p758 = pneg %p757
      // Predicated region
      $region467: #{tpu_custom_call.1} parent=454 // pred_check
        _
      $region468: #{tpu_custom_call.1} parent=454 // pred_check_branch
        %760 = sbr.rel (%p757) target = $region470
      $region469: #{tpu_custom_call.1} parent=454 // pred_region
        %s761 = sand.u32 1, 7
        %s762 = ssub.s32 1, %s761
        %s763 = scalar_lea.vmem %s735, %s762
        %s764 = ssub.s32 1, %s761
        %s765 = scalar_lea.vmem %s736, %s764 [#allocation2]
        %s766 = sshllo.u32 0, %s761
        loop: start=0, step=1, limit=1
        $region471: #{tpu_custom_call.1} parent=469 // loop_pre_header
          _
        $region472: #{tpu_custom_call.1} parent=469 // loop_header
          %s768 = sphi 0, %s772
          %p769 = scmp.ge.s32.totalorder %s768, 1
          %s773 = sphi %s763, %s763
          %s774 = sphi %s765, %s765
        $region473: #{tpu_custom_call.1} parent=469 // loop_header_branch
          %771 = sbr.rel (%p769) target = $region477
        $region474: #{tpu_custom_call.1} parent=469 // loop_body
          %v775 = vld [vmem:[%s773] sm:%s766]
          %776 = vst [vmem:[%s774] sm:%s766] %v775
        $region475: #{tpu_custom_call.1} parent=469 // loop_footer
          %s772 = sadd.s32 1, %s768
        $region476: #{tpu_custom_call.1} parent=469 // loop_footer_branch
          %767 = sbr.rel target = $region472
        $region477: #{tpu_custom_call.1} parent=469 // loop_exit
          _
      $region470: #{tpu_custom_call.1} parent=454 // pred_fallthru
        _
    $region455: #{tpu_custom_call.1} parent=1 // pred_fallthru
      _
    // Predicated region
    $region456: #{tpu_custom_call.1} parent=1 // pred_check
      %p742 = pneg %p738
    $region457: #{tpu_custom_call.1} parent=1 // pred_check_branch
      %744 = sbr.rel (%p742) target = $region459
    $region458: #{tpu_custom_call.1} parent=1 // pred_region
      %s745 = sshllo.u32 0, 1
      loop: start=0, step=1, limit=1
      $region460: #{tpu_custom_call.1} parent=458 // loop_pre_header
        _
      $region461: #{tpu_custom_call.1} parent=458 // loop_header
        %s747 = sphi 0, %s751
        %p748 = scmp.ge.s32.totalorder %s747, 1
        %s752 = sphi %s735, %s735
        %s753 = sphi %s736, %s736
      $region462: #{tpu_custom_call.1} parent=458 // loop_header_branch
        %750 = sbr.rel (%p748) target = $region466
      $region463: #{tpu_custom_call.1} parent=458 // loop_body
        %v754 = vld [vmem:[%s752] sm:%s745]
        %755 = vst [vmem:[%s753] sm:%s745] %v754
      $region464: #{tpu_custom_call.1} parent=458 // loop_footer
        %s751 = sadd.s32 1, %s747
      $region465: #{tpu_custom_call.1} parent=458 // loop_footer_branch
        %746 = sbr.rel target = $region461
      $region466: #{tpu_custom_call.1} parent=458 // loop_exit
        _
    $region459: #{tpu_custom_call.1} parent=1 // pred_fallthru
      _
    // Predicated region
    $region478: #{tpu_custom_call.1} parent=1 // pred_check
      _
    $region479: #{tpu_custom_call.1} parent=1 // pred_check_branch
      %779 = sbr.rel (0) target = $region481
    $region480: #{tpu_custom_call.1} parent=1 // pred_region
      %780 = vsyncadd [#allocation3], 16
    $region481: #{tpu_custom_call.1} parent=1 // pred_fallthru
      _
    %s781 = sadd.s32 %s14, 16
    %s782 = sld [smem:[#allocation5 + %s781]]
    %s783 = scalar_lea.vmem %s1, %s782
    %s784 = scalar_lea.vmem [#allocation2], 16
    %p786 = scmp.lt.u32.totalorder 1, 8
    %p787 = pneg %p786
    // Predicated region
    $region482: #{tpu_custom_call.1} parent=1 // pred_check
      _
    $region483: #{tpu_custom_call.1} parent=1 // pred_check_branch
      %789 = sbr.rel (%p786) target = $region485
    $region484: #{tpu_custom_call.1} parent=1 // pred_region
      %s804 = sand.u32 1, 7
      %p805 = scmp.eq.s32.totalorder %s804, 0
      %p806 = pneg %p805
      // Predicated region
      $region497: #{tpu_custom_call.1} parent=484 // pred_check
        _
      $region498: #{tpu_custom_call.1} parent=484 // pred_check_branch
        %808 = sbr.rel (%p805) target = $region500
      $region499: #{tpu_custom_call.1} parent=484 // pred_region
        %s809 = sand.u32 1, 7
        %s810 = ssub.s32 1, %s809
        %s811 = scalar_lea.vmem %s783, %s810
        %s812 = ssub.s32 1, %s809
        %s813 = scalar_lea.vmem %s784, %s812 [#allocation2]
        %s814 = sshllo.u32 0, %s809
        loop: start=0, step=1, limit=1
        $region501: #{tpu_custom_call.1} parent=499 // loop_pre_header
          _
        $region502: #{tpu_custom_call.1} parent=499 // loop_header
          %s816 = sphi 0, %s820
          %p817 = scmp.ge.s32.totalorder %s816, 1
          %s821 = sphi %s811, %s811
          %s822 = sphi %s813, %s813
        $region503: #{tpu_custom_call.1} parent=499 // loop_header_branch
          %819 = sbr.rel (%p817) target = $region507
        $region504: #{tpu_custom_call.1} parent=499 // loop_body
          %v823 = vld [vmem:[%s821] sm:%s814]
          %824 = vst [vmem:[%s822] sm:%s814] %v823
        $region505: #{tpu_custom_call.1} parent=499 // loop_footer
          %s820 = sadd.s32 1, %s816
        $region506: #{tpu_custom_call.1} parent=499 // loop_footer_branch
          %815 = sbr.rel target = $region502
        $region507: #{tpu_custom_call.1} parent=499 // loop_exit
          _
      $region500: #{tpu_custom_call.1} parent=484 // pred_fallthru
        _
    $region485: #{tpu_custom_call.1} parent=1 // pred_fallthru
      _
    // Predicated region
    $region486: #{tpu_custom_call.1} parent=1 // pred_check
      %p790 = pneg %p786
    $region487: #{tpu_custom_call.1} parent=1 // pred_check_branch
      %792 = sbr.rel (%p790) target = $region489
    $region488: #{tpu_custom_call.1} parent=1 // pred_region
      %s793 = sshllo.u32 0, 1
      loop: start=0, step=1, limit=1
      $region490: #{tpu_custom_call.1} parent=488 // loop_pre_header
        _
      $region491: #{tpu_custom_call.1} parent=488 // loop_header
        %s795 = sphi 0, %s799
        %p796 = scmp.ge.s32.totalorder %s795, 1
        %s800 = sphi %s783, %s783
        %s801 = sphi %s784, %s784
      $region492: #{tpu_custom_call.1} parent=488 // loop_header_branch
        %798 = sbr.rel (%p796) target = $region496
      $region493: #{tpu_custom_call.1} parent=488 // loop_body
        %v802 = vld [vmem:[%s800] sm:%s793]
        %803 = vst [vmem:[%s801] sm:%s793] %v802
      $region494: #{tpu_custom_call.1} parent=488 // loop_footer
        %s799 = sadd.s32 1, %s795
      $region495: #{tpu_custom_call.1} parent=488 // loop_footer_branch
        %794 = sbr.rel target = $region491
      $region496: #{tpu_custom_call.1} parent=488 // loop_exit
        _
    $region489: #{tpu_custom_call.1} parent=1 // pred_fallthru
      _
    // Predicated region
    $region508: #{tpu_custom_call.1} parent=1 // pred_check
      _
    $region509: #{tpu_custom_call.1} parent=1 // pred_check_branch
      %827 = sbr.rel (0) target = $region511
    $region510: #{tpu_custom_call.1} parent=1 // pred_region
      %828 = vsyncadd [#allocation3], 16
    $region511: #{tpu_custom_call.1} parent=1 // pred_fallthru
      _
    %s829 = sadd.s32 %s14, 17
    %s830 = sld [smem:[#allocation5 + %s829]]
    %s831 = scalar_lea.vmem %s1, %s830
    %s832 = scalar_lea.vmem [#allocation2], 17
    %p834 = scmp.lt.u32.totalorder 1, 8
    %p835 = pneg %p834
    // Predicated region
    $region512: #{tpu_custom_call.1} parent=1 // pred_check
      _
    $region513: #{tpu_custom_call.1} parent=1 // pred_check_branch
      %837 = sbr.rel (%p834) target = $region515
    $region514: #{tpu_custom_call.1} parent=1 // pred_region
      %s852 = sand.u32 1, 7
      %p853 = scmp.eq.s32.totalorder %s852, 0
      %p854 = pneg %p853
      // Predicated region
      $region527: #{tpu_custom_call.1} parent=514 // pred_check
        _
      $region528: #{tpu_custom_call.1} parent=514 // pred_check_branch
        %856 = sbr.rel (%p853) target = $region530
      $region529: #{tpu_custom_call.1} parent=514 // pred_region
        %s857 = sand.u32 1, 7
        %s858 = ssub.s32 1, %s857
        %s859 = scalar_lea.vmem %s831, %s858
        %s860 = ssub.s32 1, %s857
        %s861 = scalar_lea.vmem %s832, %s860 [#allocation2]
        %s862 = sshllo.u32 0, %s857
        loop: start=0, step=1, limit=1
        $region531: #{tpu_custom_call.1} parent=529 // loop_pre_header
          _
        $region532: #{tpu_custom_call.1} parent=529 // loop_header
          %s864 = sphi 0, %s868
          %p865 = scmp.ge.s32.totalorder %s864, 1
          %s869 = sphi %s859, %s859
          %s870 = sphi %s861, %s861
        $region533: #{tpu_custom_call.1} parent=529 // loop_header_branch
          %867 = sbr.rel (%p865) target = $region537
        $region534: #{tpu_custom_call.1} parent=529 // loop_body
          %v871 = vld [vmem:[%s869] sm:%s862]
          %872 = vst [vmem:[%s870] sm:%s862] %v871
        $region535: #{tpu_custom_call.1} parent=529 // loop_footer
          %s868 = sadd.s32 1, %s864
        $region536: #{tpu_custom_call.1} parent=529 // loop_footer_branch
          %863 = sbr.rel target = $region532
        $region537: #{tpu_custom_call.1} parent=529 // loop_exit
          _
      $region530: #{tpu_custom_call.1} parent=514 // pred_fallthru
        _
    $region515: #{tpu_custom_call.1} parent=1 // pred_fallthru
      _
    // Predicated region
    $region516: #{tpu_custom_call.1} parent=1 // pred_check
      %p838 = pneg %p834
    $region517: #{tpu_custom_call.1} parent=1 // pred_check_branch
      %840 = sbr.rel (%p838) target = $region519
    $region518: #{tpu_custom_call.1} parent=1 // pred_region
      %s841 = sshllo.u32 0, 1
      loop: start=0, step=1, limit=1
      $region520: #{tpu_custom_call.1} parent=518 // loop_pre_header
        _
      $region521: #{tpu_custom_call.1} parent=518 // loop_header
        %s843 = sphi 0, %s847
        %p844 = scmp.ge.s32.totalorder %s843, 1
        %s848 = sphi %s831, %s831
        %s849 = sphi %s832, %s832
      $region522: #{tpu_custom_call.1} parent=518 // loop_header_branch
        %846 = sbr.rel (%p844) target = $region526
      $region523: #{tpu_custom_call.1} parent=518 // loop_body
        %v850 = vld [vmem:[%s848] sm:%s841]
        %851 = vst [vmem:[%s849] sm:%s841] %v850
      $region524: #{tpu_custom_call.1} parent=518 // loop_footer
        %s847 = sadd.s32 1, %s843
      $region525: #{tpu_custom_call.1} parent=518 // loop_footer_branch
        %842 = sbr.rel target = $region521
      $region526: #{tpu_custom_call.1} parent=518 // loop_exit
        _
    $region519: #{tpu_custom_call.1} parent=1 // pred_fallthru
      _
    // Predicated region
    $region538: #{tpu_custom_call.1} parent=1 // pred_check
      _
    $region539: #{tpu_custom_call.1} parent=1 // pred_check_branch
      %875 = sbr.rel (0) target = $region541
    $region540: #{tpu_custom_call.1} parent=1 // pred_region
      %876 = vsyncadd [#allocation3], 16
    $region541: #{tpu_custom_call.1} parent=1 // pred_fallthru
      _
    %s877 = sadd.s32 %s14, 18
    %s878 = sld [smem:[#allocation5 + %s877]]
    %s879 = scalar_lea.vmem %s1, %s878
    %s880 = scalar_lea.vmem [#allocation2], 18
    %p882 = scmp.lt.u32.totalorder 1, 8
    %p883 = pneg %p882
    // Predicated region
    $region542: #{tpu_custom_call.1} parent=1 // pred_check
      _
    $region543: #{tpu_custom_call.1} parent=1 // pred_check_branch
      %885 = sbr.rel (%p882) target = $region545
    $region544: #{tpu_custom_call.1} parent=1 // pred_region
      %s900 = sand.u32 1, 7
      %p901 = scmp.eq.s32.totalorder %s900, 0
      %p902 = pneg %p901
      // Predicated region
      $region557: #{tpu_custom_call.1} parent=544 // pred_check
        _
      $region558: #{tpu_custom_call.1} parent=544 // pred_check_branch
        %904 = sbr.rel (%p901) target = $region560
      $region559: #{tpu_custom_call.1} parent=544 // pred_region
        %s905 = sand.u32 1, 7
        %s906 = ssub.s32 1, %s905
        %s907 = scalar_lea.vmem %s879, %s906
        %s908 = ssub.s32 1, %s905
        %s909 = scalar_lea.vmem %s880, %s908 [#allocation2]
        %s910 = sshllo.u32 0, %s905
        loop: start=0, step=1, limit=1
        $region561: #{tpu_custom_call.1} parent=559 // loop_pre_header
          _
        $region562: #{tpu_custom_call.1} parent=559 // loop_header
          %s912 = sphi 0, %s916
          %p913 = scmp.ge.s32.totalorder %s912, 1
          %s917 = sphi %s907, %s907
          %s918 = sphi %s909, %s909
        $region563: #{tpu_custom_call.1} parent=559 // loop_header_branch
          %915 = sbr.rel (%p913) target = $region567
        $region564: #{tpu_custom_call.1} parent=559 // loop_body
          %v919 = vld [vmem:[%s917] sm:%s910]
          %920 = vst [vmem:[%s918] sm:%s910] %v919
        $region565: #{tpu_custom_call.1} parent=559 // loop_footer
          %s916 = sadd.s32 1, %s912
        $region566: #{tpu_custom_call.1} parent=559 // loop_footer_branch
          %911 = sbr.rel target = $region562
        $region567: #{tpu_custom_call.1} parent=559 // loop_exit
          _
      $region560: #{tpu_custom_call.1} parent=544 // pred_fallthru
        _
    $region545: #{tpu_custom_call.1} parent=1 // pred_fallthru
      _
    // Predicated region
    $region546: #{tpu_custom_call.1} parent=1 // pred_check
      %p886 = pneg %p882
    $region547: #{tpu_custom_call.1} parent=1 // pred_check_branch
      %888 = sbr.rel (%p886) target = $region549
    $region548: #{tpu_custom_call.1} parent=1 // pred_region
      %s889 = sshllo.u32 0, 1
      loop: start=0, step=1, limit=1
      $region550: #{tpu_custom_call.1} parent=548 // loop_pre_header
        _
      $region551: #{tpu_custom_call.1} parent=548 // loop_header
        %s891 = sphi 0, %s895
        %p892 = scmp.ge.s32.totalorder %s891, 1
        %s896 = sphi %s879, %s879
        %s897 = sphi %s880, %s880
      $region552: #{tpu_custom_call.1} parent=548 // loop_header_branch
        %894 = sbr.rel (%p892) target = $region556
      $region553: #{tpu_custom_call.1} parent=548 // loop_body
        %v898 = vld [vmem:[%s896] sm:%s889]
        %899 = vst [vmem:[%s897] sm:%s889] %v898
      $region554: #{tpu_custom_call.1} parent=548 // loop_footer
        %s895 = sadd.s32 1, %s891
      $region555: #{tpu_custom_call.1} parent=548 // loop_footer_branch
        %890 = sbr.rel target = $region551
      $region556: #{tpu_custom_call.1} parent=548 // loop_exit
        _
    $region549: #{tpu_custom_call.1} parent=1 // pred_fallthru
      _
    // Predicated region
    $region568: #{tpu_custom_call.1} parent=1 // pred_check
      _
    $region569: #{tpu_custom_call.1} parent=1 // pred_check_branch
      %923 = sbr.rel (0) target = $region571
    $region570: #{tpu_custom_call.1} parent=1 // pred_region
      %924 = vsyncadd [#allocation3], 16
    $region571: #{tpu_custom_call.1} parent=1 // pred_fallthru
      _
    %s925 = sadd.s32 %s14, 19
    %s926 = sld [smem:[#allocation5 + %s925]]
    %s927 = scalar_lea.vmem %s1, %s926
    %s928 = scalar_lea.vmem [#allocation2], 19
    %p930 = scmp.lt.u32.totalorder 1, 8
    %p931 = pneg %p930
    // Predicated region
    $region572: #{tpu_custom_call.1} parent=1 // pred_check
      _
    $region573: #{tpu_custom_call.1} parent=1 // pred_check_branch
      %933 = sbr.rel (%p930) target = $region575
    $region574: #{tpu_custom_call.1} parent=1 // pred_region
      %s948 = sand.u32 1, 7
      %p949 = scmp.eq.s32.totalorder %s948, 0
      %p950 = pneg %p949
      // Predicated region
      $region587: #{tpu_custom_call.1} parent=574 // pred_check
        _
      $region588: #{tpu_custom_call.1} parent=574 // pred_check_branch
        %952 = sbr.rel (%p949) target = $region590
      $region589: #{tpu_custom_call.1} parent=574 // pred_region
        %s953 = sand.u32 1, 7
        %s954 = ssub.s32 1, %s953
        %s955 = scalar_lea.vmem %s927, %s954
        %s956 = ssub.s32 1, %s953
        %s957 = scalar_lea.vmem %s928, %s956 [#allocation2]
        %s958 = sshllo.u32 0, %s953
        loop: start=0, step=1, limit=1
        $region591: #{tpu_custom_call.1} parent=589 // loop_pre_header
          _
        $region592: #{tpu_custom_call.1} parent=589 // loop_header
          %s960 = sphi 0, %s964
          %p961 = scmp.ge.s32.totalorder %s960, 1
          %s965 = sphi %s955, %s955
          %s966 = sphi %s957, %s957
        $region593: #{tpu_custom_call.1} parent=589 // loop_header_branch
          %963 = sbr.rel (%p961) target = $region597
        $region594: #{tpu_custom_call.1} parent=589 // loop_body
          %v967 = vld [vmem:[%s965] sm:%s958]
          %968 = vst [vmem:[%s966] sm:%s958] %v967
        $region595: #{tpu_custom_call.1} parent=589 // loop_footer
          %s964 = sadd.s32 1, %s960
        $region596: #{tpu_custom_call.1} parent=589 // loop_footer_branch
          %959 = sbr.rel target = $region592
        $region597: #{tpu_custom_call.1} parent=589 // loop_exit
          _
      $region590: #{tpu_custom_call.1} parent=574 // pred_fallthru
        _
    $region575: #{tpu_custom_call.1} parent=1 // pred_fallthru
      _
    // Predicated region
    $region576: #{tpu_custom_call.1} parent=1 // pred_check
      %p934 = pneg %p930
    $region577: #{tpu_custom_call.1} parent=1 // pred_check_branch
      %936 = sbr.rel (%p934) target = $region579
    $region578: #{tpu_custom_call.1} parent=1 // pred_region
      %s937 = sshllo.u32 0, 1
      loop: start=0, step=1, limit=1
      $region580: #{tpu_custom_call.1} parent=578 // loop_pre_header
        _
      $region581: #{tpu_custom_call.1} parent=578 // loop_header
        %s939 = sphi 0, %s943
        %p940 = scmp.ge.s32.totalorder %s939, 1
        %s944 = sphi %s927, %s927
        %s945 = sphi %s928, %s928
      $region582: #{tpu_custom_call.1} parent=578 // loop_header_branch
        %942 = sbr.rel (%p940) target = $region586
      $region583: #{tpu_custom_call.1} parent=578 // loop_body
        %v946 = vld [vmem:[%s944] sm:%s937]
        %947 = vst [vmem:[%s945] sm:%s937] %v946
      $region584: #{tpu_custom_call.1} parent=578 // loop_footer
        %s943 = sadd.s32 1, %s939
      $region585: #{tpu_custom_call.1} parent=578 // loop_footer_branch
        %938 = sbr.rel target = $region581
      $region586: #{tpu_custom_call.1} parent=578 // loop_exit
        _
    $region579: #{tpu_custom_call.1} parent=1 // pred_fallthru
      _
    // Predicated region
    $region598: #{tpu_custom_call.1} parent=1 // pred_check
      _
    $region599: #{tpu_custom_call.1} parent=1 // pred_check_branch
      %971 = sbr.rel (0) target = $region601
    $region600: #{tpu_custom_call.1} parent=1 // pred_region
      %972 = vsyncadd [#allocation3], 16
    $region601: #{tpu_custom_call.1} parent=1 // pred_fallthru
      _
    %s973 = sadd.s32 %s14, 20
    %s974 = sld [smem:[#allocation5 + %s973]]
    %s975 = scalar_lea.vmem %s1, %s974
    %s976 = scalar_lea.vmem [#allocation2], 20
    %p978 = scmp.lt.u32.totalorder 1, 8
    %p979 = pneg %p978
    // Predicated region
    $region602: #{tpu_custom_call.1} parent=1 // pred_check
      _
    $region603: #{tpu_custom_call.1} parent=1 // pred_check_branch
      %981 = sbr.rel (%p978) target = $region605
    $region604: #{tpu_custom_call.1} parent=1 // pred_region
      %s996 = sand.u32 1, 7
      %p997 = scmp.eq.s32.totalorder %s996, 0
      %p998 = pneg %p997
      // Predicated region
      $region617: #{tpu_custom_call.1} parent=604 // pred_check
        _
      $region618: #{tpu_custom_call.1} parent=604 // pred_check_branch
        %1000 = sbr.rel (%p997) target = $region620
      $region619: #{tpu_custom_call.1} parent=604 // pred_region
        %s1001 = sand.u32 1, 7
        %s1002 = ssub.s32 1, %s1001
        %s1003 = scalar_lea.vmem %s975, %s1002
        %s1004 = ssub.s32 1, %s1001
        %s1005 = scalar_lea.vmem %s976, %s1004 [#allocation2]
        %s1006 = sshllo.u32 0, %s1001
        loop: start=0, step=1, limit=1
        $region621: #{tpu_custom_call.1} parent=619 // loop_pre_header
          _
        $region622: #{tpu_custom_call.1} parent=619 // loop_header
          %s1008 = sphi 0, %s1012
          %p1009 = scmp.ge.s32.totalorder %s1008, 1
          %s1013 = sphi %s1003, %s1003
          %s1014 = sphi %s1005, %s1005
        $region623: #{tpu_custom_call.1} parent=619 // loop_header_branch
          %1011 = sbr.rel (%p1009) target = $region627
        $region624: #{tpu_custom_call.1} parent=619 // loop_body
          %v1015 = vld [vmem:[%s1013] sm:%s1006]
          %1016 = vst [vmem:[%s1014] sm:%s1006] %v1015
        $region625: #{tpu_custom_call.1} parent=619 // loop_footer
          %s1012 = sadd.s32 1, %s1008
        $region626: #{tpu_custom_call.1} parent=619 // loop_footer_branch
          %1007 = sbr.rel target = $region622
        $region627: #{tpu_custom_call.1} parent=619 // loop_exit
          _
      $region620: #{tpu_custom_call.1} parent=604 // pred_fallthru
        _
    $region605: #{tpu_custom_call.1} parent=1 // pred_fallthru
      _
    // Predicated region
    $region606: #{tpu_custom_call.1} parent=1 // pred_check
      %p982 = pneg %p978
    $region607: #{tpu_custom_call.1} parent=1 // pred_check_branch
      %984 = sbr.rel (%p982) target = $region609
    $region608: #{tpu_custom_call.1} parent=1 // pred_region
      %s985 = sshllo.u32 0, 1
      loop: start=0, step=1, limit=1
      $region610: #{tpu_custom_call.1} parent=608 // loop_pre_header
        _
      $region611: #{tpu_custom_call.1} parent=608 // loop_header
        %s987 = sphi 0, %s991
        %p988 = scmp.ge.s32.totalorder %s987, 1
        %s992 = sphi %s975, %s975
        %s993 = sphi %s976, %s976
      $region612: #{tpu_custom_call.1} parent=608 // loop_header_branch
        %990 = sbr.rel (%p988) target = $region616
      $region613: #{tpu_custom_call.1} parent=608 // loop_body
        %v994 = vld [vmem:[%s992] sm:%s985]
        %995 = vst [vmem:[%s993] sm:%s985] %v994
      $region614: #{tpu_custom_call.1} parent=608 // loop_footer
        %s991 = sadd.s32 1, %s987
      $region615: #{tpu_custom_call.1} parent=608 // loop_footer_branch
        %986 = sbr.rel target = $region611
      $region616: #{tpu_custom_call.1} parent=608 // loop_exit
        _
    $region609: #{tpu_custom_call.1} parent=1 // pred_fallthru
      _
    // Predicated region
    $region628: #{tpu_custom_call.1} parent=1 // pred_check
      _
    $region629: #{tpu_custom_call.1} parent=1 // pred_check_branch
      %1019 = sbr.rel (0) target = $region631
    $region630: #{tpu_custom_call.1} parent=1 // pred_region
      %1020 = vsyncadd [#allocation3], 16
    $region631: #{tpu_custom_call.1} parent=1 // pred_fallthru
      _
    %s1021 = sadd.s32 %s14, 21
    %s1022 = sld [smem:[#allocation5 + %s1021]]
    %s1023 = scalar_lea.vmem %s1, %s1022
    %s1024 = scalar_lea.vmem [#allocation2], 21
    %p1026 = scmp.lt.u32.totalorder 1, 8
    %p1027 = pneg %p1026
    // Predicated region
    $region632: #{tpu_custom_call.1} parent=1 // pred_check
      _
    $region633: #{tpu_custom_call.1} parent=1 // pred_check_branch
      %1029 = sbr.rel (%p1026) target = $region635
    $region634: #{tpu_custom_call.1} parent=1 // pred_region
      %s1044 = sand.u32 1, 7
      %p1045 = scmp.eq.s32.totalorder %s1044, 0
      %p1046 = pneg %p1045
      // Predicated region
      $region647: #{tpu_custom_call.1} parent=634 // pred_check
        _
      $region648: #{tpu_custom_call.1} parent=634 // pred_check_branch
        %1048 = sbr.rel (%p1045) target = $region650
      $region649: #{tpu_custom_call.1} parent=634 // pred_region
        %s1049 = sand.u32 1, 7
        %s1050 = ssub.s32 1, %s1049
        %s1051 = scalar_lea.vmem %s1023, %s1050
        %s1052 = ssub.s32 1, %s1049
        %s1053 = scalar_lea.vmem %s1024, %s1052 [#allocation2]
        %s1054 = sshllo.u32 0, %s1049
        loop: start=0, step=1, limit=1
        $region651: #{tpu_custom_call.1} parent=649 // loop_pre_header
          _
        $region652: #{tpu_custom_call.1} parent=649 // loop_header
          %s1056 = sphi 0, %s1060
          %p1057 = scmp.ge.s32.totalorder %s1056, 1
          %s1061 = sphi %s1051, %s1051
          %s1062 = sphi %s1053, %s1053
        $region653: #{tpu_custom_call.1} parent=649 // loop_header_branch
          %1059 = sbr.rel (%p1057) target = $region657
        $region654: #{tpu_custom_call.1} parent=649 // loop_body
          %v1063 = vld [vmem:[%s1061] sm:%s1054]
          %1064 = vst [vmem:[%s1062] sm:%s1054] %v1063
        $region655: #{tpu_custom_call.1} parent=649 // loop_footer
          %s1060 = sadd.s32 1, %s1056
        $region656: #{tpu_custom_call.1} parent=649 // loop_footer_branch
          %1055 = sbr.rel target = $region652
        $region657: #{tpu_custom_call.1} parent=649 // loop_exit
          _
      $region650: #{tpu_custom_call.1} parent=634 // pred_fallthru
        _
    $region635: #{tpu_custom_call.1} parent=1 // pred_fallthru
      _
    // Predicated region
    $region636: #{tpu_custom_call.1} parent=1 // pred_check
      %p1030 = pneg %p1026
    $region637: #{tpu_custom_call.1} parent=1 // pred_check_branch
      %1032 = sbr.rel (%p1030) target = $region639
    $region638: #{tpu_custom_call.1} parent=1 // pred_region
      %s1033 = sshllo.u32 0, 1
      loop: start=0, step=1, limit=1
      $region640: #{tpu_custom_call.1} parent=638 // loop_pre_header
        _
      $region641: #{tpu_custom_call.1} parent=638 // loop_header
        %s1035 = sphi 0, %s1039
        %p1036 = scmp.ge.s32.totalorder %s1035, 1
        %s1040 = sphi %s1023, %s1023
        %s1041 = sphi %s1024, %s1024
      $region642: #{tpu_custom_call.1} parent=638 // loop_header_branch
        %1038 = sbr.rel (%p1036) target = $region646
      $region643: #{tpu_custom_call.1} parent=638 // loop_body
        %v1042 = vld [vmem:[%s1040] sm:%s1033]
        %1043 = vst [vmem:[%s1041] sm:%s1033] %v1042
      $region644: #{tpu_custom_call.1} parent=638 // loop_footer
        %s1039 = sadd.s32 1, %s1035
      $region645: #{tpu_custom_call.1} parent=638 // loop_footer_branch
        %1034 = sbr.rel target = $region641
      $region646: #{tpu_custom_call.1} parent=638 // loop_exit
        _
    $region639: #{tpu_custom_call.1} parent=1 // pred_fallthru
      _
    // Predicated region
    $region658: #{tpu_custom_call.1} parent=1 // pred_check
      _
    $region659: #{tpu_custom_call.1} parent=1 // pred_check_branch
      %1067 = sbr.rel (0) target = $region661
    $region660: #{tpu_custom_call.1} parent=1 // pred_region
      %1068 = vsyncadd [#allocation3], 16
    $region661: #{tpu_custom_call.1} parent=1 // pred_fallthru
      _
    %s1069 = sadd.s32 %s14, 22
    %s1070 = sld [smem:[#allocation5 + %s1069]]
    %s1071 = scalar_lea.vmem %s1, %s1070
    %s1072 = scalar_lea.vmem [#allocation2], 22
    %p1074 = scmp.lt.u32.totalorder 1, 8
    %p1075 = pneg %p1074
    // Predicated region
    $region662: #{tpu_custom_call.1} parent=1 // pred_check
      _
    $region663: #{tpu_custom_call.1} parent=1 // pred_check_branch
      %1077 = sbr.rel (%p1074) target = $region665
    $region664: #{tpu_custom_call.1} parent=1 // pred_region
      %s1092 = sand.u32 1, 7
      %p1093 = scmp.eq.s32.totalorder %s1092, 0
      %p1094 = pneg %p1093
      // Predicated region
      $region677: #{tpu_custom_call.1} parent=664 // pred_check
        _
      $region678: #{tpu_custom_call.1} parent=664 // pred_check_branch
        %1096 = sbr.rel (%p1093) target = $region680
      $region679: #{tpu_custom_call.1} parent=664 // pred_region
        %s1097 = sand.u32 1, 7
        %s1098 = ssub.s32 1, %s1097
        %s1099 = scalar_lea.vmem %s1071, %s1098
        %s1100 = ssub.s32 1, %s1097
        %s1101 = scalar_lea.vmem %s1072, %s1100 [#allocation2]
        %s1102 = sshllo.u32 0, %s1097
        loop: start=0, step=1, limit=1
        $region681: #{tpu_custom_call.1} parent=679 // loop_pre_header
          _
        $region682: #{tpu_custom_call.1} parent=679 // loop_header
          %s1104 = sphi 0, %s1108
          %p1105 = scmp.ge.s32.totalorder %s1104, 1
          %s1109 = sphi %s1099, %s1099
          %s1110 = sphi %s1101, %s1101
        $region683: #{tpu_custom_call.1} parent=679 // loop_header_branch
          %1107 = sbr.rel (%p1105) target = $region687
        $region684: #{tpu_custom_call.1} parent=679 // loop_body
          %v1111 = vld [vmem:[%s1109] sm:%s1102]
          %1112 = vst [vmem:[%s1110] sm:%s1102] %v1111
        $region685: #{tpu_custom_call.1} parent=679 // loop_footer
          %s1108 = sadd.s32 1, %s1104
        $region686: #{tpu_custom_call.1} parent=679 // loop_footer_branch
          %1103 = sbr.rel target = $region682
        $region687: #{tpu_custom_call.1} parent=679 // loop_exit
          _
      $region680: #{tpu_custom_call.1} parent=664 // pred_fallthru
        _
    $region665: #{tpu_custom_call.1} parent=1 // pred_fallthru
      _
    // Predicated region
    $region666: #{tpu_custom_call.1} parent=1 // pred_check
      %p1078 = pneg %p1074
    $region667: #{tpu_custom_call.1} parent=1 // pred_check_branch
      %1080 = sbr.rel (%p1078) target = $region669
    $region668: #{tpu_custom_call.1} parent=1 // pred_region
      %s1081 = sshllo.u32 0, 1
      loop: start=0, step=1, limit=1
      $region670: #{tpu_custom_call.1} parent=668 // loop_pre_header
        _
      $region671: #{tpu_custom_call.1} parent=668 // loop_header
        %s1083 = sphi 0, %s1087
        %p1084 = scmp.ge.s32.totalorder %s1083, 1
        %s1088 = sphi %s1071, %s1071
        %s1089 = sphi %s1072, %s1072
      $region672: #{tpu_custom_call.1} parent=668 // loop_header_branch
        %1086 = sbr.rel (%p1084) target = $region676
      $region673: #{tpu_custom_call.1} parent=668 // loop_body
        %v1090 = vld [vmem:[%s1088] sm:%s1081]
        %1091 = vst [vmem:[%s1089] sm:%s1081] %v1090
      $region674: #{tpu_custom_call.1} parent=668 // loop_footer
        %s1087 = sadd.s32 1, %s1083
      $region675: #{tpu_custom_call.1} parent=668 // loop_footer_branch
        %1082 = sbr.rel target = $region671
      $region676: #{tpu_custom_call.1} parent=668 // loop_exit
        _
    $region669: #{tpu_custom_call.1} parent=1 // pred_fallthru
      _
    // Predicated region
    $region688: #{tpu_custom_call.1} parent=1 // pred_check
      _
    $region689: #{tpu_custom_call.1} parent=1 // pred_check_branch
      %1115 = sbr.rel (0) target = $region691
    $region690: #{tpu_custom_call.1} parent=1 // pred_region
      %1116 = vsyncadd [#allocation3], 16
    $region691: #{tpu_custom_call.1} parent=1 // pred_fallthru
      _
    %s1117 = sadd.s32 %s14, 23
    %s1118 = sld [smem:[#allocation5 + %s1117]]
    %s1119 = scalar_lea.vmem %s1, %s1118
    %s1120 = scalar_lea.vmem [#allocation2], 23
    %p1122 = scmp.lt.u32.totalorder 1, 8
    %p1123 = pneg %p1122
    // Predicated region
    $region692: #{tpu_custom_call.1} parent=1 // pred_check
      _
    $region693: #{tpu_custom_call.1} parent=1 // pred_check_branch
      %1125 = sbr.rel (%p1122) target = $region695
    $region694: #{tpu_custom_call.1} parent=1 // pred_region
      %s1140 = sand.u32 1, 7
      %p1141 = scmp.eq.s32.totalorder %s1140, 0
      %p1142 = pneg %p1141
      // Predicated region
      $region707: #{tpu_custom_call.1} parent=694 // pred_check
        _
      $region708: #{tpu_custom_call.1} parent=694 // pred_check_branch
        %1144 = sbr.rel (%p1141) target = $region710
      $region709: #{tpu_custom_call.1} parent=694 // pred_region
        %s1145 = sand.u32 1, 7
        %s1146 = ssub.s32 1, %s1145
        %s1147 = scalar_lea.vmem %s1119, %s1146
        %s1148 = ssub.s32 1, %s1145
        %s1149 = scalar_lea.vmem %s1120, %s1148 [#allocation2]
        %s1150 = sshllo.u32 0, %s1145
        loop: start=0, step=1, limit=1
        $region711: #{tpu_custom_call.1} parent=709 // loop_pre_header
          _
        $region712: #{tpu_custom_call.1} parent=709 // loop_header
          %s1152 = sphi 0, %s1156
          %p1153 = scmp.ge.s32.totalorder %s1152, 1
          %s1157 = sphi %s1147, %s1147
          %s1158 = sphi %s1149, %s1149
        $region713: #{tpu_custom_call.1} parent=709 // loop_header_branch
          %1155 = sbr.rel (%p1153) target = $region717
        $region714: #{tpu_custom_call.1} parent=709 // loop_body
          %v1159 = vld [vmem:[%s1157] sm:%s1150]
          %1160 = vst [vmem:[%s1158] sm:%s1150] %v1159
        $region715: #{tpu_custom_call.1} parent=709 // loop_footer
          %s1156 = sadd.s32 1, %s1152
        $region716: #{tpu_custom_call.1} parent=709 // loop_footer_branch
          %1151 = sbr.rel target = $region712
        $region717: #{tpu_custom_call.1} parent=709 // loop_exit
          _
      $region710: #{tpu_custom_call.1} parent=694 // pred_fallthru
        _
    $region695: #{tpu_custom_call.1} parent=1 // pred_fallthru
      _
    // Predicated region
    $region696: #{tpu_custom_call.1} parent=1 // pred_check
      %p1126 = pneg %p1122
    $region697: #{tpu_custom_call.1} parent=1 // pred_check_branch
      %1128 = sbr.rel (%p1126) target = $region699
    $region698: #{tpu_custom_call.1} parent=1 // pred_region
      %s1129 = sshllo.u32 0, 1
      loop: start=0, step=1, limit=1
      $region700: #{tpu_custom_call.1} parent=698 // loop_pre_header
        _
      $region701: #{tpu_custom_call.1} parent=698 // loop_header
        %s1131 = sphi 0, %s1135
        %p1132 = scmp.ge.s32.totalorder %s1131, 1
        %s1136 = sphi %s1119, %s1119
        %s1137 = sphi %s1120, %s1120
      $region702: #{tpu_custom_call.1} parent=698 // loop_header_branch
        %1134 = sbr.rel (%p1132) target = $region706
      $region703: #{tpu_custom_call.1} parent=698 // loop_body
        %v1138 = vld [vmem:[%s1136] sm:%s1129]
        %1139 = vst [vmem:[%s1137] sm:%s1129] %v1138
      $region704: #{tpu_custom_call.1} parent=698 // loop_footer
        %s1135 = sadd.s32 1, %s1131
      $region705: #{tpu_custom_call.1} parent=698 // loop_footer_branch
        %1130 = sbr.rel target = $region701
      $region706: #{tpu_custom_call.1} parent=698 // loop_exit
        _
    $region699: #{tpu_custom_call.1} parent=1 // pred_fallthru
      _
    // Predicated region
    $region718: #{tpu_custom_call.1} parent=1 // pred_check
      _
    $region719: #{tpu_custom_call.1} parent=1 // pred_check_branch
      %1163 = sbr.rel (0) target = $region721
    $region720: #{tpu_custom_call.1} parent=1 // pred_region
      %1164 = vsyncadd [#allocation3], 16
    $region721: #{tpu_custom_call.1} parent=1 // pred_fallthru
      _
    %s1165 = sadd.s32 %s14, 24
    %s1166 = sld [smem:[#allocation5 + %s1165]]
    %s1167 = scalar_lea.vmem %s1, %s1166
    %s1168 = scalar_lea.vmem [#allocation2], 24
    %p1170 = scmp.lt.u32.totalorder 1, 8
    %p1171 = pneg %p1170
    // Predicated region
    $region722: #{tpu_custom_call.1} parent=1 // pred_check
      _
    $region723: #{tpu_custom_call.1} parent=1 // pred_check_branch
      %1173 = sbr.rel (%p1170) target = $region725
    $region724: #{tpu_custom_call.1} parent=1 // pred_region
      %s1188 = sand.u32 1, 7
      %p1189 = scmp.eq.s32.totalorder %s1188, 0
      %p1190 = pneg %p1189
      // Predicated region
      $region737: #{tpu_custom_call.1} parent=724 // pred_check
        _
      $region738: #{tpu_custom_call.1} parent=724 // pred_check_branch
        %1192 = sbr.rel (%p1189) target = $region740
      $region739: #{tpu_custom_call.1} parent=724 // pred_region
        %s1193 = sand.u32 1, 7
        %s1194 = ssub.s32 1, %s1193
        %s1195 = scalar_lea.vmem %s1167, %s1194
        %s1196 = ssub.s32 1, %s1193
        %s1197 = scalar_lea.vmem %s1168, %s1196 [#allocation2]
        %s1198 = sshllo.u32 0, %s1193
        loop: start=0, step=1, limit=1
        $region741: #{tpu_custom_call.1} parent=739 // loop_pre_header
          _
        $region742: #{tpu_custom_call.1} parent=739 // loop_header
          %s1200 = sphi 0, %s1204
          %p1201 = scmp.ge.s32.totalorder %s1200, 1
          %s1205 = sphi %s1195, %s1195
          %s1206 = sphi %s1197, %s1197
        $region743: #{tpu_custom_call.1} parent=739 // loop_header_branch
          %1203 = sbr.rel (%p1201) target = $region747
        $region744: #{tpu_custom_call.1} parent=739 // loop_body
          %v1207 = vld [vmem:[%s1205] sm:%s1198]
          %1208 = vst [vmem:[%s1206] sm:%s1198] %v1207
        $region745: #{tpu_custom_call.1} parent=739 // loop_footer
          %s1204 = sadd.s32 1, %s1200
        $region746: #{tpu_custom_call.1} parent=739 // loop_footer_branch
          %1199 = sbr.rel target = $region742
        $region747: #{tpu_custom_call.1} parent=739 // loop_exit
          _
      $region740: #{tpu_custom_call.1} parent=724 // pred_fallthru
        _
    $region725: #{tpu_custom_call.1} parent=1 // pred_fallthru
      _
    // Predicated region
    $region726: #{tpu_custom_call.1} parent=1 // pred_check
      %p1174 = pneg %p1170
    $region727: #{tpu_custom_call.1} parent=1 // pred_check_branch
      %1176 = sbr.rel (%p1174) target = $region729
    $region728: #{tpu_custom_call.1} parent=1 // pred_region
      %s1177 = sshllo.u32 0, 1
      loop: start=0, step=1, limit=1
      $region730: #{tpu_custom_call.1} parent=728 // loop_pre_header
        _
      $region731: #{tpu_custom_call.1} parent=728 // loop_header
        %s1179 = sphi 0, %s1183
        %p1180 = scmp.ge.s32.totalorder %s1179, 1
        %s1184 = sphi %s1167, %s1167
        %s1185 = sphi %s1168, %s1168
      $region732: #{tpu_custom_call.1} parent=728 // loop_header_branch
        %1182 = sbr.rel (%p1180) target = $region736
      $region733: #{tpu_custom_call.1} parent=728 // loop_body
        %v1186 = vld [vmem:[%s1184] sm:%s1177]
        %1187 = vst [vmem:[%s1185] sm:%s1177] %v1186
      $region734: #{tpu_custom_call.1} parent=728 // loop_footer
        %s1183 = sadd.s32 1, %s1179
      $region735: #{tpu_custom_call.1} parent=728 // loop_footer_branch
        %1178 = sbr.rel target = $region731
      $region736: #{tpu_custom_call.1} parent=728 // loop_exit
        _
    $region729: #{tpu_custom_call.1} parent=1 // pred_fallthru
      _
    // Predicated region
    $region748: #{tpu_custom_call.1} parent=1 // pred_check
      _
    $region749: #{tpu_custom_call.1} parent=1 // pred_check_branch
      %1211 = sbr.rel (0) target = $region751
    $region750: #{tpu_custom_call.1} parent=1 // pred_region
      %1212 = vsyncadd [#allocation3], 16
    $region751: #{tpu_custom_call.1} parent=1 // pred_fallthru
      _
    %s1213 = sadd.s32 %s14, 25
    %s1214 = sld [smem:[#allocation5 + %s1213]]
    %s1215 = scalar_lea.vmem %s1, %s1214
    %s1216 = scalar_lea.vmem [#allocation2], 25
    %p1218 = scmp.lt.u32.totalorder 1, 8
    %p1219 = pneg %p1218
    // Predicated region
    $region752: #{tpu_custom_call.1} parent=1 // pred_check
      _
    $region753: #{tpu_custom_call.1} parent=1 // pred_check_branch
      %1221 = sbr.rel (%p1218) target = $region755
    $region754: #{tpu_custom_call.1} parent=1 // pred_region
      %s1236 = sand.u32 1, 7
      %p1237 = scmp.eq.s32.totalorder %s1236, 0
      %p1238 = pneg %p1237
      // Predicated region
      $region767: #{tpu_custom_call.1} parent=754 // pred_check
        _
      $region768: #{tpu_custom_call.1} parent=754 // pred_check_branch
        %1240 = sbr.rel (%p1237) target = $region770
      $region769: #{tpu_custom_call.1} parent=754 // pred_region
        %s1241 = sand.u32 1, 7
        %s1242 = ssub.s32 1, %s1241
        %s1243 = scalar_lea.vmem %s1215, %s1242
        %s1244 = ssub.s32 1, %s1241
        %s1245 = scalar_lea.vmem %s1216, %s1244 [#allocation2]
        %s1246 = sshllo.u32 0, %s1241
        loop: start=0, step=1, limit=1
        $region771: #{tpu_custom_call.1} parent=769 // loop_pre_header
          _
        $region772: #{tpu_custom_call.1} parent=769 // loop_header
          %s1248 = sphi 0, %s1252
          %p1249 = scmp.ge.s32.totalorder %s1248, 1
          %s1253 = sphi %s1243, %s1243
          %s1254 = sphi %s1245, %s1245
        $region773: #{tpu_custom_call.1} parent=769 // loop_header_branch
          %1251 = sbr.rel (%p1249) target = $region777
        $region774: #{tpu_custom_call.1} parent=769 // loop_body
          %v1255 = vld [vmem:[%s1253] sm:%s1246]
          %1256 = vst [vmem:[%s1254] sm:%s1246] %v1255
        $region775: #{tpu_custom_call.1} parent=769 // loop_footer
          %s1252 = sadd.s32 1, %s1248
        $region776: #{tpu_custom_call.1} parent=769 // loop_footer_branch
          %1247 = sbr.rel target = $region772
        $region777: #{tpu_custom_call.1} parent=769 // loop_exit
          _
      $region770: #{tpu_custom_call.1} parent=754 // pred_fallthru
        _
    $region755: #{tpu_custom_call.1} parent=1 // pred_fallthru
      _
    // Predicated region
    $region756: #{tpu_custom_call.1} parent=1 // pred_check
      %p1222 = pneg %p1218
    $region757: #{tpu_custom_call.1} parent=1 // pred_check_branch
      %1224 = sbr.rel (%p1222) target = $region759
    $region758: #{tpu_custom_call.1} parent=1 // pred_region
      %s1225 = sshllo.u32 0, 1
      loop: start=0, step=1, limit=1
      $region760: #{tpu_custom_call.1} parent=758 // loop_pre_header
        _
      $region761: #{tpu_custom_call.1} parent=758 // loop_header
        %s1227 = sphi 0, %s1231
        %p1228 = scmp.ge.s32.totalorder %s1227, 1
        %s1232 = sphi %s1215, %s1215
        %s1233 = sphi %s1216, %s1216
      $region762: #{tpu_custom_call.1} parent=758 // loop_header_branch
        %1230 = sbr.rel (%p1228) target = $region766
      $region763: #{tpu_custom_call.1} parent=758 // loop_body
        %v1234 = vld [vmem:[%s1232] sm:%s1225]
        %1235 = vst [vmem:[%s1233] sm:%s1225] %v1234
      $region764: #{tpu_custom_call.1} parent=758 // loop_footer
        %s1231 = sadd.s32 1, %s1227
      $region765: #{tpu_custom_call.1} parent=758 // loop_footer_branch
        %1226 = sbr.rel target = $region761
      $region766: #{tpu_custom_call.1} parent=758 // loop_exit
        _
    $region759: #{tpu_custom_call.1} parent=1 // pred_fallthru
      _
    // Predicated region
    $region778: #{tpu_custom_call.1} parent=1 // pred_check
      _
    $region779: #{tpu_custom_call.1} parent=1 // pred_check_branch
      %1259 = sbr.rel (0) target = $region781
    $region780: #{tpu_custom_call.1} parent=1 // pred_region
      %1260 = vsyncadd [#allocation3], 16
    $region781: #{tpu_custom_call.1} parent=1 // pred_fallthru
      _
    %s1261 = sadd.s32 %s14, 26
    %s1262 = sld [smem:[#allocation5 + %s1261]]
    %s1263 = scalar_lea.vmem %s1, %s1262
    %s1264 = scalar_lea.vmem [#allocation2], 26
    %p1266 = scmp.lt.u32.totalorder 1, 8
    %p1267 = pneg %p1266
    // Predicated region
    $region782: #{tpu_custom_call.1} parent=1 // pred_check
      _
    $region783: #{tpu_custom_call.1} parent=1 // pred_check_branch
      %1269 = sbr.rel (%p1266) target = $region785
    $region784: #{tpu_custom_call.1} parent=1 // pred_region
      %s1284 = sand.u32 1, 7
      %p1285 = scmp.eq.s32.totalorder %s1284, 0
      %p1286 = pneg %p1285
      // Predicated region
      $region797: #{tpu_custom_call.1} parent=784 // pred_check
        _
      $region798: #{tpu_custom_call.1} parent=784 // pred_check_branch
        %1288 = sbr.rel (%p1285) target = $region800
      $region799: #{tpu_custom_call.1} parent=784 // pred_region
        %s1289 = sand.u32 1, 7
        %s1290 = ssub.s32 1, %s1289
        %s1291 = scalar_lea.vmem %s1263, %s1290
        %s1292 = ssub.s32 1, %s1289
        %s1293 = scalar_lea.vmem %s1264, %s1292 [#allocation2]
        %s1294 = sshllo.u32 0, %s1289
        loop: start=0, step=1, limit=1
        $region801: #{tpu_custom_call.1} parent=799 // loop_pre_header
          _
        $region802: #{tpu_custom_call.1} parent=799 // loop_header
          %s1296 = sphi 0, %s1300
          %p1297 = scmp.ge.s32.totalorder %s1296, 1
          %s1301 = sphi %s1291, %s1291
          %s1302 = sphi %s1293, %s1293
        $region803: #{tpu_custom_call.1} parent=799 // loop_header_branch
          %1299 = sbr.rel (%p1297) target = $region807
        $region804: #{tpu_custom_call.1} parent=799 // loop_body
          %v1303 = vld [vmem:[%s1301] sm:%s1294]
          %1304 = vst [vmem:[%s1302] sm:%s1294] %v1303
        $region805: #{tpu_custom_call.1} parent=799 // loop_footer
          %s1300 = sadd.s32 1, %s1296
        $region806: #{tpu_custom_call.1} parent=799 // loop_footer_branch
          %1295 = sbr.rel target = $region802
        $region807: #{tpu_custom_call.1} parent=799 // loop_exit
          _
      $region800: #{tpu_custom_call.1} parent=784 // pred_fallthru
        _
    $region785: #{tpu_custom_call.1} parent=1 // pred_fallthru
      _
    // Predicated region
    $region786: #{tpu_custom_call.1} parent=1 // pred_check
      %p1270 = pneg %p1266
    $region787: #{tpu_custom_call.1} parent=1 // pred_check_branch
      %1272 = sbr.rel (%p1270) target = $region789
    $region788: #{tpu_custom_call.1} parent=1 // pred_region
      %s1273 = sshllo.u32 0, 1
      loop: start=0, step=1, limit=1
      $region790: #{tpu_custom_call.1} parent=788 // loop_pre_header
        _
      $region791: #{tpu_custom_call.1} parent=788 // loop_header
        %s1275 = sphi 0, %s1279
        %p1276 = scmp.ge.s32.totalorder %s1275, 1
        %s1280 = sphi %s1263, %s1263
        %s1281 = sphi %s1264, %s1264
      $region792: #{tpu_custom_call.1} parent=788 // loop_header_branch
        %1278 = sbr.rel (%p1276) target = $region796
      $region793: #{tpu_custom_call.1} parent=788 // loop_body
        %v1282 = vld [vmem:[%s1280] sm:%s1273]
        %1283 = vst [vmem:[%s1281] sm:%s1273] %v1282
      $region794: #{tpu_custom_call.1} parent=788 // loop_footer
        %s1279 = sadd.s32 1, %s1275
      $region795: #{tpu_custom_call.1} parent=788 // loop_footer_branch
        %1274 = sbr.rel target = $region791
      $region796: #{tpu_custom_call.1} parent=788 // loop_exit
        _
    $region789: #{tpu_custom_call.1} parent=1 // pred_fallthru
      _
    // Predicated region
    $region808: #{tpu_custom_call.1} parent=1 // pred_check
      _
    $region809: #{tpu_custom_call.1} parent=1 // pred_check_branch
      %1307 = sbr.rel (0) target = $region811
    $region810: #{tpu_custom_call.1} parent=1 // pred_region
      %1308 = vsyncadd [#allocation3], 16
    $region811: #{tpu_custom_call.1} parent=1 // pred_fallthru
      _
    %s1309 = sadd.s32 %s14, 27
    %s1310 = sld [smem:[#allocation5 + %s1309]]
    %s1311 = scalar_lea.vmem %s1, %s1310
    %s1312 = scalar_lea.vmem [#allocation2], 27
    %p1314 = scmp.lt.u32.totalorder 1, 8
    %p1315 = pneg %p1314
    // Predicated region
    $region812: #{tpu_custom_call.1} parent=1 // pred_check
      _
    $region813: #{tpu_custom_call.1} parent=1 // pred_check_branch
      %1317 = sbr.rel (%p1314) target = $region815
    $region814: #{tpu_custom_call.1} parent=1 // pred_region
      %s1332 = sand.u32 1, 7
      %p1333 = scmp.eq.s32.totalorder %s1332, 0
      %p1334 = pneg %p1333
      // Predicated region
      $region827: #{tpu_custom_call.1} parent=814 // pred_check
        _
      $region828: #{tpu_custom_call.1} parent=814 // pred_check_branch
        %1336 = sbr.rel (%p1333) target = $region830
      $region829: #{tpu_custom_call.1} parent=814 // pred_region
        %s1337 = sand.u32 1, 7
        %s1338 = ssub.s32 1, %s1337
        %s1339 = scalar_lea.vmem %s1311, %s1338
        %s1340 = ssub.s32 1, %s1337
        %s1341 = scalar_lea.vmem %s1312, %s1340 [#allocation2]
        %s1342 = sshllo.u32 0, %s1337
        loop: start=0, step=1, limit=1
        $region831: #{tpu_custom_call.1} parent=829 // loop_pre_header
          _
        $region832: #{tpu_custom_call.1} parent=829 // loop_header
          %s1344 = sphi 0, %s1348
          %p1345 = scmp.ge.s32.totalorder %s1344, 1
          %s1349 = sphi %s1339, %s1339
          %s1350 = sphi %s1341, %s1341
        $region833: #{tpu_custom_call.1} parent=829 // loop_header_branch
          %1347 = sbr.rel (%p1345) target = $region837
        $region834: #{tpu_custom_call.1} parent=829 // loop_body
          %v1351 = vld [vmem:[%s1349] sm:%s1342]
          %1352 = vst [vmem:[%s1350] sm:%s1342] %v1351
        $region835: #{tpu_custom_call.1} parent=829 // loop_footer
          %s1348 = sadd.s32 1, %s1344
        $region836: #{tpu_custom_call.1} parent=829 // loop_footer_branch
          %1343 = sbr.rel target = $region832
        $region837: #{tpu_custom_call.1} parent=829 // loop_exit
          _
      $region830: #{tpu_custom_call.1} parent=814 // pred_fallthru
        _
    $region815: #{tpu_custom_call.1} parent=1 // pred_fallthru
      _
    // Predicated region
    $region816: #{tpu_custom_call.1} parent=1 // pred_check
      %p1318 = pneg %p1314
    $region817: #{tpu_custom_call.1} parent=1 // pred_check_branch
      %1320 = sbr.rel (%p1318) target = $region819
    $region818: #{tpu_custom_call.1} parent=1 // pred_region
      %s1321 = sshllo.u32 0, 1
      loop: start=0, step=1, limit=1
      $region820: #{tpu_custom_call.1} parent=818 // loop_pre_header
        _
      $region821: #{tpu_custom_call.1} parent=818 // loop_header
        %s1323 = sphi 0, %s1327
        %p1324 = scmp.ge.s32.totalorder %s1323, 1
        %s1328 = sphi %s1311, %s1311
        %s1329 = sphi %s1312, %s1312
      $region822: #{tpu_custom_call.1} parent=818 // loop_header_branch
        %1326 = sbr.rel (%p1324) target = $region826
      $region823: #{tpu_custom_call.1} parent=818 // loop_body
        %v1330 = vld [vmem:[%s1328] sm:%s1321]
        %1331 = vst [vmem:[%s1329] sm:%s1321] %v1330
      $region824: #{tpu_custom_call.1} parent=818 // loop_footer
        %s1327 = sadd.s32 1, %s1323
      $region825: #{tpu_custom_call.1} parent=818 // loop_footer_branch
        %1322 = sbr.rel target = $region821
      $region826: #{tpu_custom_call.1} parent=818 // loop_exit
        _
    $region819: #{tpu_custom_call.1} parent=1 // pred_fallthru
      _
    // Predicated region
    $region838: #{tpu_custom_call.1} parent=1 // pred_check
      _
    $region839: #{tpu_custom_call.1} parent=1 // pred_check_branch
      %1355 = sbr.rel (0) target = $region841
    $region840: #{tpu_custom_call.1} parent=1 // pred_region
      %1356 = vsyncadd [#allocation3], 16
    $region841: #{tpu_custom_call.1} parent=1 // pred_fallthru
      _
    %s1357 = sadd.s32 %s14, 28
    %s1358 = sld [smem:[#allocation5 + %s1357]]
    %s1359 = scalar_lea.vmem %s1, %s1358
    %s1360 = scalar_lea.vmem [#allocation2], 28
    %p1362 = scmp.lt.u32.totalorder 1, 8
    %p1363 = pneg %p1362
    // Predicated region
    $region842: #{tpu_custom_call.1} parent=1 // pred_check
      _
    $region843: #{tpu_custom_call.1} parent=1 // pred_check_branch
      %1365 = sbr.rel (%p1362) target = $region845
    $region844: #{tpu_custom_call.1} parent=1 // pred_region
      %s1380 = sand.u32 1, 7
      %p1381 = scmp.eq.s32.totalorder %s1380, 0
      %p1382 = pneg %p1381
      // Predicated region
      $region857: #{tpu_custom_call.1} parent=844 // pred_check
        _
      $region858: #{tpu_custom_call.1} parent=844 // pred_check_branch
        %1384 = sbr.rel (%p1381) target = $region860
      $region859: #{tpu_custom_call.1} parent=844 // pred_region
        %s1385 = sand.u32 1, 7
        %s1386 = ssub.s32 1, %s1385
        %s1387 = scalar_lea.vmem %s1359, %s1386
        %s1388 = ssub.s32 1, %s1385
        %s1389 = scalar_lea.vmem %s1360, %s1388 [#allocation2]
        %s1390 = sshllo.u32 0, %s1385
        loop: start=0, step=1, limit=1
        $region861: #{tpu_custom_call.1} parent=859 // loop_pre_header
          _
        $region862: #{tpu_custom_call.1} parent=859 // loop_header
          %s1392 = sphi 0, %s1396
          %p1393 = scmp.ge.s32.totalorder %s1392, 1
          %s1397 = sphi %s1387, %s1387
          %s1398 = sphi %s1389, %s1389
        $region863: #{tpu_custom_call.1} parent=859 // loop_header_branch
          %1395 = sbr.rel (%p1393) target = $region867
        $region864: #{tpu_custom_call.1} parent=859 // loop_body
          %v1399 = vld [vmem:[%s1397] sm:%s1390]
          %1400 = vst [vmem:[%s1398] sm:%s1390] %v1399
        $region865: #{tpu_custom_call.1} parent=859 // loop_footer
          %s1396 = sadd.s32 1, %s1392
        $region866: #{tpu_custom_call.1} parent=859 // loop_footer_branch
          %1391 = sbr.rel target = $region862
        $region867: #{tpu_custom_call.1} parent=859 // loop_exit
          _
      $region860: #{tpu_custom_call.1} parent=844 // pred_fallthru
        _
    $region845: #{tpu_custom_call.1} parent=1 // pred_fallthru
      _
    // Predicated region
    $region846: #{tpu_custom_call.1} parent=1 // pred_check
      %p1366 = pneg %p1362
    $region847: #{tpu_custom_call.1} parent=1 // pred_check_branch
      %1368 = sbr.rel (%p1366) target = $region849
    $region848: #{tpu_custom_call.1} parent=1 // pred_region
      %s1369 = sshllo.u32 0, 1
      loop: start=0, step=1, limit=1
      $region850: #{tpu_custom_call.1} parent=848 // loop_pre_header
        _
      $region851: #{tpu_custom_call.1} parent=848 // loop_header
        %s1371 = sphi 0, %s1375
        %p1372 = scmp.ge.s32.totalorder %s1371, 1
        %s1376 = sphi %s1359, %s1359
        %s1377 = sphi %s1360, %s1360
      $region852: #{tpu_custom_call.1} parent=848 // loop_header_branch
        %1374 = sbr.rel (%p1372) target = $region856
      $region853: #{tpu_custom_call.1} parent=848 // loop_body
        %v1378 = vld [vmem:[%s1376] sm:%s1369]
        %1379 = vst [vmem:[%s1377] sm:%s1369] %v1378
      $region854: #{tpu_custom_call.1} parent=848 // loop_footer
        %s1375 = sadd.s32 1, %s1371
      $region855: #{tpu_custom_call.1} parent=848 // loop_footer_branch
        %1370 = sbr.rel target = $region851
      $region856: #{tpu_custom_call.1} parent=848 // loop_exit
        _
    $region849: #{tpu_custom_call.1} parent=1 // pred_fallthru
      _
    // Predicated region
    $region868: #{tpu_custom_call.1} parent=1 // pred_check
      _
    $region869: #{tpu_custom_call.1} parent=1 // pred_check_branch
      %1403 = sbr.rel (0) target = $region871
    $region870: #{tpu_custom_call.1} parent=1 // pred_region
      %1404 = vsyncadd [#allocation3], 16
    $region871: #{tpu_custom_call.1} parent=1 // pred_fallthru
      _
    %s1405 = sadd.s32 %s14, 29
    %s1406 = sld [smem:[#allocation5 + %s1405]]
    %s1407 = scalar_lea.vmem %s1, %s1406
    %s1408 = scalar_lea.vmem [#allocation2], 29
    %p1410 = scmp.lt.u32.totalorder 1, 8
    %p1411 = pneg %p1410
    // Predicated region
    $region872: #{tpu_custom_call.1} parent=1 // pred_check
      _
    $region873: #{tpu_custom_call.1} parent=1 // pred_check_branch
      %1413 = sbr.rel (%p1410) target = $region875
    $region874: #{tpu_custom_call.1} parent=1 // pred_region
      %s1428 = sand.u32 1, 7
      %p1429 = scmp.eq.s32.totalorder %s1428, 0
      %p1430 = pneg %p1429
      // Predicated region
      $region887: #{tpu_custom_call.1} parent=874 // pred_check
        _
      $region888: #{tpu_custom_call.1} parent=874 // pred_check_branch
        %1432 = sbr.rel (%p1429) target = $region890
      $region889: #{tpu_custom_call.1} parent=874 // pred_region
        %s1433 = sand.u32 1, 7
        %s1434 = ssub.s32 1, %s1433
        %s1435 = scalar_lea.vmem %s1407, %s1434
        %s1436 = ssub.s32 1, %s1433
        %s1437 = scalar_lea.vmem %s1408, %s1436 [#allocation2]
        %s1438 = sshllo.u32 0, %s1433
        loop: start=0, step=1, limit=1
        $region891: #{tpu_custom_call.1} parent=889 // loop_pre_header
          _
        $region892: #{tpu_custom_call.1} parent=889 // loop_header
          %s1440 = sphi 0, %s1444
          %p1441 = scmp.ge.s32.totalorder %s1440, 1
          %s1445 = sphi %s1435, %s1435
          %s1446 = sphi %s1437, %s1437
        $region893: #{tpu_custom_call.1} parent=889 // loop_header_branch
          %1443 = sbr.rel (%p1441) target = $region897
        $region894: #{tpu_custom_call.1} parent=889 // loop_body
          %v1447 = vld [vmem:[%s1445] sm:%s1438]
          %1448 = vst [vmem:[%s1446] sm:%s1438] %v1447
        $region895: #{tpu_custom_call.1} parent=889 // loop_footer
          %s1444 = sadd.s32 1, %s1440
        $region896: #{tpu_custom_call.1} parent=889 // loop_footer_branch
          %1439 = sbr.rel target = $region892
        $region897: #{tpu_custom_call.1} parent=889 // loop_exit
          _
      $region890: #{tpu_custom_call.1} parent=874 // pred_fallthru
        _
    $region875: #{tpu_custom_call.1} parent=1 // pred_fallthru
      _
    // Predicated region
    $region876: #{tpu_custom_call.1} parent=1 // pred_check
      %p1414 = pneg %p1410
    $region877: #{tpu_custom_call.1} parent=1 // pred_check_branch
      %1416 = sbr.rel (%p1414) target = $region879
    $region878: #{tpu_custom_call.1} parent=1 // pred_region
      %s1417 = sshllo.u32 0, 1
      loop: start=0, step=1, limit=1
      $region880: #{tpu_custom_call.1} parent=878 // loop_pre_header
        _
      $region881: #{tpu_custom_call.1} parent=878 // loop_header
        %s1419 = sphi 0, %s1423
        %p1420 = scmp.ge.s32.totalorder %s1419, 1
        %s1424 = sphi %s1407, %s1407
        %s1425 = sphi %s1408, %s1408
      $region882: #{tpu_custom_call.1} parent=878 // loop_header_branch
        %1422 = sbr.rel (%p1420) target = $region886
      $region883: #{tpu_custom_call.1} parent=878 // loop_body
        %v1426 = vld [vmem:[%s1424] sm:%s1417]
        %1427 = vst [vmem:[%s1425] sm:%s1417] %v1426
      $region884: #{tpu_custom_call.1} parent=878 // loop_footer
        %s1423 = sadd.s32 1, %s1419
      $region885: #{tpu_custom_call.1} parent=878 // loop_footer_branch
        %1418 = sbr.rel target = $region881
      $region886: #{tpu_custom_call.1} parent=878 // loop_exit
        _
    $region879: #{tpu_custom_call.1} parent=1 // pred_fallthru
      _
    // Predicated region
    $region898: #{tpu_custom_call.1} parent=1 // pred_check
      _
    $region899: #{tpu_custom_call.1} parent=1 // pred_check_branch
      %1451 = sbr.rel (0) target = $region901
    $region900: #{tpu_custom_call.1} parent=1 // pred_region
      %1452 = vsyncadd [#allocation3], 16
    $region901: #{tpu_custom_call.1} parent=1 // pred_fallthru
      _
    %s1453 = sadd.s32 %s14, 30
    %s1454 = sld [smem:[#allocation5 + %s1453]]
    %s1455 = scalar_lea.vmem %s1, %s1454
    %s1456 = scalar_lea.vmem [#allocation2], 30
    %p1458 = scmp.lt.u32.totalorder 1, 8
    %p1459 = pneg %p1458
    // Predicated region
    $region902: #{tpu_custom_call.1} parent=1 // pred_check
      _
    $region903: #{tpu_custom_call.1} parent=1 // pred_check_branch
      %1461 = sbr.rel (%p1458) target = $region905
    $region904: #{tpu_custom_call.1} parent=1 // pred_region
      %s1476 = sand.u32 1, 7
      %p1477 = scmp.eq.s32.totalorder %s1476, 0
      %p1478 = pneg %p1477
      // Predicated region
      $region917: #{tpu_custom_call.1} parent=904 // pred_check
        _
      $region918: #{tpu_custom_call.1} parent=904 // pred_check_branch
        %1480 = sbr.rel (%p1477) target = $region920
      $region919: #{tpu_custom_call.1} parent=904 // pred_region
        %s1481 = sand.u32 1, 7
        %s1482 = ssub.s32 1, %s1481
        %s1483 = scalar_lea.vmem %s1455, %s1482
        %s1484 = ssub.s32 1, %s1481
        %s1485 = scalar_lea.vmem %s1456, %s1484 [#allocation2]
        %s1486 = sshllo.u32 0, %s1481
        loop: start=0, step=1, limit=1
        $region921: #{tpu_custom_call.1} parent=919 // loop_pre_header
          _
        $region922: #{tpu_custom_call.1} parent=919 // loop_header
          %s1488 = sphi 0, %s1492
          %p1489 = scmp.ge.s32.totalorder %s1488, 1
          %s1493 = sphi %s1483, %s1483
          %s1494 = sphi %s1485, %s1485
        $region923: #{tpu_custom_call.1} parent=919 // loop_header_branch
          %1491 = sbr.rel (%p1489) target = $region927
        $region924: #{tpu_custom_call.1} parent=919 // loop_body
          %v1495 = vld [vmem:[%s1493] sm:%s1486]
          %1496 = vst [vmem:[%s1494] sm:%s1486] %v1495
        $region925: #{tpu_custom_call.1} parent=919 // loop_footer
          %s1492 = sadd.s32 1, %s1488
        $region926: #{tpu_custom_call.1} parent=919 // loop_footer_branch
          %1487 = sbr.rel target = $region922
        $region927: #{tpu_custom_call.1} parent=919 // loop_exit
          _
      $region920: #{tpu_custom_call.1} parent=904 // pred_fallthru
        _
    $region905: #{tpu_custom_call.1} parent=1 // pred_fallthru
      _
    // Predicated region
    $region906: #{tpu_custom_call.1} parent=1 // pred_check
      %p1462 = pneg %p1458
    $region907: #{tpu_custom_call.1} parent=1 // pred_check_branch
      %1464 = sbr.rel (%p1462) target = $region909
    $region908: #{tpu_custom_call.1} parent=1 // pred_region
      %s1465 = sshllo.u32 0, 1
      loop: start=0, step=1, limit=1
      $region910: #{tpu_custom_call.1} parent=908 // loop_pre_header
        _
      $region911: #{tpu_custom_call.1} parent=908 // loop_header
        %s1467 = sphi 0, %s1471
        %p1468 = scmp.ge.s32.totalorder %s1467, 1
        %s1472 = sphi %s1455, %s1455
        %s1473 = sphi %s1456, %s1456
      $region912: #{tpu_custom_call.1} parent=908 // loop_header_branch
        %1470 = sbr.rel (%p1468) target = $region916
      $region913: #{tpu_custom_call.1} parent=908 // loop_body
        %v1474 = vld [vmem:[%s1472] sm:%s1465]
        %1475 = vst [vmem:[%s1473] sm:%s1465] %v1474
      $region914: #{tpu_custom_call.1} parent=908 // loop_footer
        %s1471 = sadd.s32 1, %s1467
      $region915: #{tpu_custom_call.1} parent=908 // loop_footer_branch
        %1466 = sbr.rel target = $region911
      $region916: #{tpu_custom_call.1} parent=908 // loop_exit
        _
    $region909: #{tpu_custom_call.1} parent=1 // pred_fallthru
      _
    // Predicated region
    $region928: #{tpu_custom_call.1} parent=1 // pred_check
      _
    $region929: #{tpu_custom_call.1} parent=1 // pred_check_branch
      %1499 = sbr.rel (0) target = $region931
    $region930: #{tpu_custom_call.1} parent=1 // pred_region
      %1500 = vsyncadd [#allocation3], 16
    $region931: #{tpu_custom_call.1} parent=1 // pred_fallthru
      _
    %s1501 = sadd.s32 %s14, 31
    %s1502 = sld [smem:[#allocation5 + %s1501]]
    %s1503 = scalar_lea.vmem %s1, %s1502
    %s1504 = scalar_lea.vmem [#allocation2], 31
    %p1506 = scmp.lt.u32.totalorder 1, 8
    %p1507 = pneg %p1506
    // Predicated region
    $region932: #{tpu_custom_call.1} parent=1 // pred_check
      _
    $region933: #{tpu_custom_call.1} parent=1 // pred_check_branch
      %1509 = sbr.rel (%p1506) target = $region935
    $region934: #{tpu_custom_call.1} parent=1 // pred_region
      %s1524 = sand.u32 1, 7
      %p1525 = scmp.eq.s32.totalorder %s1524, 0
      %p1526 = pneg %p1525
      // Predicated region
      $region947: #{tpu_custom_call.1} parent=934 // pred_check
        _
      $region948: #{tpu_custom_call.1} parent=934 // pred_check_branch
        %1528 = sbr.rel (%p1525) target = $region950
      $region949: #{tpu_custom_call.1} parent=934 // pred_region
        %s1529 = sand.u32 1, 7
        %s1530 = ssub.s32 1, %s1529
        %s1531 = scalar_lea.vmem %s1503, %s1530
        %s1532 = ssub.s32 1, %s1529
        %s1533 = scalar_lea.vmem %s1504, %s1532 [#allocation2]
        %s1534 = sshllo.u32 0, %s1529
        loop: start=0, step=1, limit=1
        $region951: #{tpu_custom_call.1} parent=949 // loop_pre_header
          _
        $region952: #{tpu_custom_call.1} parent=949 // loop_header
          %s1536 = sphi 0, %s1540
          %p1537 = scmp.ge.s32.totalorder %s1536, 1
          %s1541 = sphi %s1531, %s1531
          %s1542 = sphi %s1533, %s1533
        $region953: #{tpu_custom_call.1} parent=949 // loop_header_branch
          %1539 = sbr.rel (%p1537) target = $region957
        $region954: #{tpu_custom_call.1} parent=949 // loop_body
          %v1543 = vld [vmem:[%s1541] sm:%s1534]
          %1544 = vst [vmem:[%s1542] sm:%s1534] %v1543
        $region955: #{tpu_custom_call.1} parent=949 // loop_footer
          %s1540 = sadd.s32 1, %s1536
        $region956: #{tpu_custom_call.1} parent=949 // loop_footer_branch
          %1535 = sbr.rel target = $region952
        $region957: #{tpu_custom_call.1} parent=949 // loop_exit
          _
      $region950: #{tpu_custom_call.1} parent=934 // pred_fallthru
        _
    $region935: #{tpu_custom_call.1} parent=1 // pred_fallthru
      _
    // Predicated region
    $region936: #{tpu_custom_call.1} parent=1 // pred_check
      %p1510 = pneg %p1506
    $region937: #{tpu_custom_call.1} parent=1 // pred_check_branch
      %1512 = sbr.rel (%p1510) target = $region939
    $region938: #{tpu_custom_call.1} parent=1 // pred_region
      %s1513 = sshllo.u32 0, 1
      loop: start=0, step=1, limit=1
      $region940: #{tpu_custom_call.1} parent=938 // loop_pre_header
        _
      $region941: #{tpu_custom_call.1} parent=938 // loop_header
        %s1515 = sphi 0, %s1519
        %p1516 = scmp.ge.s32.totalorder %s1515, 1
        %s1520 = sphi %s1503, %s1503
        %s1521 = sphi %s1504, %s1504
      $region942: #{tpu_custom_call.1} parent=938 // loop_header_branch
        %1518 = sbr.rel (%p1516) target = $region946
      $region943: #{tpu_custom_call.1} parent=938 // loop_body
        %v1522 = vld [vmem:[%s1520] sm:%s1513]
        %1523 = vst [vmem:[%s1521] sm:%s1513] %v1522
      $region944: #{tpu_custom_call.1} parent=938 // loop_footer
        %s1519 = sadd.s32 1, %s1515
      $region945: #{tpu_custom_call.1} parent=938 // loop_footer_branch
        %1514 = sbr.rel target = $region941
      $region946: #{tpu_custom_call.1} parent=938 // loop_exit
        _
    $region939: #{tpu_custom_call.1} parent=1 // pred_fallthru
      _
    // Predicated region
    $region958: #{tpu_custom_call.1} parent=1 // pred_check
      _
    $region959: #{tpu_custom_call.1} parent=1 // pred_check_branch
      %1547 = sbr.rel (0) target = $region961
    $region960: #{tpu_custom_call.1} parent=1 // pred_region
      %1548 = vsyncadd [#allocation3], 16
    $region961: #{tpu_custom_call.1} parent=1 // pred_fallthru
      _
    %s1549 = smul.u32 1, 1
    %s1550 = sshll.u32 %s1549, 4
    %1551 = dma.done [#allocation3], %s1550
    %s1552 = sshll.u32 %s1549, 4
    %1553 = dma.done [#allocation3], %s1552
    %s1554 = sshll.u32 %s1549, 4
    %1555 = dma.done [#allocation3], %s1554
    %s1556 = sshll.u32 %s1549, 4
    %1557 = dma.done [#allocation3], %s1556
    %s1558 = sshll.u32 %s1549, 4
    %1559 = dma.done [#allocation3], %s1558
    %s1560 = sshll.u32 %s1549, 4
    %1561 = dma.done [#allocation3], %s1560
    %s1562 = sshll.u32 %s1549, 4
    %1563 = dma.done [#allocation3], %s1562
    %s1564 = sshll.u32 %s1549, 4
    %1565 = dma.done [#allocation3], %s1564
    %s1566 = sshll.u32 %s1549, 4
    %1567 = dma.done [#allocation3], %s1566
    %s1568 = sshll.u32 %s1549, 4
    %1569 = dma.done [#allocation3], %s1568
    %s1570 = sshll.u32 %s1549, 4
    %1571 = dma.done [#allocation3], %s1570
    %s1572 = sshll.u32 %s1549, 4
    %1573 = dma.done [#allocation3], %s1572
    %s1574 = sshll.u32 %s1549, 4
    %1575 = dma.done [#allocation3], %s1574
    %s1576 = sshll.u32 %s1549, 4
    %1577 = dma.done [#allocation3], %s1576
    %s1578 = sshll.u32 %s1549, 4
    %1579 = dma.done [#allocation3], %s1578
    %s1580 = sshll.u32 %s1549, 4
    %1581 = dma.done [#allocation3], %s1580
    %s1582 = sshll.u32 %s1549, 4
    %1583 = dma.done [#allocation3], %s1582
    %s1584 = sshll.u32 %s1549, 4
    %1585 = dma.done [#allocation3], %s1584
    %s1586 = sshll.u32 %s1549, 4
    %1587 = dma.done [#allocation3], %s1586
    %s1588 = sshll.u32 %s1549, 4
    %1589 = dma.done [#allocation3], %s1588
    %s1590 = sshll.u32 %s1549, 4
    %1591 = dma.done [#allocation3], %s1590
    %s1592 = sshll.u32 %s1549, 4
    %1593 = dma.done [#allocation3], %s1592
    %s1594 = sshll.u32 %s1549, 4
    %1595 = dma.done [#allocation3], %s1594
    %s1596 = sshll.u32 %s1549, 4
    %1597 = dma.done [#allocation3], %s1596
    %s1598 = sshll.u32 %s1549, 4
    %1599 = dma.done [#allocation3], %s1598
    %s1600 = sshll.u32 %s1549, 4
    %1601 = dma.done [#allocation3], %s1600
    %s1602 = sshll.u32 %s1549, 4
    %1603 = dma.done [#allocation3], %s1602
    %s1604 = sshll.u32 %s1549, 4
    %1605 = dma.done [#allocation3], %s1604
    %s1606 = sshll.u32 %s1549, 4
    %1607 = dma.done [#allocation3], %s1606
    %s1608 = sshll.u32 %s1549, 4
    %1609 = dma.done [#allocation3], %s1608
    %s1610 = sshll.u32 %s1549, 4
    %1611 = dma.done [#allocation3], %s1610
    %s1612 = sshll.u32 %s1549, 4
    %1613 = dma.done [#allocation3], %s1612
    %v1614 = vld [vmem:[#allocation2] sm:$0xff]
    %v1615 = vld [vmem:[#allocation2 + $0x8] sm:$0xff]
    %v1616 = vld [vmem:[#allocation2 + $0x10] sm:$0xff]
    %v1617 = vld [vmem:[#allocation2 + $0x18] sm:$0xff]
    %v1618 = vmul.f32 %v1614, 5.656854
    %v1619 = vmul.f32 %v1615, 5.656854
    %v1620 = vmul.f32 %v1616, 5.656854
    %v1621 = vmul.f32 %v1617, 5.656854
    %vm1622 = vcmask 261120
    %1623 = vst.msk [vmem:[#allocation6] sm:$0xff] %vm1622, %v1618
    %1624 = vst.msk [vmem:[#allocation6 + $0x8] sm:$0xff] %vm1622, %v1619
    %1625 = vst.msk [vmem:[#allocation6 + $0x10] sm:$0xff] %vm1622, %v1620
    %1626 = vst.msk [vmem:[#allocation6 + $0x18] sm:$0xff] %vm1622, %v1621
    // Predicated region
    $region962: #{tpu_custom_call.1} parent=1 // pred_check
      _
    $region963: #{tpu_custom_call.1} parent=1 // pred_check_branch
      %1628 = sbr.rel (0) target = $region965
    $region964: #{tpu_custom_call.1} parent=1 // pred_region
      %s1630 = ssub.s32 512, 512
      %1631 = vsyncadd [#allocation7], %s1630
      %s1632 = sshll.u32 [#allocation6], 4
      %s1633 = int_to_ptr.vmem [resolvable:$true] %s1632
      %1638 = dma.vmem_to_hbm [thread:$0]  %s1633, 512, %s2, [#allocation7], 128, 128, 8
    $region965: #{tpu_custom_call.1} parent=1 // pred_fallthru
      _
    // Predicated region
    $region966: #{tpu_custom_call.1} parent=1 // pred_check
      _
    $region967: #{tpu_custom_call.1} parent=1 // pred_check_branch
      %1640 = sbr.rel (0) target = $region969
    $region968: #{tpu_custom_call.1} parent=1 // pred_region
      %1641 = dma.done [#allocation7], 512
    $region969: #{tpu_custom_call.1} parent=1 // pred_fallthru
      _
    %1642 = vsyncpa [#allocation7], 1
  %1643 = vsyncmov [#allocation3]
  %s1644 = vpop.sfrf %1643
  %p1645 = scmp.eq.s32.totalorder %s1644, 0
  %p1646 = pneg %p1645
  %1648 = shalt.err (%p1646)

</llo_original>
